<compile_context>
chip_gen: v7x
topology: tpu7x:2x2x1
jax: 0.10.0
libtpu: 0.0.40
codegen_flags: <defaults>
</compile_context>

<pallas_src>
import jax
import jax.numpy as jnp
from jax.experimental import pallas as pl
from jax.experimental.pallas import tpu as pltpu

EPS = 1e-5       # BatchNorm1d default eps
MXU_BF16 = False  # set True on v6e/v7x at scale (halves matmul-operand traffic)


def _bn_relu(h, gamma, beta):
    """Training-mode BatchNorm1d + ReLU on (C, N): per-channel stats over N.

    One-pass statistics (var = E[h^2] - E[h]^2): slightly less stable than the
    two-pass form, but the two reduces are independent (no mean->var chain).
    """
    inv_n = 1.0 / h.shape[-1]
    s = jnp.sum(h, axis=-1, keepdims=True)
    ss = jnp.sum(h * h, axis=-1, keepdims=True)
    mean = s * inv_n
    var = ss * inv_n - mean * mean
    scale = gamma * jax.lax.rsqrt(var + EPS)
    shift = beta - mean * scale
    return jnp.maximum(h * scale + shift, 0.0)


def i2net_kernel(x_ref, wf_ref, wg2_ref, b12m_ref, w2s_ref, pp_ref,
                 out_ref, fused_scr):
    B, _, HW = x_ref.shape
    GH = pp_ref.shape[0]              # gate hidden width (128)
    K = wg2_ref.shape[0]              # number of experts
    O2 = out_ref.shape[1]             # I2 layer-2 output channels
    O1 = b12m_ref.shape[0] - O2       # I2 layer-1 output channels

    # ---- fused MXU matmul per batch: [wg1 ; W1_0 .. W1_{K-1}] @ x_b, written
    #      into lane-aligned column slabs of the scratch (no wrapper transpose)
    for b in range(B):
        fused_scr[:, b * HW:(b + 1) * HW] = jnp.dot(
            wf_ref[...], x_ref[b].astype(wf_ref.dtype),
            preferred_element_type=jnp.float32)

    # ---- gate_net hidden: bias + BatchNorm1d(train) + ReLU, kept as a value
    h = fused_scr[0:GH, :] + pp_ref[:, 0:1]                       # + bg1
    hbn = _bn_relu(h, pp_ref[:, 1:2], pp_ref[:, 2:3])             # gg, gb

    # ---- gate logits (Conv1d 128->K, k=1) + softmax over K (sublane axis)
    logits = jnp.dot(wg2_ref[...], hbn.astype(wg2_ref.dtype),
                     preferred_element_type=jnp.float32) + pp_ref[0:K, 5:6]
    mx = jnp.max(logits, axis=0, keepdims=True)
    e = jnp.exp(logits - mx)
    gate = e * pl.reciprocal(jnp.sum(e, axis=0, keepdims=True), approx=True)

    # ---- both layers' gate-weighted expert biases in one tiny matmul
    bmix = jnp.dot(b12m_ref[...], gate, preferred_element_type=jnp.float32)

    # ---- I2Layer 1: sum_k g_k * (W1_k x + b1_k); experts already matmul'd
    acc1 = bmix[0:O1, :]
    for k in range(K):
        acc1 = acc1 + gate[k:k + 1, :] * fused_scr[GH + k * O1:GH + (k + 1) * O1, :]
    y1 = _bn_relu(acc1, pp_ref[0:O1, 3:4], pp_ref[0:O1, 4:5])     # g1, be1

    # ---- I2Layer 2 (last layer: no norm / act): stacked (K*O2, O1) matmul
    y2s = jnp.dot(w2s_ref[...], y1.astype(w2s_ref.dtype),
                  preferred_element_type=jnp.float32)
    acc2 = bmix[O1:O1 + O2, :]
    for k in range(K):
        acc2 = acc2 + gate[k:k + 1, :] * y2s[k * O2:(k + 1) * O2, :]

    # ---- write output directly in the module's (B, O2, HW) layout
    for b in range(B):
        out_ref[b] = acc2[:, b * HW:(b + 1) * HW]


def i2net_pack_params(p, mxu_bf16=MXU_BF16):
    """One-time, x-independent parameter packing (keeps the jitted hot path
    free of wrapper-side XLA prep ops)."""
    K, O1, Cin = p["w1"].shape
    O2 = p["w2"].shape[1]
    GH = p["wg1"].shape[0]
    wdt = jnp.bfloat16 if mxu_bf16 else jnp.float32

    # gate-conv1 weights stacked with the K layer-1 expert weights (shared
    # contraction over Cin), and the K layer-2 expert weights stacked.
    wf = jnp.concatenate([p["wg1"], p["w1"].reshape(K * O1, Cin)], axis=0)
    w2s = p["w2"].reshape(K * O2, O1)
    # both layers' expert biases as one (O1 + O2, K) bias-mix matrix
    b12m = jnp.concatenate([p["b1"][:, :, 0].T, p["b2"][:, :, 0].T], axis=0)
    # lane-packed per-channel params: one (GH, 6) array
    #   col 0: bg1  col 1: gg  col 2: gb  col 3: g1  col 4: be1  col 5: bg2
    pad = lambda a: jnp.pad(a, ((0, GH - a.shape[0]), (0, 0)))
    pp = jnp.concatenate([p["bg1"], p["gg"], p["gb"],
                          pad(p["g1"]), pad(p["be1"]), pad(p["bg2"])], axis=1)

    return dict(wf=wf.astype(wdt), wg2=p["wg2"].astype(wdt),
                b12m=b12m.astype(jnp.float32), w2s=w2s.astype(wdt),
                pp=pp.astype(jnp.float32))


def i2net_forward(x, q):
    """x: (B, Cin, HW) -> (B, O2, HW); `q` is the output of i2net_pack_params."""
    B, Cin, HW = x.shape
    assert HW % 128 == 0, "HW must be lane-aligned (multiple of 128)"
    GH = q["pp"].shape[0]
    K = q["wg2"].shape[0]
    O1 = q["w2s"].shape[1]
    O2 = q["b12m"].shape[0] - O1
    N = B * HW
    FR = GH + K * O1                  # fused-matmul rows

    flops = 2 * N * (FR * Cin + K * GH + (K * O2) * O1 + (O1 + O2) * K)
    bytes_accessed = 4 * (x.size + B * O2 * HW) + sum(
        int(q[k].size) * q[k].dtype.itemsize
        for k in ("wf", "wg2", "b12m", "w2s", "pp"))

    vmem = lambda: pl.BlockSpec(memory_space=pltpu.MemorySpace.VMEM)
    return pl.pallas_call(
        i2net_kernel,
        out_shape=jax.ShapeDtypeStruct((B, O2, HW), jnp.float32),
        in_specs=[vmem() for _ in range(6)],
        out_specs=vmem(),
        scratch_shapes=[pltpu.VMEM((FR, N), jnp.float32)],
        cost_estimate=pl.CostEstimate(
            flops=flops, transcendentals=K * N, bytes_accessed=bytes_accessed),
    )(x, q["wf"], q["wg2"], q["b12m"], q["w2s"], q["pp"])


def i2net_ref(x, p):
    """Pure-JAX reference mirroring the PyTorch forward (train-mode BN, f32)."""
    def bn(h, g, b):
        mean = jnp.mean(h, axis=(0, 2), keepdims=True)
        var = jnp.mean((h - mean) ** 2, axis=(0, 2), keepdims=True)
        return g[None] * (h - mean) / jnp.sqrt(var + EPS) + b[None]

    h = jnp.einsum("oi,bil->bol", p["wg1"], x) + p["bg1"][None]
    h = jnp.maximum(bn(h, p["gg"], p["gb"]), 0.0)
    logits = jnp.einsum("ki,bil->bkl", p["wg2"], h) + p["bg2"][None]
    gate = jax.nn.softmax(logits, axis=1)

    def mix(inp, w, b):
        y = jnp.einsum("koi,bil->bkol", w, inp) + b[None]
        return jnp.sum(y * gate[:, :, None, :], axis=1)

    y1 = jnp.maximum(bn(mix(x, p["w1"], p["b1"]), p["g1"], p["be1"]), 0.0)
    return mix(y1, p["w2"], p["b2"])


if __name__ == "__main__":
    # I2Net(in_dim=8, planes=[32, 16], K=4, gate_layer=1), x of shape (2, 8, 16*16)
    B, Cin, H, W, K = 2, 8, 16, 16, 4
    HW = H * W
    planes = [32, 16]
    GH = 128  # gate_layer == 1 hidden width

    key = jax.random.PRNGKey(0)
    ks = jax.random.split(key, 13)
    rn = lambda k, shape, s=0.2: (s * jax.random.normal(k, shape)).astype(jnp.float32)

    params = dict(
        # gate_net: Conv1d(Cin->128,1), BN(128), ReLU, Conv1d(128->K,1)
        wg1=rn(ks[0], (GH, Cin)), bg1=rn(ks[1], (GH, 1), 0.1),
        gg=(1.0 + rn(ks[2], (GH, 1), 0.1)).astype(jnp.float32),
        gb=rn(ks[3], (GH, 1), 0.1),
        wg2=rn(ks[4], (K, GH)), bg2=rn(ks[5], (K, 1), 0.1),
        # I2Layer(8 -> 32) with BN + ReLU
        w1=rn(ks[6], (K, planes[0], Cin)), b1=rn(ks[7], (K, planes[0], 1), 0.1),
        g1=(1.0 + rn(ks[8], (planes[0], 1), 0.1)).astype(jnp.float32),
        be1=rn(ks[9], (planes[0], 1), 0.1),
        # I2Layer(32 -> 16), no norm / act (last layer)
        w2=rn(ks[10], (K, planes[1], planes[0])),
        b2=rn(ks[11], (K, planes[1], 1), 0.1),
    )
    x = jax.random.normal(ks[12], (B, Cin, HW), dtype=jnp.float32)

    packed = i2net_pack_params(params)   # one-time, x-independent weight prep
    fwd = jax.jit(i2net_forward)
    out = jax.block_until_ready(fwd(x, packed))
    assert out.shape == (B, planes[-1], HW), out.shape

    ref = i2net_ref(x, params)
    tol = 2e-2 if not MXU_BF16 else 1e-1   # bf16 gate rounding widens worst-case
    if not jnp.allclose(out, ref, atol=tol, rtol=tol):
        raise AssertionError(
            f"mismatch vs reference, max abs diff = {jnp.max(jnp.abs(out - ref))}")
    print("KERNEL_OK")
</pallas_src>

<mosaic_0001>
module attributes {stable_mosaic.version = 11 : i64} {
  func.func @i2net_kernel(%arg0: memref<2x8x256xf32, #tpu.memory_space<vmem>>, %arg1: memref<256x8xf32, #tpu.memory_space<vmem>>, %arg2: memref<4x128xf32, #tpu.memory_space<vmem>>, %arg3: memref<48x4xf32, #tpu.memory_space<vmem>>, %arg4: memref<64x32xf32, #tpu.memory_space<vmem>>, %arg5: memref<128x6xf32, #tpu.memory_space<vmem>>, %arg6: memref<2x16x256xf32, #tpu.memory_space<vmem>>, %arg7: memref<256x512xf32, #tpu.memory_space<vmem>>) attributes {dimension_semantics = [], scalar_prefetch = 0 : i64, scratch_operands = 1 : i64, tpu.core_type = #tpu.core_type<tc>} {
    %c0 = arith.constant 0 : index
    %c0_0 = arith.constant 0 : index
    %0 = vector.load %arg1[%c0, %c0_0] : memref<256x8xf32, #tpu.memory_space<vmem>>, vector<256x8xf32>
    %c0_1 = arith.constant 0 : index
    %c0_2 = arith.constant 0 : index
    %c0_3 = arith.constant 0 : index
    %1 = vector.load %arg0[%c0_1, %c0_2, %c0_3] : memref<2x8x256xf32, #tpu.memory_space<vmem>>, vector<1x8x256xf32>
    %2 = vector.shape_cast %1 : vector<1x8x256xf32> to vector<8x256xf32>
    %cst = arith.constant dense<0.000000e+00> : vector<256x256xf32>
    %3 = tpu.matmul %0, %2, %cst {dimension_numbers = #tpu.dot_dimension_numbers<[1], [0], [0], [1], [0, 0, 1, 1], [], []>} : vector<256x8xf32>, vector<8x256xf32>, vector<256x256xf32> -> vector<256x256xf32>
    %c0_4 = arith.constant 0 : index
    %c0_5 = arith.constant 0 : index
    %4 = vector.load %arg7[%c0_4, %c0_5] : memref<256x512xf32, #tpu.memory_space<vmem>>, vector<256x256xf32>
    tpu.vector_store %arg7[%c0_4, %c0_5], %3 {strides = array<i32>} : memref<256x512xf32, #tpu.memory_space<vmem>>, vector<256x256xf32>,
    %c0_6 = arith.constant 0 : index
    %c0_7 = arith.constant 0 : index
    %5 = vector.load %arg1[%c0_6, %c0_7] : memref<256x8xf32, #tpu.memory_space<vmem>>, vector<256x8xf32>
    %c1 = arith.constant 1 : index
    %c0_8 = arith.constant 0 : index
    %c0_9 = arith.constant 0 : index
    %6 = vector.load %arg0[%c1, %c0_8, %c0_9] : memref<2x8x256xf32, #tpu.memory_space<vmem>>, vector<1x8x256xf32>
    %7 = vector.shape_cast %6 : vector<1x8x256xf32> to vector<8x256xf32>
    %cst_10 = arith.constant dense<0.000000e+00> : vector<256x256xf32>
    %8 = tpu.matmul %5, %7, %cst_10 {dimension_numbers = #tpu.dot_dimension_numbers<[1], [0], [0], [1], [0, 0, 1, 1], [], []>} : vector<256x8xf32>, vector<8x256xf32>, vector<256x256xf32> -> vector<256x256xf32>
    %c0_11 = arith.constant 0 : index
    %c256 = arith.constant 256 : index
    %9 = vector.load %arg7[%c0_11, %c256] : memref<256x512xf32, #tpu.memory_space<vmem>>, vector<256x256xf32>
    tpu.vector_store %arg7[%c0_11, %c256], %8 {strides = array<i32>} : memref<256x512xf32, #tpu.memory_space<vmem>>, vector<256x256xf32>,
    %c0_12 = arith.constant 0 : index
    %c0_13 = arith.constant 0 : index
    %10 = vector.load %arg7[%c0_12, %c0_13] : memref<256x512xf32, #tpu.memory_space<vmem>>, vector<128x512xf32>
    %c0_14 = arith.constant 0 : index
    %c0_15 = arith.constant 0 : index
    %11 = vector.load %arg5[%c0_14, %c0_15] : memref<128x6xf32, #tpu.memory_space<vmem>>, vector<128x1xf32>
    %12 = vector.broadcast %11 : vector<128x1xf32> to vector<128x512xf32>
    %13 = arith.addf %10, %12 : vector<128x512xf32>
    %c0_16 = arith.constant 0 : index
    %c1_17 = arith.constant 1 : index
    %14 = vector.load %arg5[%c0_16, %c1_17] : memref<128x6xf32, #tpu.memory_space<vmem>>, vector<128x1xf32>
    %c0_18 = arith.constant 0 : index
    %c2 = arith.constant 2 : index
    %15 = vector.load %arg5[%c0_18, %c2] : memref<128x6xf32, #tpu.memory_space<vmem>>, vector<128x1xf32>
    %cst_19 = arith.constant dense<0.000000e+00> : vector<128xf32>
    %16 = vector.multi_reduction <add>, %13, %cst_19 [1] : vector<128x512xf32> to vector<128xf32>
    %17 = vector.shape_cast %16 : vector<128xf32> to vector<128x1xf32>
    %18 = arith.mulf %13, %13 : vector<128x512xf32>
    %cst_20 = arith.constant dense<0.000000e+00> : vector<128xf32>
    %19 = vector.multi_reduction <add>, %18, %cst_20 [1] : vector<128x512xf32> to vector<128xf32>
    %20 = vector.shape_cast %19 : vector<128xf32> to vector<128x1xf32>
    %cst_21 = arith.constant 0.001953125 : f32
    %21 = vector.broadcast %cst_21 : f32 to vector<128x1xf32>
    %22 = arith.mulf %17, %21 : vector<128x1xf32>
    %cst_22 = arith.constant 0.001953125 : f32
    %23 = vector.broadcast %cst_22 : f32 to vector<128x1xf32>
    %24 = arith.mulf %20, %23 : vector<128x1xf32>
    %25 = arith.mulf %22, %22 : vector<128x1xf32>
    %26 = arith.subf %24, %25 : vector<128x1xf32>
    %cst_23 = arith.constant 9.99999974E-6 : f32
    %27 = vector.broadcast %cst_23 : f32 to vector<128x1xf32>
    %28 = arith.addf %26, %27 : vector<128x1xf32>
    %29 = math.rsqrt %28 : vector<128x1xf32>
    %30 = arith.mulf %14, %29 : vector<128x1xf32>
    %31 = arith.mulf %22, %30 : vector<128x1xf32>
    %32 = arith.subf %15, %31 : vector<128x1xf32>
    %33 = vector.broadcast %30 : vector<128x1xf32> to vector<128x512xf32>
    %34 = arith.mulf %13, %33 : vector<128x512xf32>
    %35 = vector.broadcast %32 : vector<128x1xf32> to vector<128x512xf32>
    %36 = arith.addf %34, %35 : vector<128x512xf32>
    %cst_24 = arith.constant 0.000000e+00 : f32
    %37 = vector.broadcast %cst_24 : f32 to vector<128x512xf32>
    %38 = arith.maximumf %36, %37 : vector<128x512xf32>
    %c0_25 = arith.constant 0 : index
    %c0_26 = arith.constant 0 : index
    %39 = vector.load %arg2[%c0_25, %c0_26] : memref<4x128xf32, #tpu.memory_space<vmem>>, vector<4x128xf32>
    %cst_27 = arith.constant dense<0.000000e+00> : vector<4x512xf32>
    %40 = tpu.matmul %39, %38, %cst_27 {dimension_numbers = #tpu.dot_dimension_numbers<[1], [0], [0], [1], [0, 0, 1, 1], [], []>} : vector<4x128xf32>, vector<128x512xf32>, vector<4x512xf32> -> vector<4x512xf32>
    %c0_28 = arith.constant 0 : index
    %c5 = arith.constant 5 : index
    %41 = vector.load %arg5[%c0_28, %c5] : memref<128x6xf32, #tpu.memory_space<vmem>>, vector<4x1xf32>
    %42 = vector.broadcast %41 : vector<4x1xf32> to vector<4x512xf32>
    %43 = arith.addf %40, %42 : vector<4x512xf32>
    %cst_29 = arith.constant dense<0xFF800000> : vector<512xf32>
    %44 = vector.multi_reduction <maximumf>, %43, %cst_29 [0] : vector<4x512xf32> to vector<512xf32>
    %45 = vector.shape_cast %44 : vector<512xf32> to vector<1x512xf32>
    %46 = vector.broadcast %45 : vector<1x512xf32> to vector<4x512xf32>
    %47 = arith.subf %43, %46 : vector<4x512xf32>
    %48 = math.exp %47 : vector<4x512xf32>
    %cst_30 = arith.constant dense<0.000000e+00> : vector<512xf32>
    %49 = vector.multi_reduction <add>, %48, %cst_30 [0] : vector<4x512xf32> to vector<512xf32>
    %50 = vector.shape_cast %49 : vector<512xf32> to vector<1x512xf32>
    %51 = tpu.reciprocal %50 {approx = true} : vector<1x512xf32> -> vector<1x512xf32>
    %52 = vector.broadcast %51 : vector<1x512xf32> to vector<4x512xf32>
    %53 = arith.mulf %48, %52 : vector<4x512xf32>
    %c0_31 = arith.constant 0 : index
    %c0_32 = arith.constant 0 : index
    %54 = vector.load %arg3[%c0_31, %c0_32] : memref<48x4xf32, #tpu.memory_space<vmem>>, vector<48x4xf32>
    %cst_33 = arith.constant dense<0.000000e+00> : vector<48x512xf32>
    %55 = tpu.matmul %54, %53, %cst_33 {dimension_numbers = #tpu.dot_dimension_numbers<[1], [0], [0], [1], [0, 0, 1, 1], [], []>} : vector<48x4xf32>, vector<4x512xf32>, vector<48x512xf32> -> vector<48x512xf32>
    %56 = vector.extract_strided_slice %55 {offsets = [0, 0], sizes = [32, 512], strides = [1, 1]} : vector<48x512xf32> to vector<32x512xf32>
    %57 = vector.extract_strided_slice %53 {offsets = [0, 0], sizes = [1, 512], strides = [1, 1]} : vector<4x512xf32> to vector<1x512xf32>
    %c128 = arith.constant 128 : index
    %c0_34 = arith.constant 0 : index
    %58 = vector.load %arg7[%c128, %c0_34] : memref<256x512xf32, #tpu.memory_space<vmem>>, vector<32x512xf32>
    %59 = vector.broadcast %57 : vector<1x512xf32> to vector<32x512xf32>
    %60 = arith.mulf %59, %58 : vector<32x512xf32>
    %61 = arith.addf %56, %60 : vector<32x512xf32>
    %62 = vector.extract_strided_slice %53 {offsets = [1, 0], sizes = [1, 512], strides = [1, 1]} : vector<4x512xf32> to vector<1x512xf32>
    %c160 = arith.constant 160 : index
    %c0_35 = arith.constant 0 : index
    %63 = vector.load %arg7[%c160, %c0_35] : memref<256x512xf32, #tpu.memory_space<vmem>>, vector<32x512xf32>
    %64 = vector.broadcast %62 : vector<1x512xf32> to vector<32x512xf32>
    %65 = arith.mulf %64, %63 : vector<32x512xf32>
    %66 = arith.addf %61, %65 : vector<32x512xf32>
    %67 = vector.extract_strided_slice %53 {offsets = [2, 0], sizes = [1, 512], strides = [1, 1]} : vector<4x512xf32> to vector<1x512xf32>
    %c192 = arith.constant 192 : index
    %c0_36 = arith.constant 0 : index
    %68 = vector.load %arg7[%c192, %c0_36] : memref<256x512xf32, #tpu.memory_space<vmem>>, vector<32x512xf32>
    %69 = vector.broadcast %67 : vector<1x512xf32> to vector<32x512xf32>
    %70 = arith.mulf %69, %68 : vector<32x512xf32>
    %71 = arith.addf %66, %70 : vector<32x512xf32>
    %72 = vector.extract_strided_slice %53 {offsets = [3, 0], sizes = [1, 512], strides = [1, 1]} : vector<4x512xf32> to vector<1x512xf32>
    %c224 = arith.constant 224 : index
    %c0_37 = arith.constant 0 : index
    %73 = vector.load %arg7[%c224, %c0_37] : memref<256x512xf32, #tpu.memory_space<vmem>>, vector<32x512xf32>
    %74 = vector.broadcast %72 : vector<1x512xf32> to vector<32x512xf32>
    %75 = arith.mulf %74, %73 : vector<32x512xf32>
    %76 = arith.addf %71, %75 : vector<32x512xf32>
    %c0_38 = arith.constant 0 : index
    %c3 = arith.constant 3 : index
    %77 = vector.load %arg5[%c0_38, %c3] : memref<128x6xf32, #tpu.memory_space<vmem>>, vector<32x1xf32>
    %c0_39 = arith.constant 0 : index
    %c4 = arith.constant 4 : index
    %78 = vector.load %arg5[%c0_39, %c4] : memref<128x6xf32, #tpu.memory_space<vmem>>, vector<32x1xf32>
    %cst_40 = arith.constant dense<0.000000e+00> : vector<32xf32>
    %79 = vector.multi_reduction <add>, %76, %cst_40 [1] : vector<32x512xf32> to vector<32xf32>
    %80 = vector.shape_cast %79 : vector<32xf32> to vector<32x1xf32>
    %81 = arith.mulf %76, %76 : vector<32x512xf32>
    %cst_41 = arith.constant dense<0.000000e+00> : vector<32xf32>
    %82 = vector.multi_reduction <add>, %81, %cst_41 [1] : vector<32x512xf32> to vector<32xf32>
    %83 = vector.shape_cast %82 : vector<32xf32> to vector<32x1xf32>
    %cst_42 = arith.constant 0.001953125 : f32
    %84 = vector.broadcast %cst_42 : f32 to vector<32x1xf32>
    %85 = arith.mulf %80, %84 : vector<32x1xf32>
    %cst_43 = arith.constant 0.001953125 : f32
    %86 = vector.broadcast %cst_43 : f32 to vector<32x1xf32>
    %87 = arith.mulf %83, %86 : vector<32x1xf32>
    %88 = arith.mulf %85, %85 : vector<32x1xf32>
    %89 = arith.subf %87, %88 : vector<32x1xf32>
    %cst_44 = arith.constant 9.99999974E-6 : f32
    %90 = vector.broadcast %cst_44 : f32 to vector<32x1xf32>
    %91 = arith.addf %89, %90 : vector<32x1xf32>
    %92 = math.rsqrt %91 : vector<32x1xf32>
    %93 = arith.mulf %77, %92 : vector<32x1xf32>
    %94 = arith.mulf %85, %93 : vector<32x1xf32>
    %95 = arith.subf %78, %94 : vector<32x1xf32>
    %96 = vector.broadcast %93 : vector<32x1xf32> to vector<32x512xf32>
    %97 = arith.mulf %76, %96 : vector<32x512xf32>
    %98 = vector.broadcast %95 : vector<32x1xf32> to vector<32x512xf32>
    %99 = arith.addf %97, %98 : vector<32x512xf32>
    %cst_45 = arith.constant 0.000000e+00 : f32
    %100 = vector.broadcast %cst_45 : f32 to vector<32x512xf32>
    %101 = arith.maximumf %99, %100 : vector<32x512xf32>
    %c0_46 = arith.constant 0 : index
    %c0_47 = arith.constant 0 : index
    %102 = vector.load %arg4[%c0_46, %c0_47] : memref<64x32xf32, #tpu.memory_space<vmem>>, vector<64x32xf32>
    %cst_48 = arith.constant dense<0.000000e+00> : vector<64x512xf32>
    %103 = tpu.matmul %102, %101, %cst_48 {dimension_numbers = #tpu.dot_dimension_numbers<[1], [0], [0], [1], [0, 0, 1, 1], [], []>} : vector<64x32xf32>, vector<32x512xf32>, vector<64x512xf32> -> vector<64x512xf32>
    %104 = vector.extract_strided_slice %55 {offsets = [32, 0], sizes = [16, 512], strides = [1, 1]} : vector<48x512xf32> to vector<16x512xf32>
    %105 = vector.extract_strided_slice %53 {offsets = [0, 0], sizes = [1, 512], strides = [1, 1]} : vector<4x512xf32> to vector<1x512xf32>
    %106 = vector.extract_strided_slice %103 {offsets = [0, 0], sizes = [16, 512], strides = [1, 1]} : vector<64x512xf32> to vector<16x512xf32>
    %107 = vector.broadcast %105 : vector<1x512xf32> to vector<16x512xf32>
    %108 = arith.mulf %107, %106 : vector<16x512xf32>
    %109 = arith.addf %104, %108 : vector<16x512xf32>
    %110 = vector.extract_strided_slice %53 {offsets = [1, 0], sizes = [1, 512], strides = [1, 1]} : vector<4x512xf32> to vector<1x512xf32>
    %111 = vector.extract_strided_slice %103 {offsets = [16, 0], sizes = [16, 512], strides = [1, 1]} : vector<64x512xf32> to vector<16x512xf32>
    %112 = vector.broadcast %110 : vector<1x512xf32> to vector<16x512xf32>
    %113 = arith.mulf %112, %111 : vector<16x512xf32>
    %114 = arith.addf %109, %113 : vector<16x512xf32>
    %115 = vector.extract_strided_slice %53 {offsets = [2, 0], sizes = [1, 512], strides = [1, 1]} : vector<4x512xf32> to vector<1x512xf32>
    %116 = vector.extract_strided_slice %103 {offsets = [32, 0], sizes = [16, 512], strides = [1, 1]} : vector<64x512xf32> to vector<16x512xf32>
    %117 = vector.broadcast %115 : vector<1x512xf32> to vector<16x512xf32>
    %118 = arith.mulf %117, %116 : vector<16x512xf32>
    %119 = arith.addf %114, %118 : vector<16x512xf32>
    %120 = vector.extract_strided_slice %53 {offsets = [3, 0], sizes = [1, 512], strides = [1, 1]} : vector<4x512xf32> to vector<1x512xf32>
    %121 = vector.extract_strided_slice %103 {offsets = [48, 0], sizes = [16, 512], strides = [1, 1]} : vector<64x512xf32> to vector<16x512xf32>
    %122 = vector.broadcast %120 : vector<1x512xf32> to vector<16x512xf32>
    %123 = arith.mulf %122, %121 : vector<16x512xf32>
    %124 = arith.addf %119, %123 : vector<16x512xf32>
    %125 = vector.extract_strided_slice %124 {offsets = [0, 0], sizes = [16, 256], strides = [1, 1]} : vector<16x512xf32> to vector<16x256xf32>
    %c0_49 = arith.constant 0 : index
    %c0_50 = arith.constant 0 : index
    %c0_51 = arith.constant 0 : index
    %126 = vector.load %arg6[%c0_49, %c0_50, %c0_51] : memref<2x16x256xf32, #tpu.memory_space<vmem>>, vector<1x16x256xf32>
    %127 = vector.shape_cast %126 : vector<1x16x256xf32> to vector<16x256xf32>
    %128 = vector.shape_cast %125 : vector<16x256xf32> to vector<1x16x256xf32>
    tpu.vector_store %arg6[%c0_49, %c0_50, %c0_51], %128 {strides = array<i32>} : memref<2x16x256xf32, #tpu.memory_space<vmem>>, vector<1x16x256xf32>,
    %129 = vector.extract_strided_slice %124 {offsets = [0, 256], sizes = [16, 256], strides = [1, 1]} : vector<16x512xf32> to vector<16x256xf32>
    %c1_52 = arith.constant 1 : index
    %c0_53 = arith.constant 0 : index
    %c0_54 = arith.constant 0 : index
    %130 = vector.load %arg6[%c1_52, %c0_53, %c0_54] : memref<2x16x256xf32, #tpu.memory_space<vmem>>, vector<1x16x256xf32>
    %131 = vector.shape_cast %130 : vector<1x16x256xf32> to vector<16x256xf32>
    %132 = vector.shape_cast %129 : vector<16x256xf32> to vector<1x16x256xf32>
    tpu.vector_store %arg6[%c1_52, %c0_53, %c0_54], %132 {strides = array<i32>} : memref<2x16x256xf32, #tpu.memory_space<vmem>>, vector<1x16x256xf32>,
    return
  }
}

</mosaic_0001>

<llo_original>
// kernel: i2net_forward.1
$region0: #{i2net_forward.1}
  #allocation0 [shape = 'u32[]', space=smem, size = 0x4, offset = 0x4, fixed_abs, tag = 'smem constant byte address 0x4 - core index']
  #allocation1 [shape = 'u32[144,128]{1,0:T(1,128)}', space=vmem, size = 0x12000, scoped, tag = 'internal scratch']
  #allocation2 [shape = 'f32[256,512]{1,0:T(8,128)}', space=vmem, size = 0x80000, scoped, tag = 'scratch operand']
  %s0 = inlined_call_operand.vmem [shape: f32[2,8,256], index: 0, kind: input, shape index: {}]
  %s1 = inlined_call_operand.vmem [shape: f32[256,8], index: 1, kind: input, shape index: {}]
  %s2 = inlined_call_operand.vmem [shape: f32[4,128], index: 2, kind: input, shape index: {}]
  %s3 = inlined_call_operand.vmem [shape: f32[48,4], index: 3, kind: input, shape index: {}]
  %s4 = inlined_call_operand.vmem [shape: f32[64,32], index: 4, kind: input, shape index: {}]
  %s5 = inlined_call_operand.vmem [shape: f32[128,6], index: 5, kind: input, shape index: {}]
  %s6 = inlined_call_operand.hbm [shape: f32[2,16,256], index: 6, kind: output, shape index: {}]
  %s7 = sld [smem:[#allocation0]]
  $region34: #{i2net_forward.1} parent=0
    _
  %s9 = ssub.s32 1, %s7
  %s10 = scalar_select 0, %s9, %s7
  $region1: #{i2net_forward.1} parent=0
    #allocation3 [shape = 'u8[32768]{0}', space=vmem, size = 0x8000, scoped, tag = 'output window, operand 0, single buffered']
    #allocation4 [shape = 's32[1]{0}', space=sflag, size = 0x4, scoped, tag = 'scoped memory for i2net_forward.1']
    %11 = vsyncpa [#allocation4], 0
    // Predicated region
    $region2: #{i2net_forward.1} parent=1 // pred_check
      _
    $region3: #{i2net_forward.1} parent=1 // pred_check_branch
      %13 = sbr.rel (0) target = $region5
    $region4: #{i2net_forward.1} parent=1 // pred_region
      _
    $region5: #{i2net_forward.1} parent=1 // pred_fallthru
      _
    // Predicated region
    $region6: #{i2net_forward.1} parent=1 // pred_check
      _
    $region7: #{i2net_forward.1} parent=1 // pred_check_branch
      %15 = sbr.rel (0) target = $region9
    $region8: #{i2net_forward.1} parent=1 // pred_region
      _
    $region9: #{i2net_forward.1} parent=1 // pred_fallthru
      _
    // Predicated region
    $region10: #{i2net_forward.1} parent=1 // pred_check
      _
    $region11: #{i2net_forward.1} parent=1 // pred_check_branch
      %17 = sbr.rel (0) target = $region13
    $region12: #{i2net_forward.1} parent=1 // pred_region
      _
    $region13: #{i2net_forward.1} parent=1 // pred_fallthru
      _
    // Predicated region
    $region14: #{i2net_forward.1} parent=1 // pred_check
      _
    $region15: #{i2net_forward.1} parent=1 // pred_check_branch
      %19 = sbr.rel (0) target = $region17
    $region16: #{i2net_forward.1} parent=1 // pred_region
      _
    $region17: #{i2net_forward.1} parent=1 // pred_fallthru
      _
    // Predicated region
    $region18: #{i2net_forward.1} parent=1 // pred_check
      _
    $region19: #{i2net_forward.1} parent=1 // pred_check_branch
      %21 = sbr.rel (0) target = $region21
    $region20: #{i2net_forward.1} parent=1 // pred_region
      _
    $region21: #{i2net_forward.1} parent=1 // pred_fallthru
      _
    // Predicated region
    $region22: #{i2net_forward.1} parent=1 // pred_check
      _
    $region23: #{i2net_forward.1} parent=1 // pred_check_branch
      %23 = sbr.rel (0) target = $region25
    $region24: #{i2net_forward.1} parent=1 // pred_region
      _
    $region25: #{i2net_forward.1} parent=1 // pred_fallthru
      _
    %v24 = vld [vmem:[%s1] sm:$0xff]
    %v25 = vld [vmem:[%s1 + $0x8] sm:$0xff]
    %v26 = vld [vmem:[%s1 + $0x10] sm:$0xff]
    %v27 = vld [vmem:[%s1 + $0x18] sm:$0xff]
    %v28 = vld [vmem:[%s1 + $0x20] sm:$0xff]
    %v29 = vld [vmem:[%s1 + $0x28] sm:$0xff]
    %v30 = vld [vmem:[%s1 + $0x30] sm:$0xff]
    %v31 = vld [vmem:[%s1 + $0x38] sm:$0xff]
    %v32 = vld [vmem:[%s1 + $0x40] sm:$0xff]
    %v33 = vld [vmem:[%s1 + $0x48] sm:$0xff]
    %v34 = vld [vmem:[%s1 + $0x50] sm:$0xff]
    %v35 = vld [vmem:[%s1 + $0x58] sm:$0xff]
    %v36 = vld [vmem:[%s1 + $0x60] sm:$0xff]
    %v37 = vld [vmem:[%s1 + $0x68] sm:$0xff]
    %v38 = vld [vmem:[%s1 + $0x70] sm:$0xff]
    %v39 = vld [vmem:[%s1 + $0x78] sm:$0xff]
    %v40 = vld [vmem:[%s1 + $0x80] sm:$0xff]
    %v41 = vld [vmem:[%s1 + $0x88] sm:$0xff]
    %v42 = vld [vmem:[%s1 + $0x90] sm:$0xff]
    %v43 = vld [vmem:[%s1 + $0x98] sm:$0xff]
    %v44 = vld [vmem:[%s1 + $0xa0] sm:$0xff]
    %v45 = vld [vmem:[%s1 + $0xa8] sm:$0xff]
    %v46 = vld [vmem:[%s1 + $0xb0] sm:$0xff]
    %v47 = vld [vmem:[%s1 + $0xb8] sm:$0xff]
    %v48 = vld [vmem:[%s1 + $0xc0] sm:$0xff]
    %v49 = vld [vmem:[%s1 + $0xc8] sm:$0xff]
    %v50 = vld [vmem:[%s1 + $0xd0] sm:$0xff]
    %v51 = vld [vmem:[%s1 + $0xd8] sm:$0xff]
    %v52 = vld [vmem:[%s1 + $0xe0] sm:$0xff]
    %v53 = vld [vmem:[%s1 + $0xe8] sm:$0xff]
    %v54 = vld [vmem:[%s1 + $0xf0] sm:$0xff]
    %v55 = vld [vmem:[%s1 + $0xf8] sm:$0xff]
    %v56 = vld [vmem:[%s0] sm:$0xff]
    %v57 = vld [vmem:[%s0 + $0x8] sm:$0xff]
    %vm58 = vcmask 64512
    %v60 = vsel %vm58, %v24, 0
    %v63 = vsel %vm58, %v25, 0
    %v66 = vsel %vm58, %v26, 0
    %v69 = vsel %vm58, %v27, 0
    %v72 = vsel %vm58, %v28, 0
    %v75 = vsel %vm58, %v29, 0
    %v78 = vsel %vm58, %v30, 0
    %v81 = vsel %vm58, %v31, 0
    %v84 = vsel %vm58, %v32, 0
    %v87 = vsel %vm58, %v33, 0
    %v90 = vsel %vm58, %v34, 0
    %v93 = vsel %vm58, %v35, 0
    %v96 = vsel %vm58, %v36, 0
    %v99 = vsel %vm58, %v37, 0
    %v102 = vsel %vm58, %v38, 0
    %v105 = vsel %vm58, %v39, 0
    %v108 = vsel %vm58, %v40, 0
    %v111 = vsel %vm58, %v41, 0
    %v114 = vsel %vm58, %v42, 0
    %v117 = vsel %vm58, %v43, 0
    %v120 = vsel %vm58, %v44, 0
    %v123 = vsel %vm58, %v45, 0
    %v126 = vsel %vm58, %v46, 0
    %v129 = vsel %vm58, %v47, 0
    %v132 = vsel %vm58, %v48, 0
    %v135 = vsel %vm58, %v49, 0
    %v138 = vsel %vm58, %v50, 0
    %v141 = vsel %vm58, %v51, 0
    %v144 = vsel %vm58, %v52, 0
    %v147 = vsel %vm58, %v53, 0
    %v150 = vsel %vm58, %v54, 0
    %v153 = vsel %vm58, %v55, 0
    %155 = vmatprep.subr.mxu0 %v57
    %156 = vmatpush1.msra.mxu0 %v56
    %157 = vmatprep.subr.mxu0 0.0
    %158 = vmatpush1.msra.mxu0 0.0
    %159 = vmatprep.subr.mxu0 0.0
    %160 = vmatpush1.msra.mxu0 0.0
    %161 = vmatprep.subr.mxu0 0.0
    %162 = vmatpush1.msra.mxu0 0.0
    %163 = vmatprep.subr.mxu0 0.0
    %164 = vmatpush1.msra.mxu0 0.0
    %165 = vmatprep.subr.mxu0 0.0
    %166 = vmatpush1.msra.mxu0 0.0
    %167 = vmatprep.subr.mxu0 0.0
    %168 = vmatpush1.msra.mxu0 0.0
    %169 = vmatprep.subr.mxu0 0.0
    %170 = vmatpush1.msra.mxu0 0.0
    %171 = vmatprep.subr.mxu0 0.0
    %172 = vmatpush1.msra.mxu0 0.0
    %173 = vmatprep.subr.mxu0 0.0
    %174 = vmatpush1.msra.mxu0 0.0
    %175 = vmatprep.subr.mxu0 0.0
    %176 = vmatpush1.msra.mxu0 0.0
    %177 = vmatprep.subr.mxu0 0.0
    %178 = vmatpush1.msra.mxu0 0.0
    %179 = vmatprep.subr.mxu0 0.0
    %180 = vmatpush1.msra.mxu0 0.0
    %181 = vmatprep.subr.mxu0 0.0
    %182 = vmatpush1.msra.mxu0 0.0
    %183 = vmatprep.subr.mxu0 0.0
    %184 = vmatpush1.msra.mxu0 0.0
    %185 = vmatprep.subr.mxu0 0.0
    %186 = vmatpush1.msra.mxu0 0.0
    %187 = vmatprep.subr.mxu0 0.0
    %188 = vmatpush1.msra.mxu0 0.0
    %189 = vmatprep.subr.mxu0 0.0
    %190 = vmatpush1.msra.mxu0 0.0
    %191 = vmatprep.subr.mxu0 0.0
    %192 = vmatpush1.msra.mxu0 0.0
    %193 = vmatprep.subr.mxu0 0.0
    %194 = vmatpush1.msra.mxu0 0.0
    %195 = vmatprep.subr.mxu0 0.0
    %196 = vmatpush1.msra.mxu0 0.0
    %197 = vmatprep.subr.mxu0 0.0
    %198 = vmatpush1.msra.mxu0 0.0
    %199 = vmatprep.subr.mxu0 0.0
    %200 = vmatpush1.msra.mxu0 0.0
    %201 = vmatprep.subr.mxu0 0.0
    %202 = vmatpush1.msra.mxu0 0.0
    %203 = vmatprep.subr.mxu0 0.0
    %204 = vmatpush1.msra.mxu0 0.0
    %205 = vmatprep.subr.mxu0 0.0
    %206 = vmatpush1.msra.mxu0 0.0
    %207 = vmatprep.subr.mxu0 0.0
    %208 = vmatpush1.msra.mxu0 0.0
    %209 = vmatprep.subr.mxu0 0.0
    %210 = vmatpush1.msra.mxu0 0.0
    %211 = vmatprep.subr.mxu0 0.0
    %212 = vmatpush1.msra.mxu0 0.0
    %213 = vmatprep.subr.mxu0 0.0
    %214 = vmatpush1.msra.mxu0 0.0
    %215 = vmatprep.subr.mxu0 0.0
    %216 = vmatpush1.msra.mxu0 0.0
    %217 = vmatprep.subr.mxu0 0.0
    %218 = vmatpush1.msra.mxu0 0.0
    %219 = vmatprep.mubr.f32.mxu0 0.0
    %220 = vmatmul.mubr.f32.gmra.mrb[0].mxu0 %v60
    %v221 = vpop.f32.mrb[0].mxu0
    %v222 = vadd.f32 0.0, %v221
    %v223 = vpop.f32.mrb[0].mxu0
    %v224 = vadd.f32 0.0, %v223
    %225 = vmatprep.mubr.f32.mxu0 0.0
    %226 = vmatmul.mubr.f32.gmra.mrb[0].mxu0 %v63
    %v227 = vpop.f32.mrb[0].mxu0
    %v228 = vadd.f32 0.0, %v227
    %v229 = vpop.f32.mrb[0].mxu0
    %v230 = vadd.f32 0.0, %v229
    %231 = vmatprep.mubr.f32.mxu0 0.0
    %232 = vmatmul.mubr.f32.gmra.mrb[0].mxu0 %v66
    %v233 = vpop.f32.mrb[0].mxu0
    %v234 = vadd.f32 0.0, %v233
    %v235 = vpop.f32.mrb[0].mxu0
    %v236 = vadd.f32 0.0, %v235
    %237 = vmatprep.mubr.f32.mxu0 0.0
    %238 = vmatmul.mubr.f32.gmra.mrb[0].mxu0 %v69
    %v239 = vpop.f32.mrb[0].mxu0
    %v240 = vadd.f32 0.0, %v239
    %v241 = vpop.f32.mrb[0].mxu0
    %v242 = vadd.f32 0.0, %v241
    %243 = vmatprep.mubr.f32.mxu0 0.0
    %244 = vmatmul.mubr.f32.gmra.mrb[0].mxu0 %v72
    %v245 = vpop.f32.mrb[0].mxu0
    %v246 = vadd.f32 0.0, %v245
    %v247 = vpop.f32.mrb[0].mxu0
    %v248 = vadd.f32 0.0, %v247
    %249 = vmatprep.mubr.f32.mxu0 0.0
    %250 = vmatmul.mubr.f32.gmra.mrb[0].mxu0 %v75
    %v251 = vpop.f32.mrb[0].mxu0
    %v252 = vadd.f32 0.0, %v251
    %v253 = vpop.f32.mrb[0].mxu0
    %v254 = vadd.f32 0.0, %v253
    %255 = vmatprep.mubr.f32.mxu0 0.0
    %256 = vmatmul.mubr.f32.gmra.mrb[0].mxu0 %v78
    %v257 = vpop.f32.mrb[0].mxu0
    %v258 = vadd.f32 0.0, %v257
    %v259 = vpop.f32.mrb[0].mxu0
    %v260 = vadd.f32 0.0, %v259
    %261 = vmatprep.mubr.f32.mxu0 0.0
    %262 = vmatmul.mubr.f32.gmra.mrb[0].mxu0 %v81
    %v263 = vpop.f32.mrb[0].mxu0
    %v264 = vadd.f32 0.0, %v263
    %v265 = vpop.f32.mrb[0].mxu0
    %v266 = vadd.f32 0.0, %v265
    %267 = vmatprep.mubr.f32.mxu0 0.0
    %268 = vmatmul.mubr.f32.gmra.mrb[0].mxu0 %v84
    %v269 = vpop.f32.mrb[0].mxu0
    %v270 = vadd.f32 0.0, %v269
    %v271 = vpop.f32.mrb[0].mxu0
    %v272 = vadd.f32 0.0, %v271
    %273 = vmatprep.mubr.f32.mxu0 0.0
    %274 = vmatmul.mubr.f32.gmra.mrb[0].mxu0 %v87
    %v275 = vpop.f32.mrb[0].mxu0
    %v276 = vadd.f32 0.0, %v275
    %v277 = vpop.f32.mrb[0].mxu0
    %v278 = vadd.f32 0.0, %v277
    %279 = vmatprep.mubr.f32.mxu0 0.0
    %280 = vmatmul.mubr.f32.gmra.mrb[0].mxu0 %v90
    %v281 = vpop.f32.mrb[0].mxu0
    %v282 = vadd.f32 0.0, %v281
    %v283 = vpop.f32.mrb[0].mxu0
    %v284 = vadd.f32 0.0, %v283
    %285 = vmatprep.mubr.f32.mxu0 0.0
    %286 = vmatmul.mubr.f32.gmra.mrb[0].mxu0 %v93
    %v287 = vpop.f32.mrb[0].mxu0
    %v288 = vadd.f32 0.0, %v287
    %v289 = vpop.f32.mrb[0].mxu0
    %v290 = vadd.f32 0.0, %v289
    %291 = vmatprep.mubr.f32.mxu0 0.0
    %292 = vmatmul.mubr.f32.gmra.mrb[0].mxu0 %v96
    %v293 = vpop.f32.mrb[0].mxu0
    %v294 = vadd.f32 0.0, %v293
    %v295 = vpop.f32.mrb[0].mxu0
    %v296 = vadd.f32 0.0, %v295
    %297 = vmatprep.mubr.f32.mxu0 0.0
    %298 = vmatmul.mubr.f32.gmra.mrb[0].mxu0 %v99
    %v299 = vpop.f32.mrb[0].mxu0
    %v300 = vadd.f32 0.0, %v299
    %v301 = vpop.f32.mrb[0].mxu0
    %v302 = vadd.f32 0.0, %v301
    %303 = vmatprep.mubr.f32.mxu0 0.0
    %304 = vmatmul.mubr.f32.gmra.mrb[0].mxu0 %v102
    %v305 = vpop.f32.mrb[0].mxu0
    %v306 = vadd.f32 0.0, %v305
    %v307 = vpop.f32.mrb[0].mxu0
    %v308 = vadd.f32 0.0, %v307
    %309 = vmatprep.mubr.f32.mxu0 0.0
    %310 = vmatmul.mubr.f32.gmra.mrb[0].mxu0 %v105
    %v311 = vpop.f32.mrb[0].mxu0
    %v312 = vadd.f32 0.0, %v311
    %v313 = vpop.f32.mrb[0].mxu0
    %v314 = vadd.f32 0.0, %v313
    %315 = vmatprep.mubr.f32.mxu0 0.0
    %316 = vmatmul.mubr.f32.gmra.mrb[0].mxu0 %v108
    %v317 = vpop.f32.mrb[0].mxu0
    %v318 = vadd.f32 0.0, %v317
    %v319 = vpop.f32.mrb[0].mxu0
    %v320 = vadd.f32 0.0, %v319
    %321 = vmatprep.mubr.f32.mxu0 0.0
    %322 = vmatmul.mubr.f32.gmra.mrb[0].mxu0 %v111
    %v323 = vpop.f32.mrb[0].mxu0
    %v324 = vadd.f32 0.0, %v323
    %v325 = vpop.f32.mrb[0].mxu0
    %v326 = vadd.f32 0.0, %v325
    %327 = vmatprep.mubr.f32.mxu0 0.0
    %328 = vmatmul.mubr.f32.gmra.mrb[0].mxu0 %v114
    %v329 = vpop.f32.mrb[0].mxu0
    %v330 = vadd.f32 0.0, %v329
    %v331 = vpop.f32.mrb[0].mxu0
    %v332 = vadd.f32 0.0, %v331
    %333 = vmatprep.mubr.f32.mxu0 0.0
    %334 = vmatmul.mubr.f32.gmra.mrb[0].mxu0 %v117
    %v335 = vpop.f32.mrb[0].mxu0
    %v336 = vadd.f32 0.0, %v335
    %v337 = vpop.f32.mrb[0].mxu0
    %v338 = vadd.f32 0.0, %v337
    %339 = vmatprep.mubr.f32.mxu0 0.0
    %340 = vmatmul.mubr.f32.gmra.mrb[0].mxu0 %v120
    %v341 = vpop.f32.mrb[0].mxu0
    %v342 = vadd.f32 0.0, %v341
    %v343 = vpop.f32.mrb[0].mxu0
    %v344 = vadd.f32 0.0, %v343
    %345 = vmatprep.mubr.f32.mxu0 0.0
    %346 = vmatmul.mubr.f32.gmra.mrb[0].mxu0 %v123
    %v347 = vpop.f32.mrb[0].mxu0
    %v348 = vadd.f32 0.0, %v347
    %v349 = vpop.f32.mrb[0].mxu0
    %v350 = vadd.f32 0.0, %v349
    %351 = vmatprep.mubr.f32.mxu0 0.0
    %352 = vmatmul.mubr.f32.gmra.mrb[0].mxu0 %v126
    %v353 = vpop.f32.mrb[0].mxu0
    %v354 = vadd.f32 0.0, %v353
    %v355 = vpop.f32.mrb[0].mxu0
    %v356 = vadd.f32 0.0, %v355
    %357 = vmatprep.mubr.f32.mxu0 0.0
    %358 = vmatmul.mubr.f32.gmra.mrb[0].mxu0 %v129
    %v359 = vpop.f32.mrb[0].mxu0
    %v360 = vadd.f32 0.0, %v359
    %v361 = vpop.f32.mrb[0].mxu0
    %v362 = vadd.f32 0.0, %v361
    %363 = vmatprep.mubr.f32.mxu0 0.0
    %364 = vmatmul.mubr.f32.gmra.mrb[0].mxu0 %v132
    %v365 = vpop.f32.mrb[0].mxu0
    %v366 = vadd.f32 0.0, %v365
    %v367 = vpop.f32.mrb[0].mxu0
    %v368 = vadd.f32 0.0, %v367
    %369 = vmatprep.mubr.f32.mxu0 0.0
    %370 = vmatmul.mubr.f32.gmra.mrb[0].mxu0 %v135
    %v371 = vpop.f32.mrb[0].mxu0
    %v372 = vadd.f32 0.0, %v371
    %v373 = vpop.f32.mrb[0].mxu0
    %v374 = vadd.f32 0.0, %v373
    %375 = vmatprep.mubr.f32.mxu0 0.0
    %376 = vmatmul.mubr.f32.gmra.mrb[0].mxu0 %v138
    %v377 = vpop.f32.mrb[0].mxu0
    %v378 = vadd.f32 0.0, %v377
    %v379 = vpop.f32.mrb[0].mxu0
    %v380 = vadd.f32 0.0, %v379
    %381 = vmatprep.mubr.f32.mxu0 0.0
    %382 = vmatmul.mubr.f32.gmra.mrb[0].mxu0 %v141
    %v383 = vpop.f32.mrb[0].mxu0
    %v384 = vadd.f32 0.0, %v383
    %v385 = vpop.f32.mrb[0].mxu0
    %v386 = vadd.f32 0.0, %v385
    %387 = vmatprep.mubr.f32.mxu0 0.0
    %388 = vmatmul.mubr.f32.gmra.mrb[0].mxu0 %v144
    %v389 = vpop.f32.mrb[0].mxu0
    %v390 = vadd.f32 0.0, %v389
    %v391 = vpop.f32.mrb[0].mxu0
    %v392 = vadd.f32 0.0, %v391
    %393 = vmatprep.mubr.f32.mxu0 0.0
    %394 = vmatmul.mubr.f32.gmra.mrb[0].mxu0 %v147
    %v395 = vpop.f32.mrb[0].mxu0
    %v396 = vadd.f32 0.0, %v395
    %v397 = vpop.f32.mrb[0].mxu0
    %v398 = vadd.f32 0.0, %v397
    %399 = vmatprep.mubr.f32.mxu0 0.0
    %400 = vmatmul.mubr.f32.gmra.mrb[0].mxu0 %v150
    %v401 = vpop.f32.mrb[0].mxu0
    %v402 = vadd.f32 0.0, %v401
    %v403 = vpop.f32.mrb[0].mxu0
    %v404 = vadd.f32 0.0, %v403
    %405 = vmatprep.mubr.f32.mxu0 0.0
    %406 = vmatmul.mubr.f32.gmra.mrb[0].mxu0 %v153
    %v407 = vpop.f32.mrb[0].mxu0
    %v408 = vadd.f32 0.0, %v407
    %v409 = vpop.f32.mrb[0].mxu0
    %v410 = vadd.f32 0.0, %v409
    %411 = vdwg.mxu0
    %412 = vst [vmem:[#allocation2] sm:$0xff] %v222
    %413 = vst [vmem:[#allocation2 + $0x8] sm:$0xff] %v224
    %414 = vst [vmem:[#allocation2 + $0x20] sm:$0xff] %v228
    %415 = vst [vmem:[#allocation2 + $0x28] sm:$0xff] %v230
    %416 = vst [vmem:[#allocation2 + $0x40] sm:$0xff] %v234
    %417 = vst [vmem:[#allocation2 + $0x48] sm:$0xff] %v236
    %418 = vst [vmem:[#allocation2 + $0x60] sm:$0xff] %v240
    %419 = vst [vmem:[#allocation2 + $0x68] sm:$0xff] %v242
    %420 = vst [vmem:[#allocation2 + $0x80] sm:$0xff] %v246
    %421 = vst [vmem:[#allocation2 + $0x88] sm:$0xff] %v248
    %422 = vst [vmem:[#allocation2 + $0xa0] sm:$0xff] %v252
    %423 = vst [vmem:[#allocation2 + $0xa8] sm:$0xff] %v254
    %424 = vst [vmem:[#allocation2 + $0xc0] sm:$0xff] %v258
    %425 = vst [vmem:[#allocation2 + $0xc8] sm:$0xff] %v260
    %426 = vst [vmem:[#allocation2 + $0xe0] sm:$0xff] %v264
    %427 = vst [vmem:[#allocation2 + $0xe8] sm:$0xff] %v266
    %428 = vst [vmem:[#allocation2 + $0x100] sm:$0xff] %v270
    %429 = vst [vmem:[#allocation2 + $0x108] sm:$0xff] %v272
    %430 = vst [vmem:[#allocation2 + $0x120] sm:$0xff] %v276
    %431 = vst [vmem:[#allocation2 + $0x128] sm:$0xff] %v278
    %432 = vst [vmem:[#allocation2 + $0x140] sm:$0xff] %v282
    %433 = vst [vmem:[#allocation2 + $0x148] sm:$0xff] %v284
    %434 = vst [vmem:[#allocation2 + $0x160] sm:$0xff] %v288
    %435 = vst [vmem:[#allocation2 + $0x168] sm:$0xff] %v290
    %436 = vst [vmem:[#allocation2 + $0x180] sm:$0xff] %v294
    %437 = vst [vmem:[#allocation2 + $0x188] sm:$0xff] %v296
    %438 = vst [vmem:[#allocation2 + $0x1a0] sm:$0xff] %v300
    %439 = vst [vmem:[#allocation2 + $0x1a8] sm:$0xff] %v302
    %440 = vst [vmem:[#allocation2 + $0x1c0] sm:$0xff] %v306
    %441 = vst [vmem:[#allocation2 + $0x1c8] sm:$0xff] %v308
    %442 = vst [vmem:[#allocation2 + $0x1e0] sm:$0xff] %v312
    %443 = vst [vmem:[#allocation2 + $0x1e8] sm:$0xff] %v314
    %444 = vst [vmem:[#allocation2 + $0x200] sm:$0xff] %v318
    %445 = vst [vmem:[#allocation2 + $0x208] sm:$0xff] %v320
    %446 = vst [vmem:[#allocation2 + $0x220] sm:$0xff] %v324
    %447 = vst [vmem:[#allocation2 + $0x228] sm:$0xff] %v326
    %448 = vst [vmem:[#allocation2 + $0x240] sm:$0xff] %v330
    %449 = vst [vmem:[#allocation2 + $0x248] sm:$0xff] %v332
    %450 = vst [vmem:[#allocation2 + $0x260] sm:$0xff] %v336
    %451 = vst [vmem:[#allocation2 + $0x268] sm:$0xff] %v338
    %452 = vst [vmem:[#allocation2 + $0x280] sm:$0xff] %v342
    %453 = vst [vmem:[#allocation2 + $0x288] sm:$0xff] %v344
    %454 = vst [vmem:[#allocation2 + $0x2a0] sm:$0xff] %v348
    %455 = vst [vmem:[#allocation2 + $0x2a8] sm:$0xff] %v350
    %456 = vst [vmem:[#allocation2 + $0x2c0] sm:$0xff] %v354
    %457 = vst [vmem:[#allocation2 + $0x2c8] sm:$0xff] %v356
    %458 = vst [vmem:[#allocation2 + $0x2e0] sm:$0xff] %v360
    %459 = vst [vmem:[#allocation2 + $0x2e8] sm:$0xff] %v362
    %460 = vst [vmem:[#allocation2 + $0x300] sm:$0xff] %v366
    %461 = vst [vmem:[#allocation2 + $0x308] sm:$0xff] %v368
    %462 = vst [vmem:[#allocation2 + $0x320] sm:$0xff] %v372
    %463 = vst [vmem:[#allocation2 + $0x328] sm:$0xff] %v374
    %464 = vst [vmem:[#allocation2 + $0x340] sm:$0xff] %v378
    %465 = vst [vmem:[#allocation2 + $0x348] sm:$0xff] %v380
    %466 = vst [vmem:[#allocation2 + $0x360] sm:$0xff] %v384
    %467 = vst [vmem:[#allocation2 + $0x368] sm:$0xff] %v386
    %468 = vst [vmem:[#allocation2 + $0x380] sm:$0xff] %v390
    %469 = vst [vmem:[#allocation2 + $0x388] sm:$0xff] %v392
    %470 = vst [vmem:[#allocation2 + $0x3a0] sm:$0xff] %v396
    %471 = vst [vmem:[#allocation2 + $0x3a8] sm:$0xff] %v398
    %472 = vst [vmem:[#allocation2 + $0x3c0] sm:$0xff] %v402
    %473 = vst [vmem:[#allocation2 + $0x3c8] sm:$0xff] %v404
    %474 = vst [vmem:[#allocation2 + $0x3e0] sm:$0xff] %v408
    %475 = vst [vmem:[#allocation2 + $0x3e8] sm:$0xff] %v410
    %v476 = vld [vmem:[%s1] sm:$0xff]
    %v477 = vld [vmem:[%s1 + $0x8] sm:$0xff]
    %v478 = vld [vmem:[%s1 + $0x10] sm:$0xff]
    %v479 = vld [vmem:[%s1 + $0x18] sm:$0xff]
    %v480 = vld [vmem:[%s1 + $0x20] sm:$0xff]
    %v481 = vld [vmem:[%s1 + $0x28] sm:$0xff]
    %v482 = vld [vmem:[%s1 + $0x30] sm:$0xff]
    %v483 = vld [vmem:[%s1 + $0x38] sm:$0xff]
    %v484 = vld [vmem:[%s1 + $0x40] sm:$0xff]
    %v485 = vld [vmem:[%s1 + $0x48] sm:$0xff]
    %v486 = vld [vmem:[%s1 + $0x50] sm:$0xff]
    %v487 = vld [vmem:[%s1 + $0x58] sm:$0xff]
    %v488 = vld [vmem:[%s1 + $0x60] sm:$0xff]
    %v489 = vld [vmem:[%s1 + $0x68] sm:$0xff]
    %v490 = vld [vmem:[%s1 + $0x70] sm:$0xff]
    %v491 = vld [vmem:[%s1 + $0x78] sm:$0xff]
    %v492 = vld [vmem:[%s1 + $0x80] sm:$0xff]
    %v493 = vld [vmem:[%s1 + $0x88] sm:$0xff]
    %v494 = vld [vmem:[%s1 + $0x90] sm:$0xff]
    %v495 = vld [vmem:[%s1 + $0x98] sm:$0xff]
    %v496 = vld [vmem:[%s1 + $0xa0] sm:$0xff]
    %v497 = vld [vmem:[%s1 + $0xa8] sm:$0xff]
    %v498 = vld [vmem:[%s1 + $0xb0] sm:$0xff]
    %v499 = vld [vmem:[%s1 + $0xb8] sm:$0xff]
    %v500 = vld [vmem:[%s1 + $0xc0] sm:$0xff]
    %v501 = vld [vmem:[%s1 + $0xc8] sm:$0xff]
    %v502 = vld [vmem:[%s1 + $0xd0] sm:$0xff]
    %v503 = vld [vmem:[%s1 + $0xd8] sm:$0xff]
    %v504 = vld [vmem:[%s1 + $0xe0] sm:$0xff]
    %v505 = vld [vmem:[%s1 + $0xe8] sm:$0xff]
    %v506 = vld [vmem:[%s1 + $0xf0] sm:$0xff]
    %v507 = vld [vmem:[%s1 + $0xf8] sm:$0xff]
    %s508 = scalar_lea.vmem %s0, 16
    %v509 = vld [vmem:[%s508] sm:$0xff]
    %v510 = vld [vmem:[%s508 + $0x8] sm:$0xff]
    %v512 = vsel %vm58, %v476, 0
    %v515 = vsel %vm58, %v477, 0
    %v518 = vsel %vm58, %v478, 0
    %v521 = vsel %vm58, %v479, 0
    %v524 = vsel %vm58, %v480, 0
    %v527 = vsel %vm58, %v481, 0
    %v530 = vsel %vm58, %v482, 0
    %v533 = vsel %vm58, %v483, 0
    %v536 = vsel %vm58, %v484, 0
    %v539 = vsel %vm58, %v485, 0
    %v542 = vsel %vm58, %v486, 0
    %v545 = vsel %vm58, %v487, 0
    %v548 = vsel %vm58, %v488, 0
    %v551 = vsel %vm58, %v489, 0
    %v554 = vsel %vm58, %v490, 0
    %v557 = vsel %vm58, %v491, 0
    %v560 = vsel %vm58, %v492, 0
    %v563 = vsel %vm58, %v493, 0
    %v566 = vsel %vm58, %v494, 0
    %v569 = vsel %vm58, %v495, 0
    %v572 = vsel %vm58, %v496, 0
    %v575 = vsel %vm58, %v497, 0
    %v578 = vsel %vm58, %v498, 0
    %v581 = vsel %vm58, %v499, 0
    %v584 = vsel %vm58, %v500, 0
    %v587 = vsel %vm58, %v501, 0
    %v590 = vsel %vm58, %v502, 0
    %v593 = vsel %vm58, %v503, 0
    %v596 = vsel %vm58, %v504, 0
    %v599 = vsel %vm58, %v505, 0
    %v602 = vsel %vm58, %v506, 0
    %v605 = vsel %vm58, %v507, 0
    %607 = vmatprep.subr.mxu0 %v510
    %608 = vmatpush1.msra.mxu0 %v509
    %609 = vmatprep.subr.mxu0 0.0
    %610 = vmatpush1.msra.mxu0 0.0
    %611 = vmatprep.subr.mxu0 0.0
    %612 = vmatpush1.msra.mxu0 0.0
    %613 = vmatprep.subr.mxu0 0.0
    %614 = vmatpush1.msra.mxu0 0.0
    %615 = vmatprep.subr.mxu0 0.0
    %616 = vmatpush1.msra.mxu0 0.0
    %617 = vmatprep.subr.mxu0 0.0
    %618 = vmatpush1.msra.mxu0 0.0
    %619 = vmatprep.subr.mxu0 0.0
    %620 = vmatpush1.msra.mxu0 0.0
    %621 = vmatprep.subr.mxu0 0.0
    %622 = vmatpush1.msra.mxu0 0.0
    %623 = vmatprep.subr.mxu0 0.0
    %624 = vmatpush1.msra.mxu0 0.0
    %625 = vmatprep.subr.mxu0 0.0
    %626 = vmatpush1.msra.mxu0 0.0
    %627 = vmatprep.subr.mxu0 0.0
    %628 = vmatpush1.msra.mxu0 0.0
    %629 = vmatprep.subr.mxu0 0.0
    %630 = vmatpush1.msra.mxu0 0.0
    %631 = vmatprep.subr.mxu0 0.0
    %632 = vmatpush1.msra.mxu0 0.0
    %633 = vmatprep.subr.mxu0 0.0
    %634 = vmatpush1.msra.mxu0 0.0
    %635 = vmatprep.subr.mxu0 0.0
    %636 = vmatpush1.msra.mxu0 0.0
    %637 = vmatprep.subr.mxu0 0.0
    %638 = vmatpush1.msra.mxu0 0.0
    %639 = vmatprep.subr.mxu0 0.0
    %640 = vmatpush1.msra.mxu0 0.0
    %641 = vmatprep.subr.mxu0 0.0
    %642 = vmatpush1.msra.mxu0 0.0
    %643 = vmatprep.subr.mxu0 0.0
    %644 = vmatpush1.msra.mxu0 0.0
    %645 = vmatprep.subr.mxu0 0.0
    %646 = vmatpush1.msra.mxu0 0.0
    %647 = vmatprep.subr.mxu0 0.0
    %648 = vmatpush1.msra.mxu0 0.0
    %649 = vmatprep.subr.mxu0 0.0
    %650 = vmatpush1.msra.mxu0 0.0
    %651 = vmatprep.subr.mxu0 0.0
    %652 = vmatpush1.msra.mxu0 0.0
    %653 = vmatprep.subr.mxu0 0.0
    %654 = vmatpush1.msra.mxu0 0.0
    %655 = vmatprep.subr.mxu0 0.0
    %656 = vmatpush1.msra.mxu0 0.0
    %657 = vmatprep.subr.mxu0 0.0
    %658 = vmatpush1.msra.mxu0 0.0
    %659 = vmatprep.subr.mxu0 0.0
    %660 = vmatpush1.msra.mxu0 0.0
    %661 = vmatprep.subr.mxu0 0.0
    %662 = vmatpush1.msra.mxu0 0.0
    %663 = vmatprep.subr.mxu0 0.0
    %664 = vmatpush1.msra.mxu0 0.0
    %665 = vmatprep.subr.mxu0 0.0
    %666 = vmatpush1.msra.mxu0 0.0
    %667 = vmatprep.subr.mxu0 0.0
    %668 = vmatpush1.msra.mxu0 0.0
    %669 = vmatprep.subr.mxu0 0.0
    %670 = vmatpush1.msra.mxu0 0.0
    %671 = vmatprep.mubr.f32.mxu0 0.0
    %672 = vmatmul.mubr.f32.gmra.mrb[0].mxu0 %v512
    %v673 = vpop.f32.mrb[0].mxu0
    %v674 = vadd.f32 0.0, %v673
    %v675 = vpop.f32.mrb[0].mxu0
    %v676 = vadd.f32 0.0, %v675
    %677 = vmatprep.mubr.f32.mxu0 0.0
    %678 = vmatmul.mubr.f32.gmra.mrb[0].mxu0 %v515
    %v679 = vpop.f32.mrb[0].mxu0
    %v680 = vadd.f32 0.0, %v679
    %v681 = vpop.f32.mrb[0].mxu0
    %v682 = vadd.f32 0.0, %v681
    %683 = vmatprep.mubr.f32.mxu0 0.0
    %684 = vmatmul.mubr.f32.gmra.mrb[0].mxu0 %v518
    %v685 = vpop.f32.mrb[0].mxu0
    %v686 = vadd.f32 0.0, %v685
    %v687 = vpop.f32.mrb[0].mxu0
    %v688 = vadd.f32 0.0, %v687
    %689 = vmatprep.mubr.f32.mxu0 0.0
    %690 = vmatmul.mubr.f32.gmra.mrb[0].mxu0 %v521
    %v691 = vpop.f32.mrb[0].mxu0
    %v692 = vadd.f32 0.0, %v691
    %v693 = vpop.f32.mrb[0].mxu0
    %v694 = vadd.f32 0.0, %v693
    %695 = vmatprep.mubr.f32.mxu0 0.0
    %696 = vmatmul.mubr.f32.gmra.mrb[0].mxu0 %v524
    %v697 = vpop.f32.mrb[0].mxu0
    %v698 = vadd.f32 0.0, %v697
    %v699 = vpop.f32.mrb[0].mxu0
    %v700 = vadd.f32 0.0, %v699
    %701 = vmatprep.mubr.f32.mxu0 0.0
    %702 = vmatmul.mubr.f32.gmra.mrb[0].mxu0 %v527
    %v703 = vpop.f32.mrb[0].mxu0
    %v704 = vadd.f32 0.0, %v703
    %v705 = vpop.f32.mrb[0].mxu0
    %v706 = vadd.f32 0.0, %v705
    %707 = vmatprep.mubr.f32.mxu0 0.0
    %708 = vmatmul.mubr.f32.gmra.mrb[0].mxu0 %v530
    %v709 = vpop.f32.mrb[0].mxu0
    %v710 = vadd.f32 0.0, %v709
    %v711 = vpop.f32.mrb[0].mxu0
    %v712 = vadd.f32 0.0, %v711
    %713 = vmatprep.mubr.f32.mxu0 0.0
    %714 = vmatmul.mubr.f32.gmra.mrb[0].mxu0 %v533
    %v715 = vpop.f32.mrb[0].mxu0
    %v716 = vadd.f32 0.0, %v715
    %v717 = vpop.f32.mrb[0].mxu0
    %v718 = vadd.f32 0.0, %v717
    %719 = vmatprep.mubr.f32.mxu0 0.0
    %720 = vmatmul.mubr.f32.gmra.mrb[0].mxu0 %v536
    %v721 = vpop.f32.mrb[0].mxu0
    %v722 = vadd.f32 0.0, %v721
    %v723 = vpop.f32.mrb[0].mxu0
    %v724 = vadd.f32 0.0, %v723
    %725 = vmatprep.mubr.f32.mxu0 0.0
    %726 = vmatmul.mubr.f32.gmra.mrb[0].mxu0 %v539
    %v727 = vpop.f32.mrb[0].mxu0
    %v728 = vadd.f32 0.0, %v727
    %v729 = vpop.f32.mrb[0].mxu0
    %v730 = vadd.f32 0.0, %v729
    %731 = vmatprep.mubr.f32.mxu0 0.0
    %732 = vmatmul.mubr.f32.gmra.mrb[0].mxu0 %v542
    %v733 = vpop.f32.mrb[0].mxu0
    %v734 = vadd.f32 0.0, %v733
    %v735 = vpop.f32.mrb[0].mxu0
    %v736 = vadd.f32 0.0, %v735
    %737 = vmatprep.mubr.f32.mxu0 0.0
    %738 = vmatmul.mubr.f32.gmra.mrb[0].mxu0 %v545
    %v739 = vpop.f32.mrb[0].mxu0
    %v740 = vadd.f32 0.0, %v739
    %v741 = vpop.f32.mrb[0].mxu0
    %v742 = vadd.f32 0.0, %v741
    %743 = vmatprep.mubr.f32.mxu0 0.0
    %744 = vmatmul.mubr.f32.gmra.mrb[0].mxu0 %v548
    %v745 = vpop.f32.mrb[0].mxu0
    %v746 = vadd.f32 0.0, %v745
    %v747 = vpop.f32.mrb[0].mxu0
    %v748 = vadd.f32 0.0, %v747
    %749 = vmatprep.mubr.f32.mxu0 0.0
    %750 = vmatmul.mubr.f32.gmra.mrb[0].mxu0 %v551
    %v751 = vpop.f32.mrb[0].mxu0
    %v752 = vadd.f32 0.0, %v751
    %v753 = vpop.f32.mrb[0].mxu0
    %v754 = vadd.f32 0.0, %v753
    %755 = vmatprep.mubr.f32.mxu0 0.0
    %756 = vmatmul.mubr.f32.gmra.mrb[0].mxu0 %v554
    %v757 = vpop.f32.mrb[0].mxu0
    %v758 = vadd.f32 0.0, %v757
    %v759 = vpop.f32.mrb[0].mxu0
    %v760 = vadd.f32 0.0, %v759
    %761 = vmatprep.mubr.f32.mxu0 0.0
    %762 = vmatmul.mubr.f32.gmra.mrb[0].mxu0 %v557
    %v763 = vpop.f32.mrb[0].mxu0
    %v764 = vadd.f32 0.0, %v763
    %v765 = vpop.f32.mrb[0].mxu0
    %v766 = vadd.f32 0.0, %v765
    %767 = vmatprep.mubr.f32.mxu0 0.0
    %768 = vmatmul.mubr.f32.gmra.mrb[0].mxu0 %v560
    %v769 = vpop.f32.mrb[0].mxu0
    %v770 = vadd.f32 0.0, %v769
    %v771 = vpop.f32.mrb[0].mxu0
    %v772 = vadd.f32 0.0, %v771
    %773 = vmatprep.mubr.f32.mxu0 0.0
    %774 = vmatmul.mubr.f32.gmra.mrb[0].mxu0 %v563
    %v775 = vpop.f32.mrb[0].mxu0
    %v776 = vadd.f32 0.0, %v775
    %v777 = vpop.f32.mrb[0].mxu0
    %v778 = vadd.f32 0.0, %v777
    %779 = vmatprep.mubr.f32.mxu0 0.0
    %780 = vmatmul.mubr.f32.gmra.mrb[0].mxu0 %v566
    %v781 = vpop.f32.mrb[0].mxu0
    %v782 = vadd.f32 0.0, %v781
    %v783 = vpop.f32.mrb[0].mxu0
    %v784 = vadd.f32 0.0, %v783
    %785 = vmatprep.mubr.f32.mxu0 0.0
    %786 = vmatmul.mubr.f32.gmra.mrb[0].mxu0 %v569
    %v787 = vpop.f32.mrb[0].mxu0
    %v788 = vadd.f32 0.0, %v787
    %v789 = vpop.f32.mrb[0].mxu0
    %v790 = vadd.f32 0.0, %v789
    %791 = vmatprep.mubr.f32.mxu0 0.0
    %792 = vmatmul.mubr.f32.gmra.mrb[0].mxu0 %v572
    %v793 = vpop.f32.mrb[0].mxu0
    %v794 = vadd.f32 0.0, %v793
    %v795 = vpop.f32.mrb[0].mxu0
    %v796 = vadd.f32 0.0, %v795
    %797 = vmatprep.mubr.f32.mxu0 0.0
    %798 = vmatmul.mubr.f32.gmra.mrb[0].mxu0 %v575
    %v799 = vpop.f32.mrb[0].mxu0
    %v800 = vadd.f32 0.0, %v799
    %v801 = vpop.f32.mrb[0].mxu0
    %v802 = vadd.f32 0.0, %v801
    %803 = vmatprep.mubr.f32.mxu0 0.0
    %804 = vmatmul.mubr.f32.gmra.mrb[0].mxu0 %v578
    %v805 = vpop.f32.mrb[0].mxu0
    %v806 = vadd.f32 0.0, %v805
    %v807 = vpop.f32.mrb[0].mxu0
    %v808 = vadd.f32 0.0, %v807
    %809 = vmatprep.mubr.f32.mxu0 0.0
    %810 = vmatmul.mubr.f32.gmra.mrb[0].mxu0 %v581
    %v811 = vpop.f32.mrb[0].mxu0
    %v812 = vadd.f32 0.0, %v811
    %v813 = vpop.f32.mrb[0].mxu0
    %v814 = vadd.f32 0.0, %v813
    %815 = vmatprep.mubr.f32.mxu0 0.0
    %816 = vmatmul.mubr.f32.gmra.mrb[0].mxu0 %v584
    %v817 = vpop.f32.mrb[0].mxu0
    %v818 = vadd.f32 0.0, %v817
    %v819 = vpop.f32.mrb[0].mxu0
    %v820 = vadd.f32 0.0, %v819
    %821 = vmatprep.mubr.f32.mxu0 0.0
    %822 = vmatmul.mubr.f32.gmra.mrb[0].mxu0 %v587
    %v823 = vpop.f32.mrb[0].mxu0
    %v824 = vadd.f32 0.0, %v823
    %v825 = vpop.f32.mrb[0].mxu0
    %v826 = vadd.f32 0.0, %v825
    %827 = vmatprep.mubr.f32.mxu0 0.0
    %828 = vmatmul.mubr.f32.gmra.mrb[0].mxu0 %v590
    %v829 = vpop.f32.mrb[0].mxu0
    %v830 = vadd.f32 0.0, %v829
    %v831 = vpop.f32.mrb[0].mxu0
    %v832 = vadd.f32 0.0, %v831
    %833 = vmatprep.mubr.f32.mxu0 0.0
    %834 = vmatmul.mubr.f32.gmra.mrb[0].mxu0 %v593
    %v835 = vpop.f32.mrb[0].mxu0
    %v836 = vadd.f32 0.0, %v835
    %v837 = vpop.f32.mrb[0].mxu0
    %v838 = vadd.f32 0.0, %v837
    %839 = vmatprep.mubr.f32.mxu0 0.0
    %840 = vmatmul.mubr.f32.gmra.mrb[0].mxu0 %v596
    %v841 = vpop.f32.mrb[0].mxu0
    %v842 = vadd.f32 0.0, %v841
    %v843 = vpop.f32.mrb[0].mxu0
    %v844 = vadd.f32 0.0, %v843
    %845 = vmatprep.mubr.f32.mxu0 0.0
    %846 = vmatmul.mubr.f32.gmra.mrb[0].mxu0 %v599
    %v847 = vpop.f32.mrb[0].mxu0
    %v848 = vadd.f32 0.0, %v847
    %v849 = vpop.f32.mrb[0].mxu0
    %v850 = vadd.f32 0.0, %v849
    %851 = vmatprep.mubr.f32.mxu0 0.0
    %852 = vmatmul.mubr.f32.gmra.mrb[0].mxu0 %v602
    %v853 = vpop.f32.mrb[0].mxu0
    %v854 = vadd.f32 0.0, %v853
    %v855 = vpop.f32.mrb[0].mxu0
    %v856 = vadd.f32 0.0, %v855
    %857 = vmatprep.mubr.f32.mxu0 0.0
    %858 = vmatmul.mubr.f32.gmra.mrb[0].mxu0 %v605
    %v859 = vpop.f32.mrb[0].mxu0
    %v860 = vadd.f32 0.0, %v859
    %v861 = vpop.f32.mrb[0].mxu0
    %v862 = vadd.f32 0.0, %v861
    %863 = vdwg.mxu0
    %864 = vst [vmem:[#allocation2 + $0x10] sm:$0xff] %v674
    %865 = vst [vmem:[#allocation2 + $0x18] sm:$0xff] %v676
    %866 = vst [vmem:[#allocation2 + $0x30] sm:$0xff] %v680
    %867 = vst [vmem:[#allocation2 + $0x38] sm:$0xff] %v682
    %868 = vst [vmem:[#allocation2 + $0x50] sm:$0xff] %v686
    %869 = vst [vmem:[#allocation2 + $0x58] sm:$0xff] %v688
    %870 = vst [vmem:[#allocation2 + $0x70] sm:$0xff] %v692
    %871 = vst [vmem:[#allocation2 + $0x78] sm:$0xff] %v694
    %872 = vst [vmem:[#allocation2 + $0x90] sm:$0xff] %v698
    %873 = vst [vmem:[#allocation2 + $0x98] sm:$0xff] %v700
    %874 = vst [vmem:[#allocation2 + $0xb0] sm:$0xff] %v704
    %875 = vst [vmem:[#allocation2 + $0xb8] sm:$0xff] %v706
    %876 = vst [vmem:[#allocation2 + $0xd0] sm:$0xff] %v710
    %877 = vst [vmem:[#allocation2 + $0xd8] sm:$0xff] %v712
    %878 = vst [vmem:[#allocation2 + $0xf0] sm:$0xff] %v716
    %879 = vst [vmem:[#allocation2 + $0xf8] sm:$0xff] %v718
    %880 = vst [vmem:[#allocation2 + $0x110] sm:$0xff] %v722
    %881 = vst [vmem:[#allocation2 + $0x118] sm:$0xff] %v724
    %882 = vst [vmem:[#allocation2 + $0x130] sm:$0xff] %v728
    %883 = vst [vmem:[#allocation2 + $0x138] sm:$0xff] %v730
    %884 = vst [vmem:[#allocation2 + $0x150] sm:$0xff] %v734
    %885 = vst [vmem:[#allocation2 + $0x158] sm:$0xff] %v736
    %886 = vst [vmem:[#allocation2 + $0x170] sm:$0xff] %v740
    %887 = vst [vmem:[#allocation2 + $0x178] sm:$0xff] %v742
    %888 = vst [vmem:[#allocation2 + $0x190] sm:$0xff] %v746
    %889 = vst [vmem:[#allocation2 + $0x198] sm:$0xff] %v748
    %890 = vst [vmem:[#allocation2 + $0x1b0] sm:$0xff] %v752
    %891 = vst [vmem:[#allocation2 + $0x1b8] sm:$0xff] %v754
    %892 = vst [vmem:[#allocation2 + $0x1d0] sm:$0xff] %v758
    %893 = vst [vmem:[#allocation2 + $0x1d8] sm:$0xff] %v760
    %894 = vst [vmem:[#allocation2 + $0x1f0] sm:$0xff] %v764
    %895 = vst [vmem:[#allocation2 + $0x1f8] sm:$0xff] %v766
    %896 = vst [vmem:[#allocation2 + $0x210] sm:$0xff] %v770
    %897 = vst [vmem:[#allocation2 + $0x218] sm:$0xff] %v772
    %898 = vst [vmem:[#allocation2 + $0x230] sm:$0xff] %v776
    %899 = vst [vmem:[#allocation2 + $0x238] sm:$0xff] %v778
    %900 = vst [vmem:[#allocation2 + $0x250] sm:$0xff] %v782
    %901 = vst [vmem:[#allocation2 + $0x258] sm:$0xff] %v784
    %902 = vst [vmem:[#allocation2 + $0x270] sm:$0xff] %v788
    %903 = vst [vmem:[#allocation2 + $0x278] sm:$0xff] %v790
    %904 = vst [vmem:[#allocation2 + $0x290] sm:$0xff] %v794
    %905 = vst [vmem:[#allocation2 + $0x298] sm:$0xff] %v796
    %906 = vst [vmem:[#allocation2 + $0x2b0] sm:$0xff] %v800
    %907 = vst [vmem:[#allocation2 + $0x2b8] sm:$0xff] %v802
    %908 = vst [vmem:[#allocation2 + $0x2d0] sm:$0xff] %v806
    %909 = vst [vmem:[#allocation2 + $0x2d8] sm:$0xff] %v808
    %910 = vst [vmem:[#allocation2 + $0x2f0] sm:$0xff] %v812
    %911 = vst [vmem:[#allocation2 + $0x2f8] sm:$0xff] %v814
    %912 = vst [vmem:[#allocation2 + $0x310] sm:$0xff] %v818
    %913 = vst [vmem:[#allocation2 + $0x318] sm:$0xff] %v820
    %914 = vst [vmem:[#allocation2 + $0x330] sm:$0xff] %v824
    %915 = vst [vmem:[#allocation2 + $0x338] sm:$0xff] %v826
    %916 = vst [vmem:[#allocation2 + $0x350] sm:$0xff] %v830
    %917 = vst [vmem:[#allocation2 + $0x358] sm:$0xff] %v832
    %918 = vst [vmem:[#allocation2 + $0x370] sm:$0xff] %v836
    %919 = vst [vmem:[#allocation2 + $0x378] sm:$0xff] %v838
    %920 = vst [vmem:[#allocation2 + $0x390] sm:$0xff] %v842
    %921 = vst [vmem:[#allocation2 + $0x398] sm:$0xff] %v844
    %922 = vst [vmem:[#allocation2 + $0x3b0] sm:$0xff] %v848
    %923 = vst [vmem:[#allocation2 + $0x3b8] sm:$0xff] %v850
    %924 = vst [vmem:[#allocation2 + $0x3d0] sm:$0xff] %v854
    %925 = vst [vmem:[#allocation2 + $0x3d8] sm:$0xff] %v856
    %926 = vst [vmem:[#allocation2 + $0x3f0] sm:$0xff] %v860
    %927 = vst [vmem:[#allocation2 + $0x3f8] sm:$0xff] %v862
    %v928 = vld [vmem:[#allocation2] sm:$0xff]
    %v929 = vld [vmem:[#allocation2 + $0x8] sm:$0xff]
    %v930 = vld [vmem:[#allocation2 + $0x10] sm:$0xff]
    %v931 = vld [vmem:[#allocation2 + $0x18] sm:$0xff]
    %v932 = vld [vmem:[#allocation2 + $0x20] sm:$0xff]
    %v933 = vld [vmem:[#allocation2 + $0x28] sm:$0xff]
    %v934 = vld [vmem:[#allocation2 + $0x30] sm:$0xff]
    %v935 = vld [vmem:[#allocation2 + $0x38] sm:$0xff]
    %v936 = vld [vmem:[#allocation2 + $0x40] sm:$0xff]
    %v937 = vld [vmem:[#allocation2 + $0x48] sm:$0xff]
    %v938 = vld [vmem:[#allocation2 + $0x50] sm:$0xff]
    %v939 = vld [vmem:[#allocation2 + $0x58] sm:$0xff]
    %v940 = vld [vmem:[#allocation2 + $0x60] sm:$0xff]
    %v941 = vld [vmem:[#allocation2 + $0x68] sm:$0xff]
    %v942 = vld [vmem:[#allocation2 + $0x70] sm:$0xff]
    %v943 = vld [vmem:[#allocation2 + $0x78] sm:$0xff]
    %v944 = vld [vmem:[#allocation2 + $0x80] sm:$0xff]
    %v945 = vld [vmem:[#allocation2 + $0x88] sm:$0xff]
    %v946 = vld [vmem:[#allocation2 + $0x90] sm:$0xff]
    %v947 = vld [vmem:[#allocation2 + $0x98] sm:$0xff]
    %v948 = vld [vmem:[#allocation2 + $0xa0] sm:$0xff]
    %v949 = vld [vmem:[#allocation2 + $0xa8] sm:$0xff]
    %v950 = vld [vmem:[#allocation2 + $0xb0] sm:$0xff]
    %v951 = vld [vmem:[#allocation2 + $0xb8] sm:$0xff]
    %v952 = vld [vmem:[#allocation2 + $0xc0] sm:$0xff]
    %v953 = vld [vmem:[#allocation2 + $0xc8] sm:$0xff]
    %v954 = vld [vmem:[#allocation2 + $0xd0] sm:$0xff]
    %v955 = vld [vmem:[#allocation2 + $0xd8] sm:$0xff]
    %v956 = vld [vmem:[#allocation2 + $0xe0] sm:$0xff]
    %v957 = vld [vmem:[#allocation2 + $0xe8] sm:$0xff]
    %v958 = vld [vmem:[#allocation2 + $0xf0] sm:$0xff]
    %v959 = vld [vmem:[#allocation2 + $0xf8] sm:$0xff]
    %v960 = vld [vmem:[#allocation2 + $0x100] sm:$0xff]
    %v961 = vld [vmem:[#allocation2 + $0x108] sm:$0xff]
    %v962 = vld [vmem:[#allocation2 + $0x110] sm:$0xff]
    %v963 = vld [vmem:[#allocation2 + $0x118] sm:$0xff]
    %v964 = vld [vmem:[#allocation2 + $0x120] sm:$0xff]
    %v965 = vld [vmem:[#allocation2 + $0x128] sm:$0xff]
    %v966 = vld [vmem:[#allocation2 + $0x130] sm:$0xff]
    %v967 = vld [vmem:[#allocation2 + $0x138] sm:$0xff]
    %v968 = vld [vmem:[#allocation2 + $0x140] sm:$0xff]
    %v969 = vld [vmem:[#allocation2 + $0x148] sm:$0xff]
    %v970 = vld [vmem:[#allocation2 + $0x150] sm:$0xff]
    %v971 = vld [vmem:[#allocation2 + $0x158] sm:$0xff]
    %v972 = vld [vmem:[#allocation2 + $0x160] sm:$0xff]
    %v973 = vld [vmem:[#allocation2 + $0x168] sm:$0xff]
    %v974 = vld [vmem:[#allocation2 + $0x170] sm:$0xff]
    %v975 = vld [vmem:[#allocation2 + $0x178] sm:$0xff]
    %v976 = vld [vmem:[#allocation2 + $0x180] sm:$0xff]
    %v977 = vld [vmem:[#allocation2 + $0x188] sm:$0xff]
    %v978 = vld [vmem:[#allocation2 + $0x190] sm:$0xff]
    %v979 = vld [vmem:[#allocation2 + $0x198] sm:$0xff]
    %v980 = vld [vmem:[#allocation2 + $0x1a0] sm:$0xff]
    %v981 = vld [vmem:[#allocation2 + $0x1a8] sm:$0xff]
    %v982 = vld [vmem:[#allocation2 + $0x1b0] sm:$0xff]
    %v983 = vld [vmem:[#allocation2 + $0x1b8] sm:$0xff]
    %v984 = vld [vmem:[#allocation2 + $0x1c0] sm:$0xff]
    %v985 = vld [vmem:[#allocation2 + $0x1c8] sm:$0xff]
    %v986 = vld [vmem:[#allocation2 + $0x1d0] sm:$0xff]
    %v987 = vld [vmem:[#allocation2 + $0x1d8] sm:$0xff]
    %v988 = vld [vmem:[#allocation2 + $0x1e0] sm:$0xff]
    %v989 = vld [vmem:[#allocation2 + $0x1e8] sm:$0xff]
    %v990 = vld [vmem:[#allocation2 + $0x1f0] sm:$0xff]
    %v991 = vld [vmem:[#allocation2 + $0x1f8] sm:$0xff]
    %v992 = vld [vmem:[%s5] sm:$0xff]
    %v993 = vld [vmem:[%s5 + $0x8] sm:$0xff]
    %v994 = vld [vmem:[%s5 + $0x10] sm:$0xff]
    %v995 = vld [vmem:[%s5 + $0x18] sm:$0xff]
    %v996 = vld [vmem:[%s5 + $0x20] sm:$0xff]
    %v997 = vld [vmem:[%s5 + $0x28] sm:$0xff]
    %v998 = vld [vmem:[%s5 + $0x30] sm:$0xff]
    %v999 = vld [vmem:[%s5 + $0x38] sm:$0xff]
    %v1000 = vld [vmem:[%s5 + $0x40] sm:$0xff]
    %v1001 = vld [vmem:[%s5 + $0x48] sm:$0xff]
    %v1002 = vld [vmem:[%s5 + $0x50] sm:$0xff]
    %v1003 = vld [vmem:[%s5 + $0x58] sm:$0xff]
    %v1004 = vld [vmem:[%s5 + $0x60] sm:$0xff]
    %v1005 = vld [vmem:[%s5 + $0x68] sm:$0xff]
    %v1006 = vld [vmem:[%s5 + $0x70] sm:$0xff]
    %v1007 = vld [vmem:[%s5 + $0x78] sm:$0xff]
    %1009 = vset.pattern.permute.xlu0 0
    %1010 = vperm.xlu0 %1009, %v992
    %v1011 = vpop.permute.xlu0 %1010
    %1014 = vset.pattern.permute.xlu0 0
    %1015 = vperm.xlu0 %1014, %v993
    %v1016 = vpop.permute.xlu0 %1015
    %1019 = vset.pattern.permute.xlu0 0
    %1020 = vperm.xlu0 %1019, %v994
    %v1021 = vpop.permute.xlu0 %1020
    %1024 = vset.pattern.permute.xlu0 0
    %1025 = vperm.xlu0 %1024, %v995
    %v1026 = vpop.permute.xlu0 %1025
    %1029 = vset.pattern.permute.xlu0 0
    %1030 = vperm.xlu0 %1029, %v996
    %v1031 = vpop.permute.xlu0 %1030
    %1034 = vset.pattern.permute.xlu0 0
    %1035 = vperm.xlu0 %1034, %v997
    %v1036 = vpop.permute.xlu0 %1035
    %1039 = vset.pattern.permute.xlu0 0
    %1040 = vperm.xlu0 %1039, %v998
    %v1041 = vpop.permute.xlu0 %1040
    %1044 = vset.pattern.permute.xlu0 0
    %1045 = vperm.xlu0 %1044, %v999
    %v1046 = vpop.permute.xlu0 %1045
    %1049 = vset.pattern.permute.xlu0 0
    %1050 = vperm.xlu0 %1049, %v1000
    %v1051 = vpop.permute.xlu0 %1050
    %1054 = vset.pattern.permute.xlu0 0
    %1055 = vperm.xlu0 %1054, %v1001
    %v1056 = vpop.permute.xlu0 %1055
    %1059 = vset.pattern.permute.xlu0 0
    %1060 = vperm.xlu0 %1059, %v1002
    %v1061 = vpop.permute.xlu0 %1060
    %1064 = vset.pattern.permute.xlu0 0
    %1065 = vperm.xlu0 %1064, %v1003
    %v1066 = vpop.permute.xlu0 %1065
    %1069 = vset.pattern.permute.xlu0 0
    %1070 = vperm.xlu0 %1069, %v1004
    %v1071 = vpop.permute.xlu0 %1070
    %1074 = vset.pattern.permute.xlu0 0
    %1075 = vperm.xlu0 %1074, %v1005
    %v1076 = vpop.permute.xlu0 %1075
    %1079 = vset.pattern.permute.xlu0 0
    %1080 = vperm.xlu0 %1079, %v1006
    %v1081 = vpop.permute.xlu0 %1080
    %1084 = vset.pattern.permute.xlu0 0
    %1085 = vperm.xlu0 %1084, %v1007
    %v1086 = vpop.permute.xlu0 %1085
    %v1088 = vadd.f32 %v928, %v1011
    %v1089 = vadd.f32 %v929, %v1011
    %v1090 = vadd.f32 %v930, %v1011
    %v1091 = vadd.f32 %v931, %v1011
    %v1092 = vadd.f32 %v932, %v1016
    %v1093 = vadd.f32 %v933, %v1016
    %v1094 = vadd.f32 %v934, %v1016
    %v1095 = vadd.f32 %v935, %v1016
    %v1096 = vadd.f32 %v936, %v1021
    %v1097 = vadd.f32 %v937, %v1021
    %v1098 = vadd.f32 %v938, %v1021
    %v1099 = vadd.f32 %v939, %v1021
    %v1100 = vadd.f32 %v940, %v1026
    %v1101 = vadd.f32 %v941, %v1026
    %v1102 = vadd.f32 %v942, %v1026
    %v1103 = vadd.f32 %v943, %v1026
    %v1104 = vadd.f32 %v944, %v1031
    %v1105 = vadd.f32 %v945, %v1031
    %v1106 = vadd.f32 %v946, %v1031
    %v1107 = vadd.f32 %v947, %v1031
    %v1108 = vadd.f32 %v948, %v1036
    %v1109 = vadd.f32 %v949, %v1036
    %v1110 = vadd.f32 %v950, %v1036
    %v1111 = vadd.f32 %v951, %v1036
    %v1112 = vadd.f32 %v952, %v1041
    %v1113 = vadd.f32 %v953, %v1041
    %v1114 = vadd.f32 %v954, %v1041
    %v1115 = vadd.f32 %v955, %v1041
    %v1116 = vadd.f32 %v956, %v1046
    %v1117 = vadd.f32 %v957, %v1046
    %v1118 = vadd.f32 %v958, %v1046
    %v1119 = vadd.f32 %v959, %v1046
    %v1120 = vadd.f32 %v960, %v1051
    %v1121 = vadd.f32 %v961, %v1051
    %v1122 = vadd.f32 %v962, %v1051
    %v1123 = vadd.f32 %v963, %v1051
    %v1124 = vadd.f32 %v964, %v1056
    %v1125 = vadd.f32 %v965, %v1056
    %v1126 = vadd.f32 %v966, %v1056
    %v1127 = vadd.f32 %v967, %v1056
    %v1128 = vadd.f32 %v968, %v1061
    %v1129 = vadd.f32 %v969, %v1061
    %v1130 = vadd.f32 %v970, %v1061
    %v1131 = vadd.f32 %v971, %v1061
    %v1132 = vadd.f32 %v972, %v1066
    %v1133 = vadd.f32 %v973, %v1066
    %v1134 = vadd.f32 %v974, %v1066
    %v1135 = vadd.f32 %v975, %v1066
    %v1136 = vadd.f32 %v976, %v1071
    %v1137 = vadd.f32 %v977, %v1071
    %v1138 = vadd.f32 %v978, %v1071
    %v1139 = vadd.f32 %v979, %v1071
    %v1140 = vadd.f32 %v980, %v1076
    %v1141 = vadd.f32 %v981, %v1076
    %v1142 = vadd.f32 %v982, %v1076
    %v1143 = vadd.f32 %v983, %v1076
    %v1144 = vadd.f32 %v984, %v1081
    %v1145 = vadd.f32 %v985, %v1081
    %v1146 = vadd.f32 %v986, %v1081
    %v1147 = vadd.f32 %v987, %v1081
    %v1148 = vadd.f32 %v988, %v1086
    %v1149 = vadd.f32 %v989, %v1086
    %v1150 = vadd.f32 %v990, %v1086
    %v1151 = vadd.f32 %v991, %v1086
    %v1152 = vadd.f32 %v1088, %v1089
    %v1153 = vadd.f32 %v1152, %v1090
    %v1154 = vadd.f32 %v1153, %v1091
    %1155 = vadd.xlane.f32.xlu0 %v1154
    %v1156 = vpop.xlane.xlu0 %1155
    %v1157 = vadd.f32 %v1092, %v1093
    %v1158 = vadd.f32 %v1157, %v1094
    %v1159 = vadd.f32 %v1158, %v1095
    %1160 = vadd.xlane.f32.xlu0 %v1159
    %v1161 = vpop.xlane.xlu0 %1160
    %v1162 = vadd.f32 %v1096, %v1097
    %v1163 = vadd.f32 %v1162, %v1098
    %v1164 = vadd.f32 %v1163, %v1099
    %1165 = vadd.xlane.f32.xlu0 %v1164
    %v1166 = vpop.xlane.xlu0 %1165
    %v1167 = vadd.f32 %v1100, %v1101
    %v1168 = vadd.f32 %v1167, %v1102
    %v1169 = vadd.f32 %v1168, %v1103
    %1170 = vadd.xlane.f32.xlu0 %v1169
    %v1171 = vpop.xlane.xlu0 %1170
    %v1172 = vadd.f32 %v1104, %v1105
    %v1173 = vadd.f32 %v1172, %v1106
    %v1174 = vadd.f32 %v1173, %v1107
    %1175 = vadd.xlane.f32.xlu0 %v1174
    %v1176 = vpop.xlane.xlu0 %1175
    %v1177 = vadd.f32 %v1108, %v1109
    %v1178 = vadd.f32 %v1177, %v1110
    %v1179 = vadd.f32 %v1178, %v1111
    %1180 = vadd.xlane.f32.xlu0 %v1179
    %v1181 = vpop.xlane.xlu0 %1180
    %v1182 = vadd.f32 %v1112, %v1113
    %v1183 = vadd.f32 %v1182, %v1114
    %v1184 = vadd.f32 %v1183, %v1115
    %1185 = vadd.xlane.f32.xlu0 %v1184
    %v1186 = vpop.xlane.xlu0 %1185
    %v1187 = vadd.f32 %v1116, %v1117
    %v1188 = vadd.f32 %v1187, %v1118
    %v1189 = vadd.f32 %v1188, %v1119
    %1190 = vadd.xlane.f32.xlu0 %v1189
    %v1191 = vpop.xlane.xlu0 %1190
    %v1192 = vadd.f32 %v1120, %v1121
    %v1193 = vadd.f32 %v1192, %v1122
    %v1194 = vadd.f32 %v1193, %v1123
    %1195 = vadd.xlane.f32.xlu0 %v1194
    %v1196 = vpop.xlane.xlu0 %1195
    %v1197 = vadd.f32 %v1124, %v1125
    %v1198 = vadd.f32 %v1197, %v1126
    %v1199 = vadd.f32 %v1198, %v1127
    %1200 = vadd.xlane.f32.xlu0 %v1199
    %v1201 = vpop.xlane.xlu0 %1200
    %v1202 = vadd.f32 %v1128, %v1129
    %v1203 = vadd.f32 %v1202, %v1130
    %v1204 = vadd.f32 %v1203, %v1131
    %1205 = vadd.xlane.f32.xlu0 %v1204
    %v1206 = vpop.xlane.xlu0 %1205
    %v1207 = vadd.f32 %v1132, %v1133
    %v1208 = vadd.f32 %v1207, %v1134
    %v1209 = vadd.f32 %v1208, %v1135
    %1210 = vadd.xlane.f32.xlu0 %v1209
    %v1211 = vpop.xlane.xlu0 %1210
    %v1212 = vadd.f32 %v1136, %v1137
    %v1213 = vadd.f32 %v1212, %v1138
    %v1214 = vadd.f32 %v1213, %v1139
    %1215 = vadd.xlane.f32.xlu0 %v1214
    %v1216 = vpop.xlane.xlu0 %1215
    %v1217 = vadd.f32 %v1140, %v1141
    %v1218 = vadd.f32 %v1217, %v1142
    %v1219 = vadd.f32 %v1218, %v1143
    %1220 = vadd.xlane.f32.xlu0 %v1219
    %v1221 = vpop.xlane.xlu0 %1220
    %v1222 = vadd.f32 %v1144, %v1145
    %v1223 = vadd.f32 %v1222, %v1146
    %v1224 = vadd.f32 %v1223, %v1147
    %1225 = vadd.xlane.f32.xlu0 %v1224
    %v1226 = vpop.xlane.xlu0 %1225
    %v1227 = vadd.f32 %v1148, %v1149
    %v1228 = vadd.f32 %v1227, %v1150
    %v1229 = vadd.f32 %v1228, %v1151
    %1230 = vadd.xlane.f32.xlu0 %v1229
    %v1231 = vpop.xlane.xlu0 %1230
    %v1232 = vmul.f32 %v1088, %v1088
    %v1233 = vmul.f32 %v1089, %v1089
    %v1234 = vmul.f32 %v1090, %v1090
    %v1235 = vmul.f32 %v1091, %v1091
    %v1236 = vmul.f32 %v1092, %v1092
    %v1237 = vmul.f32 %v1093, %v1093
    %v1238 = vmul.f32 %v1094, %v1094
    %v1239 = vmul.f32 %v1095, %v1095
    %v1240 = vmul.f32 %v1096, %v1096
    %v1241 = vmul.f32 %v1097, %v1097
    %v1242 = vmul.f32 %v1098, %v1098
    %v1243 = vmul.f32 %v1099, %v1099
    %v1244 = vmul.f32 %v1100, %v1100
    %v1245 = vmul.f32 %v1101, %v1101
    %v1246 = vmul.f32 %v1102, %v1102
    %v1247 = vmul.f32 %v1103, %v1103
    %v1248 = vmul.f32 %v1104, %v1104
    %v1249 = vmul.f32 %v1105, %v1105
    %v1250 = vmul.f32 %v1106, %v1106
    %v1251 = vmul.f32 %v1107, %v1107
    %v1252 = vmul.f32 %v1108, %v1108
    %v1253 = vmul.f32 %v1109, %v1109
    %v1254 = vmul.f32 %v1110, %v1110
    %v1255 = vmul.f32 %v1111, %v1111
    %v1256 = vmul.f32 %v1112, %v1112
    %v1257 = vmul.f32 %v1113, %v1113
    %v1258 = vmul.f32 %v1114, %v1114
    %v1259 = vmul.f32 %v1115, %v1115
    %v1260 = vmul.f32 %v1116, %v1116
    %v1261 = vmul.f32 %v1117, %v1117
    %v1262 = vmul.f32 %v1118, %v1118
    %v1263 = vmul.f32 %v1119, %v1119
    %v1264 = vmul.f32 %v1120, %v1120
    %v1265 = vmul.f32 %v1121, %v1121
    %v1266 = vmul.f32 %v1122, %v1122
    %v1267 = vmul.f32 %v1123, %v1123
    %v1268 = vmul.f32 %v1124, %v1124
    %v1269 = vmul.f32 %v1125, %v1125
    %v1270 = vmul.f32 %v1126, %v1126
    %v1271 = vmul.f32 %v1127, %v1127
    %v1272 = vmul.f32 %v1128, %v1128
    %v1273 = vmul.f32 %v1129, %v1129
    %v1274 = vmul.f32 %v1130, %v1130
    %v1275 = vmul.f32 %v1131, %v1131
    %v1276 = vmul.f32 %v1132, %v1132
    %v1277 = vmul.f32 %v1133, %v1133
    %v1278 = vmul.f32 %v1134, %v1134
    %v1279 = vmul.f32 %v1135, %v1135
    %v1280 = vmul.f32 %v1136, %v1136
    %v1281 = vmul.f32 %v1137, %v1137
    %v1282 = vmul.f32 %v1138, %v1138
    %v1283 = vmul.f32 %v1139, %v1139
    %v1284 = vmul.f32 %v1140, %v1140
    %v1285 = vmul.f32 %v1141, %v1141
    %v1286 = vmul.f32 %v1142, %v1142
    %v1287 = vmul.f32 %v1143, %v1143
    %v1288 = vmul.f32 %v1144, %v1144
    %v1289 = vmul.f32 %v1145, %v1145
    %v1290 = vmul.f32 %v1146, %v1146
    %v1291 = vmul.f32 %v1147, %v1147
    %v1292 = vmul.f32 %v1148, %v1148
    %v1293 = vmul.f32 %v1149, %v1149
    %v1294 = vmul.f32 %v1150, %v1150
    %v1295 = vmul.f32 %v1151, %v1151
    %v1296 = vadd.f32 %v1232, %v1233
    %v1297 = vadd.f32 %v1296, %v1234
    %v1298 = vadd.f32 %v1297, %v1235
    %1299 = vadd.xlane.f32.xlu0 %v1298
    %v1300 = vpop.xlane.xlu0 %1299
    %v1301 = vadd.f32 %v1236, %v1237
    %v1302 = vadd.f32 %v1301, %v1238
    %v1303 = vadd.f32 %v1302, %v1239
    %1304 = vadd.xlane.f32.xlu0 %v1303
    %v1305 = vpop.xlane.xlu0 %1304
    %v1306 = vadd.f32 %v1240, %v1241
    %v1307 = vadd.f32 %v1306, %v1242
    %v1308 = vadd.f32 %v1307, %v1243
    %1309 = vadd.xlane.f32.xlu0 %v1308
    %v1310 = vpop.xlane.xlu0 %1309
    %v1311 = vadd.f32 %v1244, %v1245
    %v1312 = vadd.f32 %v1311, %v1246
    %v1313 = vadd.f32 %v1312, %v1247
    %1314 = vadd.xlane.f32.xlu0 %v1313
    %v1315 = vpop.xlane.xlu0 %1314
    %v1316 = vadd.f32 %v1248, %v1249
    %v1317 = vadd.f32 %v1316, %v1250
    %v1318 = vadd.f32 %v1317, %v1251
    %1319 = vadd.xlane.f32.xlu0 %v1318
    %v1320 = vpop.xlane.xlu0 %1319
    %v1321 = vadd.f32 %v1252, %v1253
    %v1322 = vadd.f32 %v1321, %v1254
    %v1323 = vadd.f32 %v1322, %v1255
    %1324 = vadd.xlane.f32.xlu0 %v1323
    %v1325 = vpop.xlane.xlu0 %1324
    %v1326 = vadd.f32 %v1256, %v1257
    %v1327 = vadd.f32 %v1326, %v1258
    %v1328 = vadd.f32 %v1327, %v1259
    %1329 = vadd.xlane.f32.xlu0 %v1328
    %v1330 = vpop.xlane.xlu0 %1329
    %v1331 = vadd.f32 %v1260, %v1261
    %v1332 = vadd.f32 %v1331, %v1262
    %v1333 = vadd.f32 %v1332, %v1263
    %1334 = vadd.xlane.f32.xlu0 %v1333
    %v1335 = vpop.xlane.xlu0 %1334
    %v1336 = vadd.f32 %v1264, %v1265
    %v1337 = vadd.f32 %v1336, %v1266
    %v1338 = vadd.f32 %v1337, %v1267
    %1339 = vadd.xlane.f32.xlu0 %v1338
    %v1340 = vpop.xlane.xlu0 %1339
    %v1341 = vadd.f32 %v1268, %v1269
    %v1342 = vadd.f32 %v1341, %v1270
    %v1343 = vadd.f32 %v1342, %v1271
    %1344 = vadd.xlane.f32.xlu0 %v1343
    %v1345 = vpop.xlane.xlu0 %1344
    %v1346 = vadd.f32 %v1272, %v1273
    %v1347 = vadd.f32 %v1346, %v1274
    %v1348 = vadd.f32 %v1347, %v1275
    %1349 = vadd.xlane.f32.xlu0 %v1348
    %v1350 = vpop.xlane.xlu0 %1349
    %v1351 = vadd.f32 %v1276, %v1277
    %v1352 = vadd.f32 %v1351, %v1278
    %v1353 = vadd.f32 %v1352, %v1279
    %1354 = vadd.xlane.f32.xlu0 %v1353
    %v1355 = vpop.xlane.xlu0 %1354
    %v1356 = vadd.f32 %v1280, %v1281
    %v1357 = vadd.f32 %v1356, %v1282
    %v1358 = vadd.f32 %v1357, %v1283
    %1359 = vadd.xlane.f32.xlu0 %v1358
    %v1360 = vpop.xlane.xlu0 %1359
    %v1361 = vadd.f32 %v1284, %v1285
    %v1362 = vadd.f32 %v1361, %v1286
    %v1363 = vadd.f32 %v1362, %v1287
    %1364 = vadd.xlane.f32.xlu0 %v1363
    %v1365 = vpop.xlane.xlu0 %1364
    %v1366 = vadd.f32 %v1288, %v1289
    %v1367 = vadd.f32 %v1366, %v1290
    %v1368 = vadd.f32 %v1367, %v1291
    %1369 = vadd.xlane.f32.xlu0 %v1368
    %v1370 = vpop.xlane.xlu0 %1369
    %v1371 = vadd.f32 %v1292, %v1293
    %v1372 = vadd.f32 %v1371, %v1294
    %v1373 = vadd.f32 %v1372, %v1295
    %1374 = vadd.xlane.f32.xlu0 %v1373
    %v1375 = vpop.xlane.xlu0 %1374
    %v1376 = vmul.f32 %v1156, 0.001953125
    %v1377 = vmul.f32 %v1161, 0.001953125
    %v1378 = vmul.f32 %v1166, 0.001953125
    %v1379 = vmul.f32 %v1171, 0.001953125
    %v1380 = vmul.f32 %v1176, 0.001953125
    %v1381 = vmul.f32 %v1181, 0.001953125
    %v1382 = vmul.f32 %v1186, 0.001953125
    %v1383 = vmul.f32 %v1191, 0.001953125
    %v1384 = vmul.f32 %v1196, 0.001953125
    %v1385 = vmul.f32 %v1201, 0.001953125
    %v1386 = vmul.f32 %v1206, 0.001953125
    %v1387 = vmul.f32 %v1211, 0.001953125
    %v1388 = vmul.f32 %v1216, 0.001953125
    %v1389 = vmul.f32 %v1221, 0.001953125
    %v1390 = vmul.f32 %v1226, 0.001953125
    %v1391 = vmul.f32 %v1231, 0.001953125
    %v1392 = vmul.f32 %v1300, 0.001953125
    %v1393 = vmul.f32 %v1305, 0.001953125
    %v1394 = vmul.f32 %v1310, 0.001953125
    %v1395 = vmul.f32 %v1315, 0.001953125
    %v1396 = vmul.f32 %v1320, 0.001953125
    %v1397 = vmul.f32 %v1325, 0.001953125
    %v1398 = vmul.f32 %v1330, 0.001953125
    %v1399 = vmul.f32 %v1335, 0.001953125
    %v1400 = vmul.f32 %v1340, 0.001953125
    %v1401 = vmul.f32 %v1345, 0.001953125
    %v1402 = vmul.f32 %v1350, 0.001953125
    %v1403 = vmul.f32 %v1355, 0.001953125
    %v1404 = vmul.f32 %v1360, 0.001953125
    %v1405 = vmul.f32 %v1365, 0.001953125
    %v1406 = vmul.f32 %v1370, 0.001953125
    %v1407 = vmul.f32 %v1375, 0.001953125
    %v1408 = vmul.f32 %v1376, %v1376
    %v1409 = vmul.f32 %v1377, %v1377
    %v1410 = vmul.f32 %v1378, %v1378
    %v1411 = vmul.f32 %v1379, %v1379
    %v1412 = vmul.f32 %v1380, %v1380
    %v1413 = vmul.f32 %v1381, %v1381
    %v1414 = vmul.f32 %v1382, %v1382
    %v1415 = vmul.f32 %v1383, %v1383
    %v1416 = vmul.f32 %v1384, %v1384
    %v1417 = vmul.f32 %v1385, %v1385
    %v1418 = vmul.f32 %v1386, %v1386
    %v1419 = vmul.f32 %v1387, %v1387
    %v1420 = vmul.f32 %v1388, %v1388
    %v1421 = vmul.f32 %v1389, %v1389
    %v1422 = vmul.f32 %v1390, %v1390
    %v1423 = vmul.f32 %v1391, %v1391
    %v1424 = vsub.f32 %v1392, %v1408
    %v1425 = vsub.f32 %v1393, %v1409
    %v1426 = vsub.f32 %v1394, %v1410
    %v1427 = vsub.f32 %v1395, %v1411
    %v1428 = vsub.f32 %v1396, %v1412
    %v1429 = vsub.f32 %v1397, %v1413
    %v1430 = vsub.f32 %v1398, %v1414
    %v1431 = vsub.f32 %v1399, %v1415
    %v1432 = vsub.f32 %v1400, %v1416
    %v1433 = vsub.f32 %v1401, %v1417
    %v1434 = vsub.f32 %v1402, %v1418
    %v1435 = vsub.f32 %v1403, %v1419
    %v1436 = vsub.f32 %v1404, %v1420
    %v1437 = vsub.f32 %v1405, %v1421
    %v1438 = vsub.f32 %v1406, %v1422
    %v1439 = vsub.f32 %v1407, %v1423
    %v1440 = vadd.f32 %v1424, 1e-05
    %v1441 = vadd.f32 %v1425, 1e-05
    %v1442 = vadd.f32 %v1426, 1e-05
    %v1443 = vadd.f32 %v1427, 1e-05
    %v1444 = vadd.f32 %v1428, 1e-05
    %v1445 = vadd.f32 %v1429, 1e-05
    %v1446 = vadd.f32 %v1430, 1e-05
    %v1447 = vadd.f32 %v1431, 1e-05
    %v1448 = vadd.f32 %v1432, 1e-05
    %v1449 = vadd.f32 %v1433, 1e-05
    %v1450 = vadd.f32 %v1434, 1e-05
    %v1451 = vadd.f32 %v1435, 1e-05
    %v1452 = vadd.f32 %v1436, 1e-05
    %v1453 = vadd.f32 %v1437, 1e-05
    %v1454 = vadd.f32 %v1438, 1e-05
    %v1455 = vadd.f32 %v1439, 1e-05
    %v1456 = vrsqrt.pop %v1440
    %v1457 = vrsqrt.pop %v1441
    %v1458 = vrsqrt.pop %v1442
    %v1459 = vrsqrt.pop %v1443
    %v1460 = vrsqrt.pop %v1444
    %v1461 = vrsqrt.pop %v1445
    %v1462 = vrsqrt.pop %v1446
    %v1463 = vrsqrt.pop %v1447
    %v1464 = vrsqrt.pop %v1448
    %v1465 = vrsqrt.pop %v1449
    %v1466 = vrsqrt.pop %v1450
    %v1467 = vrsqrt.pop %v1451
    %v1468 = vrsqrt.pop %v1452
    %v1469 = vrsqrt.pop %v1453
    %v1470 = vrsqrt.pop %v1454
    %v1471 = vrsqrt.pop %v1455
    %v1472 = vmul.f32 %v992, %v1456
    %v1473 = vmul.f32 %v993, %v1457
    %v1474 = vmul.f32 %v994, %v1458
    %v1475 = vmul.f32 %v995, %v1459
    %v1476 = vmul.f32 %v996, %v1460
    %v1477 = vmul.f32 %v997, %v1461
    %v1478 = vmul.f32 %v998, %v1462
    %v1479 = vmul.f32 %v999, %v1463
    %v1480 = vmul.f32 %v1000, %v1464
    %v1481 = vmul.f32 %v1001, %v1465
    %v1482 = vmul.f32 %v1002, %v1466
    %v1483 = vmul.f32 %v1003, %v1467
    %v1484 = vmul.f32 %v1004, %v1468
    %v1485 = vmul.f32 %v1005, %v1469
    %v1486 = vmul.f32 %v1006, %v1470
    %v1487 = vmul.f32 %v1007, %v1471
    %v1488 = vmul.f32 %v1376, %v1472
    %v1489 = vmul.f32 %v1377, %v1473
    %v1490 = vmul.f32 %v1378, %v1474
    %v1491 = vmul.f32 %v1379, %v1475
    %v1492 = vmul.f32 %v1380, %v1476
    %v1493 = vmul.f32 %v1381, %v1477
    %v1494 = vmul.f32 %v1382, %v1478
    %v1495 = vmul.f32 %v1383, %v1479
    %v1496 = vmul.f32 %v1384, %v1480
    %v1497 = vmul.f32 %v1385, %v1481
    %v1498 = vmul.f32 %v1386, %v1482
    %v1499 = vmul.f32 %v1387, %v1483
    %v1500 = vmul.f32 %v1388, %v1484
    %v1501 = vmul.f32 %v1389, %v1485
    %v1502 = vmul.f32 %v1390, %v1486
    %v1503 = vmul.f32 %v1391, %v1487
    %1520 = vrot.lane.b32.xlu0 %v1488, 1
    %v1521 = vpop.permute.xlu0 %1520
    %1522 = vrot.lane.b32.xlu0 %v1489, 1
    %v1523 = vpop.permute.xlu0 %1522
    %1524 = vrot.lane.b32.xlu0 %v1490, 1
    %v1525 = vpop.permute.xlu0 %1524
    %1526 = vrot.lane.b32.xlu0 %v1491, 1
    %v1527 = vpop.permute.xlu0 %1526
    %1528 = vrot.lane.b32.xlu0 %v1492, 1
    %v1529 = vpop.permute.xlu0 %1528
    %1530 = vrot.lane.b32.xlu0 %v1493, 1
    %v1531 = vpop.permute.xlu0 %1530
    %1532 = vrot.lane.b32.xlu0 %v1494, 1
    %v1533 = vpop.permute.xlu0 %1532
    %1534 = vrot.lane.b32.xlu0 %v1495, 1
    %v1535 = vpop.permute.xlu0 %1534
    %1536 = vrot.lane.b32.xlu0 %v1496, 1
    %v1537 = vpop.permute.xlu0 %1536
    %1538 = vrot.lane.b32.xlu0 %v1497, 1
    %v1539 = vpop.permute.xlu0 %1538
    %1540 = vrot.lane.b32.xlu0 %v1498, 1
    %v1541 = vpop.permute.xlu0 %1540
    %1542 = vrot.lane.b32.xlu0 %v1499, 1
    %v1543 = vpop.permute.xlu0 %1542
    %1544 = vrot.lane.b32.xlu0 %v1500, 1
    %v1545 = vpop.permute.xlu0 %1544
    %1546 = vrot.lane.b32.xlu0 %v1501, 1
    %v1547 = vpop.permute.xlu0 %1546
    %1548 = vrot.lane.b32.xlu0 %v1502, 1
    %v1549 = vpop.permute.xlu0 %1548
    %1550 = vrot.lane.b32.xlu0 %v1503, 1
    %v1551 = vpop.permute.xlu0 %1550
    %v1568 = vsub.f32 %v992, %v1521
    %v1569 = vsub.f32 %v993, %v1523
    %v1570 = vsub.f32 %v994, %v1525
    %v1571 = vsub.f32 %v995, %v1527
    %v1572 = vsub.f32 %v996, %v1529
    %v1573 = vsub.f32 %v997, %v1531
    %v1574 = vsub.f32 %v998, %v1533
    %v1575 = vsub.f32 %v999, %v1535
    %v1576 = vsub.f32 %v1000, %v1537
    %v1577 = vsub.f32 %v1001, %v1539
    %v1578 = vsub.f32 %v1002, %v1541
    %v1579 = vsub.f32 %v1003, %v1543
    %v1580 = vsub.f32 %v1004, %v1545
    %v1581 = vsub.f32 %v1005, %v1547
    %v1582 = vsub.f32 %v1006, %v1549
    %v1583 = vsub.f32 %v1007, %v1551
    %1585 = vset.pattern.permute.xlu0 1
    %1586 = vperm.xlu0 %1585, %v1472
    %v1587 = vpop.permute.xlu0 %1586
    %1590 = vset.pattern.permute.xlu0 1
    %1591 = vperm.xlu0 %1590, %v1473
    %v1592 = vpop.permute.xlu0 %1591
    %1595 = vset.pattern.permute.xlu0 1
    %1596 = vperm.xlu0 %1595, %v1474
    %v1597 = vpop.permute.xlu0 %1596
    %1600 = vset.pattern.permute.xlu0 1
    %1601 = vperm.xlu0 %1600, %v1475
    %v1602 = vpop.permute.xlu0 %1601
    %1605 = vset.pattern.permute.xlu0 1
    %1606 = vperm.xlu0 %1605, %v1476
    %v1607 = vpop.permute.xlu0 %1606
    %1610 = vset.pattern.permute.xlu0 1
    %1611 = vperm.xlu0 %1610, %v1477
    %v1612 = vpop.permute.xlu0 %1611
    %1615 = vset.pattern.permute.xlu0 1
    %1616 = vperm.xlu0 %1615, %v1478
    %v1617 = vpop.permute.xlu0 %1616
    %1620 = vset.pattern.permute.xlu0 1
    %1621 = vperm.xlu0 %1620, %v1479
    %v1622 = vpop.permute.xlu0 %1621
    %1625 = vset.pattern.permute.xlu0 1
    %1626 = vperm.xlu0 %1625, %v1480
    %v1627 = vpop.permute.xlu0 %1626
    %1630 = vset.pattern.permute.xlu0 1
    %1631 = vperm.xlu0 %1630, %v1481
    %v1632 = vpop.permute.xlu0 %1631
    %1635 = vset.pattern.permute.xlu0 1
    %1636 = vperm.xlu0 %1635, %v1482
    %v1637 = vpop.permute.xlu0 %1636
    %1640 = vset.pattern.permute.xlu0 1
    %1641 = vperm.xlu0 %1640, %v1483
    %v1642 = vpop.permute.xlu0 %1641
    %1645 = vset.pattern.permute.xlu0 1
    %1646 = vperm.xlu0 %1645, %v1484
    %v1647 = vpop.permute.xlu0 %1646
    %1650 = vset.pattern.permute.xlu0 1
    %1651 = vperm.xlu0 %1650, %v1485
    %v1652 = vpop.permute.xlu0 %1651
    %1655 = vset.pattern.permute.xlu0 1
    %1656 = vperm.xlu0 %1655, %v1486
    %v1657 = vpop.permute.xlu0 %1656
    %1660 = vset.pattern.permute.xlu0 1
    %1661 = vperm.xlu0 %1660, %v1487
    %v1662 = vpop.permute.xlu0 %1661
    %v1664 = vmul.f32 %v1088, %v1587
    %v1665 = vmul.f32 %v1089, %v1587
    %v1666 = vmul.f32 %v1090, %v1587
    %v1667 = vmul.f32 %v1091, %v1587
    %v1668 = vmul.f32 %v1092, %v1592
    %v1669 = vmul.f32 %v1093, %v1592
    %v1670 = vmul.f32 %v1094, %v1592
    %v1671 = vmul.f32 %v1095, %v1592
    %v1672 = vmul.f32 %v1096, %v1597
    %v1673 = vmul.f32 %v1097, %v1597
    %v1674 = vmul.f32 %v1098, %v1597
    %v1675 = vmul.f32 %v1099, %v1597
    %v1676 = vmul.f32 %v1100, %v1602
    %v1677 = vmul.f32 %v1101, %v1602
    %v1678 = vmul.f32 %v1102, %v1602
    %v1679 = vmul.f32 %v1103, %v1602
    %v1680 = vmul.f32 %v1104, %v1607
    %v1681 = vmul.f32 %v1105, %v1607
    %v1682 = vmul.f32 %v1106, %v1607
    %v1683 = vmul.f32 %v1107, %v1607
    %v1684 = vmul.f32 %v1108, %v1612
    %v1685 = vmul.f32 %v1109, %v1612
    %v1686 = vmul.f32 %v1110, %v1612
    %v1687 = vmul.f32 %v1111, %v1612
    %v1688 = vmul.f32 %v1112, %v1617
    %v1689 = vmul.f32 %v1113, %v1617
    %v1690 = vmul.f32 %v1114, %v1617
    %v1691 = vmul.f32 %v1115, %v1617
    %v1692 = vmul.f32 %v1116, %v1622
    %v1693 = vmul.f32 %v1117, %v1622
    %v1694 = vmul.f32 %v1118, %v1622
    %v1695 = vmul.f32 %v1119, %v1622
    %v1696 = vmul.f32 %v1120, %v1627
    %v1697 = vmul.f32 %v1121, %v1627
    %v1698 = vmul.f32 %v1122, %v1627
    %v1699 = vmul.f32 %v1123, %v1627
    %v1700 = vmul.f32 %v1124, %v1632
    %v1701 = vmul.f32 %v1125, %v1632
    %v1702 = vmul.f32 %v1126, %v1632
    %v1703 = vmul.f32 %v1127, %v1632
    %v1704 = vmul.f32 %v1128, %v1637
    %v1705 = vmul.f32 %v1129, %v1637
    %v1706 = vmul.f32 %v1130, %v1637
    %v1707 = vmul.f32 %v1131, %v1637
    %v1708 = vmul.f32 %v1132, %v1642
    %v1709 = vmul.f32 %v1133, %v1642
    %v1710 = vmul.f32 %v1134, %v1642
    %v1711 = vmul.f32 %v1135, %v1642
    %v1712 = vmul.f32 %v1136, %v1647
    %v1713 = vmul.f32 %v1137, %v1647
    %v1714 = vmul.f32 %v1138, %v1647
    %v1715 = vmul.f32 %v1139, %v1647
    %v1716 = vmul.f32 %v1140, %v1652
    %v1717 = vmul.f32 %v1141, %v1652
    %v1718 = vmul.f32 %v1142, %v1652
    %v1719 = vmul.f32 %v1143, %v1652
    %v1720 = vmul.f32 %v1144, %v1657
    %v1721 = vmul.f32 %v1145, %v1657
    %v1722 = vmul.f32 %v1146, %v1657
    %v1723 = vmul.f32 %v1147, %v1657
    %v1724 = vmul.f32 %v1148, %v1662
    %v1725 = vmul.f32 %v1149, %v1662
    %v1726 = vmul.f32 %v1150, %v1662
    %v1727 = vmul.f32 %v1151, %v1662
    %1729 = vset.pattern.permute.xlu0 2
    %1730 = vperm.xlu0 %1729, %v1568
    %v1731 = vpop.permute.xlu0 %1730
    %1734 = vset.pattern.permute.xlu0 2
    %1735 = vperm.xlu0 %1734, %v1569
    %v1736 = vpop.permute.xlu0 %1735
    %1739 = vset.pattern.permute.xlu0 2
    %1740 = vperm.xlu0 %1739, %v1570
    %v1741 = vpop.permute.xlu0 %1740
    %1744 = vset.pattern.permute.xlu0 2
    %1745 = vperm.xlu0 %1744, %v1571
    %v1746 = vpop.permute.xlu0 %1745
    %1749 = vset.pattern.permute.xlu0 2
    %1750 = vperm.xlu0 %1749, %v1572
    %v1751 = vpop.permute.xlu0 %1750
    %1754 = vset.pattern.permute.xlu0 2
    %1755 = vperm.xlu0 %1754, %v1573
    %v1756 = vpop.permute.xlu0 %1755
    %1759 = vset.pattern.permute.xlu0 2
    %1760 = vperm.xlu0 %1759, %v1574
    %v1761 = vpop.permute.xlu0 %1760
    %1764 = vset.pattern.permute.xlu0 2
    %1765 = vperm.xlu0 %1764, %v1575
    %v1766 = vpop.permute.xlu0 %1765
    %1769 = vset.pattern.permute.xlu0 2
    %1770 = vperm.xlu0 %1769, %v1576
    %v1771 = vpop.permute.xlu0 %1770
    %1774 = vset.pattern.permute.xlu0 2
    %1775 = vperm.xlu0 %1774, %v1577
    %v1776 = vpop.permute.xlu0 %1775
    %1779 = vset.pattern.permute.xlu0 2
    %1780 = vperm.xlu0 %1779, %v1578
    %v1781 = vpop.permute.xlu0 %1780
    %1784 = vset.pattern.permute.xlu0 2
    %1785 = vperm.xlu0 %1784, %v1579
    %v1786 = vpop.permute.xlu0 %1785
    %1789 = vset.pattern.permute.xlu0 2
    %1790 = vperm.xlu0 %1789, %v1580
    %v1791 = vpop.permute.xlu0 %1790
    %1794 = vset.pattern.permute.xlu0 2
    %1795 = vperm.xlu0 %1794, %v1581
    %v1796 = vpop.permute.xlu0 %1795
    %1799 = vset.pattern.permute.xlu0 2
    %1800 = vperm.xlu0 %1799, %v1582
    %v1801 = vpop.permute.xlu0 %1800
    %1804 = vset.pattern.permute.xlu0 2
    %1805 = vperm.xlu0 %1804, %v1583
    %v1806 = vpop.permute.xlu0 %1805
    %v1808 = vadd.f32 %v1664, %v1731
    %v1809 = vadd.f32 %v1665, %v1731
    %v1810 = vadd.f32 %v1666, %v1731
    %v1811 = vadd.f32 %v1667, %v1731
    %v1812 = vadd.f32 %v1668, %v1736
    %v1813 = vadd.f32 %v1669, %v1736
    %v1814 = vadd.f32 %v1670, %v1736
    %v1815 = vadd.f32 %v1671, %v1736
    %v1816 = vadd.f32 %v1672, %v1741
    %v1817 = vadd.f32 %v1673, %v1741
    %v1818 = vadd.f32 %v1674, %v1741
    %v1819 = vadd.f32 %v1675, %v1741
    %v1820 = vadd.f32 %v1676, %v1746
    %v1821 = vadd.f32 %v1677, %v1746
    %v1822 = vadd.f32 %v1678, %v1746
    %v1823 = vadd.f32 %v1679, %v1746
    %v1824 = vadd.f32 %v1680, %v1751
    %v1825 = vadd.f32 %v1681, %v1751
    %v1826 = vadd.f32 %v1682, %v1751
    %v1827 = vadd.f32 %v1683, %v1751
    %v1828 = vadd.f32 %v1684, %v1756
    %v1829 = vadd.f32 %v1685, %v1756
    %v1830 = vadd.f32 %v1686, %v1756
    %v1831 = vadd.f32 %v1687, %v1756
    %v1832 = vadd.f32 %v1688, %v1761
    %v1833 = vadd.f32 %v1689, %v1761
    %v1834 = vadd.f32 %v1690, %v1761
    %v1835 = vadd.f32 %v1691, %v1761
    %v1836 = vadd.f32 %v1692, %v1766
    %v1837 = vadd.f32 %v1693, %v1766
    %v1838 = vadd.f32 %v1694, %v1766
    %v1839 = vadd.f32 %v1695, %v1766
    %v1840 = vadd.f32 %v1696, %v1771
    %v1841 = vadd.f32 %v1697, %v1771
    %v1842 = vadd.f32 %v1698, %v1771
    %v1843 = vadd.f32 %v1699, %v1771
    %v1844 = vadd.f32 %v1700, %v1776
    %v1845 = vadd.f32 %v1701, %v1776
    %v1846 = vadd.f32 %v1702, %v1776
    %v1847 = vadd.f32 %v1703, %v1776
    %v1848 = vadd.f32 %v1704, %v1781
    %v1849 = vadd.f32 %v1705, %v1781
    %v1850 = vadd.f32 %v1706, %v1781
    %v1851 = vadd.f32 %v1707, %v1781
    %v1852 = vadd.f32 %v1708, %v1786
    %v1853 = vadd.f32 %v1709, %v1786
    %v1854 = vadd.f32 %v1710, %v1786
    %v1855 = vadd.f32 %v1711, %v1786
    %v1856 = vadd.f32 %v1712, %v1791
    %v1857 = vadd.f32 %v1713, %v1791
    %v1858 = vadd.f32 %v1714, %v1791
    %v1859 = vadd.f32 %v1715, %v1791
    %v1860 = vadd.f32 %v1716, %v1796
    %v1861 = vadd.f32 %v1717, %v1796
    %v1862 = vadd.f32 %v1718, %v1796
    %v1863 = vadd.f32 %v1719, %v1796
    %v1864 = vadd.f32 %v1720, %v1801
    %v1865 = vadd.f32 %v1721, %v1801
    %v1866 = vadd.f32 %v1722, %v1801
    %v1867 = vadd.f32 %v1723, %v1801
    %v1868 = vadd.f32 %v1724, %v1806
    %v1869 = vadd.f32 %v1725, %v1806
    %v1870 = vadd.f32 %v1726, %v1806
    %v1871 = vadd.f32 %v1727, %v1806
    %v1872 = vmax.f32 %v1808, 0.0
    %v1873 = vmax.f32 %v1809, 0.0
    %v1874 = vmax.f32 %v1810, 0.0
    %v1875 = vmax.f32 %v1811, 0.0
    %v1876 = vmax.f32 %v1812, 0.0
    %v1877 = vmax.f32 %v1813, 0.0
    %v1878 = vmax.f32 %v1814, 0.0
    %v1879 = vmax.f32 %v1815, 0.0
    %v1880 = vmax.f32 %v1816, 0.0
    %v1881 = vmax.f32 %v1817, 0.0
    %v1882 = vmax.f32 %v1818, 0.0
    %v1883 = vmax.f32 %v1819, 0.0
    %v1884 = vmax.f32 %v1820, 0.0
    %v1885 = vmax.f32 %v1821, 0.0
    %v1886 = vmax.f32 %v1822, 0.0
    %v1887 = vmax.f32 %v1823, 0.0
    %v1888 = vmax.f32 %v1824, 0.0
    %v1889 = vmax.f32 %v1825, 0.0
    %v1890 = vmax.f32 %v1826, 0.0
    %v1891 = vmax.f32 %v1827, 0.0
    %v1892 = vmax.f32 %v1828, 0.0
    %v1893 = vmax.f32 %v1829, 0.0
    %v1894 = vmax.f32 %v1830, 0.0
    %v1895 = vmax.f32 %v1831, 0.0
    %v1896 = vmax.f32 %v1832, 0.0
    %v1897 = vmax.f32 %v1833, 0.0
    %v1898 = vmax.f32 %v1834, 0.0
    %v1899 = vmax.f32 %v1835, 0.0
    %v1900 = vmax.f32 %v1836, 0.0
    %v1901 = vmax.f32 %v1837, 0.0
    %v1902 = vmax.f32 %v1838, 0.0
    %v1903 = vmax.f32 %v1839, 0.0
    %v1904 = vmax.f32 %v1840, 0.0
    %v1905 = vmax.f32 %v1841, 0.0
    %v1906 = vmax.f32 %v1842, 0.0
    %v1907 = vmax.f32 %v1843, 0.0
    %v1908 = vmax.f32 %v1844, 0.0
    %v1909 = vmax.f32 %v1845, 0.0
    %v1910 = vmax.f32 %v1846, 0.0
    %v1911 = vmax.f32 %v1847, 0.0
    %v1912 = vmax.f32 %v1848, 0.0
    %v1913 = vmax.f32 %v1849, 0.0
    %v1914 = vmax.f32 %v1850, 0.0
    %v1915 = vmax.f32 %v1851, 0.0
    %v1916 = vmax.f32 %v1852, 0.0
    %v1917 = vmax.f32 %v1853, 0.0
    %v1918 = vmax.f32 %v1854, 0.0
    %v1919 = vmax.f32 %v1855, 0.0
    %v1920 = vmax.f32 %v1856, 0.0
    %v1921 = vmax.f32 %v1857, 0.0
    %v1922 = vmax.f32 %v1858, 0.0
    %v1923 = vmax.f32 %v1859, 0.0
    %v1924 = vmax.f32 %v1860, 0.0
    %v1925 = vmax.f32 %v1861, 0.0
    %v1926 = vmax.f32 %v1862, 0.0
    %v1927 = vmax.f32 %v1863, 0.0
    %v1928 = vmax.f32 %v1864, 0.0
    %v1929 = vmax.f32 %v1865, 0.0
    %v1930 = vmax.f32 %v1866, 0.0
    %v1931 = vmax.f32 %v1867, 0.0
    %v1932 = vmax.f32 %v1868, 0.0
    %v1933 = vmax.f32 %v1869, 0.0
    %v1934 = vmax.f32 %v1870, 0.0
    %v1935 = vmax.f32 %v1871, 0.0
    %v1936 = vld [vmem:[%s2] sm:$0xf]
    %v1937 = vld [vmem:[%s5] sm:$0xf]
    %1939 = vset.pattern.permute.xlu0 5
    %1940 = vperm.xlu0 %1939, %v1937
    %v1941 = vpop.permute.xlu0 %1940
    %1943 = vmatprep.subr.mxu0 %v1873
    %1944 = vmatpush1.msra.mxu0 %v1872
    %1945 = vmatprep.subr.mxu0 %v1877
    %1946 = vmatpush1.msra.mxu0 %v1876
    %1947 = vmatprep.subr.mxu0 %v1881
    %1948 = vmatpush1.msra.mxu0 %v1880
    %1949 = vmatprep.subr.mxu0 %v1885
    %1950 = vmatpush1.msra.mxu0 %v1884
    %1951 = vmatprep.subr.mxu0 %v1889
    %1952 = vmatpush1.msra.mxu0 %v1888
    %1953 = vmatprep.subr.mxu0 %v1893
    %1954 = vmatpush1.msra.mxu0 %v1892
    %1955 = vmatprep.subr.mxu0 %v1897
    %1956 = vmatpush1.msra.mxu0 %v1896
    %1957 = vmatprep.subr.mxu0 %v1901
    %1958 = vmatpush1.msra.mxu0 %v1900
    %1959 = vmatprep.subr.mxu0 %v1905
    %1960 = vmatpush1.msra.mxu0 %v1904
    %1961 = vmatprep.subr.mxu0 %v1909
    %1962 = vmatpush1.msra.mxu0 %v1908
    %1963 = vmatprep.subr.mxu0 %v1913
    %1964 = vmatpush1.msra.mxu0 %v1912
    %1965 = vmatprep.subr.mxu0 %v1917
    %1966 = vmatpush1.msra.mxu0 %v1916
    %1967 = vmatprep.subr.mxu0 %v1921
    %1968 = vmatpush1.msra.mxu0 %v1920
    %1969 = vmatprep.subr.mxu0 %v1925
    %1970 = vmatpush1.msra.mxu0 %v1924
    %1971 = vmatprep.subr.mxu0 %v1929
    %1972 = vmatpush1.msra.mxu0 %v1928
    %1973 = vmatprep.subr.mxu0 %v1933
    %1974 = vmatpush1.msra.mxu0 %v1932
    %1975 = vmatprep.subr.mxu0 0.0
    %1976 = vmatpush1.msra.mxu0 0.0
    %1977 = vmatprep.subr.mxu0 0.0
    %1978 = vmatpush1.msra.mxu0 0.0
    %1979 = vmatprep.subr.mxu0 0.0
    %1980 = vmatpush1.msra.mxu0 0.0
    %1981 = vmatprep.subr.mxu0 0.0
    %1982 = vmatpush1.msra.mxu0 0.0
    %1983 = vmatprep.subr.mxu0 0.0
    %1984 = vmatpush1.msra.mxu0 0.0
    %1985 = vmatprep.subr.mxu0 0.0
    %1986 = vmatpush1.msra.mxu0 0.0
    %1987 = vmatprep.subr.mxu0 0.0
    %1988 = vmatpush1.msra.mxu0 0.0
    %1989 = vmatprep.subr.mxu0 0.0
    %1990 = vmatpush1.msra.mxu0 0.0
    %1991 = vmatprep.subr.mxu0 0.0
    %1992 = vmatpush1.msra.mxu0 0.0
    %1993 = vmatprep.subr.mxu0 0.0
    %1994 = vmatpush1.msra.mxu0 0.0
    %1995 = vmatprep.subr.mxu0 0.0
    %1996 = vmatpush1.msra.mxu0 0.0
    %1997 = vmatprep.subr.mxu0 0.0
    %1998 = vmatpush1.msra.mxu0 0.0
    %1999 = vmatprep.subr.mxu0 0.0
    %2000 = vmatpush1.msra.mxu0 0.0
    %2001 = vmatprep.subr.mxu0 0.0
    %2002 = vmatpush1.msra.mxu0 0.0
    %2003 = vmatprep.subr.mxu0 0.0
    %2004 = vmatpush1.msra.mxu0 0.0
    %2005 = vmatprep.subr.mxu0 0.0
    %2006 = vmatpush1.msra.mxu0 0.0
    %2007 = vmatprep.mubr.f32.mxu0 0.0
    %2008 = vmatmul.mubr.f32.gmra.mrb[0].mxu0 %v1936
    %v2009 = vpop.f32.mrb[0].mxu0
    %v2010 = vadd.f32 %v1941, %v2009
    %v2011 = vpop.f32.mrb[0].mxu0
    %v2012 = vadd.f32 %v1941, %v2011
    %2013 = vdwg.mxu0
    %2014 = vmatprep.subr.mxu0 %v1875
    %2015 = vmatpush1.msra.mxu0 %v1874
    %2016 = vmatprep.subr.mxu0 %v1879
    %2017 = vmatpush1.msra.mxu0 %v1878
    %2018 = vmatprep.subr.mxu0 %v1883
    %2019 = vmatpush1.msra.mxu0 %v1882
    %2020 = vmatprep.subr.mxu0 %v1887
    %2021 = vmatpush1.msra.mxu0 %v1886
    %2022 = vmatprep.subr.mxu0 %v1891
    %2023 = vmatpush1.msra.mxu0 %v1890
    %2024 = vmatprep.subr.mxu0 %v1895
    %2025 = vmatpush1.msra.mxu0 %v1894
    %2026 = vmatprep.subr.mxu0 %v1899
    %2027 = vmatpush1.msra.mxu0 %v1898
    %2028 = vmatprep.subr.mxu0 %v1903
    %2029 = vmatpush1.msra.mxu0 %v1902
    %2030 = vmatprep.subr.mxu0 %v1907
    %2031 = vmatpush1.msra.mxu0 %v1906
    %2032 = vmatprep.subr.mxu0 %v1911
    %2033 = vmatpush1.msra.mxu0 %v1910
    %2034 = vmatprep.subr.mxu0 %v1915
    %2035 = vmatpush1.msra.mxu0 %v1914
    %2036 = vmatprep.subr.mxu0 %v1919
    %2037 = vmatpush1.msra.mxu0 %v1918
    %2038 = vmatprep.subr.mxu0 %v1923
    %2039 = vmatpush1.msra.mxu0 %v1922
    %2040 = vmatprep.subr.mxu0 %v1927
    %2041 = vmatpush1.msra.mxu0 %v1926
    %2042 = vmatprep.subr.mxu0 %v1931
    %2043 = vmatpush1.msra.mxu0 %v1930
    %2044 = vmatprep.subr.mxu0 %v1935
    %2045 = vmatpush1.msra.mxu0 %v1934
    %2046 = vmatprep.subr.mxu0 0.0
    %2047 = vmatpush1.msra.mxu0 0.0
    %2048 = vmatprep.subr.mxu0 0.0
    %2049 = vmatpush1.msra.mxu0 0.0
    %2050 = vmatprep.subr.mxu0 0.0
    %2051 = vmatpush1.msra.mxu0 0.0
    %2052 = vmatprep.subr.mxu0 0.0
    %2053 = vmatpush1.msra.mxu0 0.0
    %2054 = vmatprep.subr.mxu0 0.0
    %2055 = vmatpush1.msra.mxu0 0.0
    %2056 = vmatprep.subr.mxu0 0.0
    %2057 = vmatpush1.msra.mxu0 0.0
    %2058 = vmatprep.subr.mxu0 0.0
    %2059 = vmatpush1.msra.mxu0 0.0
    %2060 = vmatprep.subr.mxu0 0.0
    %2061 = vmatpush1.msra.mxu0 0.0
    %2062 = vmatprep.subr.mxu0 0.0
    %2063 = vmatpush1.msra.mxu0 0.0
    %2064 = vmatprep.subr.mxu0 0.0
    %2065 = vmatpush1.msra.mxu0 0.0
    %2066 = vmatprep.subr.mxu0 0.0
    %2067 = vmatpush1.msra.mxu0 0.0
    %2068 = vmatprep.subr.mxu0 0.0
    %2069 = vmatpush1.msra.mxu0 0.0
    %2070 = vmatprep.subr.mxu0 0.0
    %2071 = vmatpush1.msra.mxu0 0.0
    %2072 = vmatprep.subr.mxu0 0.0
    %2073 = vmatpush1.msra.mxu0 0.0
    %2074 = vmatprep.subr.mxu0 0.0
    %2075 = vmatpush1.msra.mxu0 0.0
    %2076 = vmatprep.subr.mxu0 0.0
    %2077 = vmatpush1.msra.mxu0 0.0
    %2078 = vmatprep.mubr.f32.mxu0 0.0
    %2079 = vmatmul.mubr.f32.gmra.mrb[0].mxu0 %v1936
    %v2080 = vpop.f32.mrb[0].mxu0
    %v2081 = vadd.f32 %v1941, %v2080
    %v2082 = vpop.f32.mrb[0].mxu0
    %v2083 = vadd.f32 %v1941, %v2082
    %2084 = vdwg.mxu0
    %vm2085 = vcmask 1043456
    %v2086 = vsel %vm2085, %v2010, -inf
    %v2087 = vrot.slane %v2086, 4
    %v2088 = vmax.f32 %v2086, %v2087
    %v2089 = vrot.slane %v2088, 2
    %v2090 = vmax.f32 %v2088, %v2089
    %v2091 = vrot.slane %v2090, 1
    %v2092 = vmax.f32 %v2090, %v2091
    %v2093 = vsel %vm2085, %v2012, -inf
    %v2094 = vrot.slane %v2093, 4
    %v2095 = vmax.f32 %v2093, %v2094
    %v2096 = vrot.slane %v2095, 2
    %v2097 = vmax.f32 %v2095, %v2096
    %v2098 = vrot.slane %v2097, 1
    %v2099 = vmax.f32 %v2097, %v2098
    %v2100 = vsel %vm2085, %v2081, -inf
    %v2101 = vrot.slane %v2100, 4
    %v2102 = vmax.f32 %v2100, %v2101
    %v2103 = vrot.slane %v2102, 2
    %v2104 = vmax.f32 %v2102, %v2103
    %v2105 = vrot.slane %v2104, 1
    %v2106 = vmax.f32 %v2104, %v2105
    %v2107 = vsel %vm2085, %v2083, -inf
    %v2108 = vrot.slane %v2107, 4
    %v2109 = vmax.f32 %v2107, %v2108
    %v2110 = vrot.slane %v2109, 2
    %v2111 = vmax.f32 %v2109, %v2110
    %v2112 = vrot.slane %v2111, 1
    %v2113 = vmax.f32 %v2111, %v2112
    %v2114 = vsub.f32 %v2010, %v2092
    %v2115 = vsub.f32 %v2012, %v2099
    %v2116 = vsub.f32 %v2081, %v2106
    %v2117 = vsub.f32 %v2083, %v2113
    %v2118 = vmul.f32 %v2114, 1.442695
    %v2119 = vpow.pop %v2118
    %v2120 = vmul.f32 %v2115, 1.442695
    %v2121 = vpow.pop %v2120
    %v2122 = vmul.f32 %v2116, 1.442695
    %v2123 = vpow.pop %v2122
    %v2124 = vmul.f32 %v2117, 1.442695
    %v2125 = vpow.pop %v2124
    %v2126 = vsel %vm2085, %v2119, 0.0
    %v2127 = vrot.slane %v2126, 4
    %v2128 = vadd.f32 %v2126, %v2127
    %v2129 = vrot.slane %v2128, 2
    %v2130 = vadd.f32 %v2128, %v2129
    %v2131 = vrot.slane %v2130, 1
    %v2132 = vadd.f32 %v2130, %v2131
    %v2133 = vsel %vm2085, %v2121, 0.0
    %v2134 = vrot.slane %v2133, 4
    %v2135 = vadd.f32 %v2133, %v2134
    %v2136 = vrot.slane %v2135, 2
    %v2137 = vadd.f32 %v2135, %v2136
    %v2138 = vrot.slane %v2137, 1
    %v2139 = vadd.f32 %v2137, %v2138
    %v2140 = vsel %vm2085, %v2123, 0.0
    %v2141 = vrot.slane %v2140, 4
    %v2142 = vadd.f32 %v2140, %v2141
    %v2143 = vrot.slane %v2142, 2
    %v2144 = vadd.f32 %v2142, %v2143
    %v2145 = vrot.slane %v2144, 1
    %v2146 = vadd.f32 %v2144, %v2145
    %v2147 = vsel %vm2085, %v2125, 0.0
    %v2148 = vrot.slane %v2147, 4
    %v2149 = vadd.f32 %v2147, %v2148
    %v2150 = vrot.slane %v2149, 2
    %v2151 = vadd.f32 %v2149, %v2150
    %v2152 = vrot.slane %v2151, 1
    %v2153 = vadd.f32 %v2151, %v2152
    %v2154 = vrcp.pop %v2132
    %v2155 = vrcp.pop %v2139
    %v2156 = vrcp.pop %v2146
    %v2157 = vrcp.pop %v2153
    %v2158 = vmul.f32 %v2119, %v2154
    %v2159 = vmul.f32 %v2121, %v2155
    %v2160 = vmul.f32 %v2123, %v2156
    %v2161 = vmul.f32 %v2125, %v2157
    %v2162 = vld [vmem:[%s3] sm:$0xff]
    %v2163 = vld [vmem:[%s3 + $0x8] sm:$0xff]
    %v2164 = vld [vmem:[%s3 + $0x10] sm:$0xff]
    %v2165 = vld [vmem:[%s3 + $0x18] sm:$0xff]
    %v2166 = vld [vmem:[%s3 + $0x20] sm:$0xff]
    %v2167 = vld [vmem:[%s3 + $0x28] sm:$0xff]
    %vm2168 = vcmask 31744
    %v2170 = vsel %vm2168, %v2162, 0
    %v2173 = vsel %vm2168, %v2163, 0
    %v2176 = vsel %vm2168, %v2164, 0
    %v2179 = vsel %vm2168, %v2165, 0
    %v2182 = vsel %vm2168, %v2166, 0
    %v2185 = vsel %vm2168, %v2167, 0
    %v2188 = vsel %vm2085, %v2158, 0
    %v2191 = vsel %vm2085, %v2159, 0
    %v2194 = vsel %vm2085, %v2160, 0
    %v2197 = vsel %vm2085, %v2161, 0
    %2199 = vmatprep.subr.mxu0 %v2191
    %2200 = vmatpush1.msra.mxu0 %v2188
    %2201 = vmatprep.subr.mxu0 0.0
    %2202 = vmatpush1.msra.mxu0 0.0
    %2203 = vmatprep.subr.mxu0 0.0
    %2204 = vmatpush1.msra.mxu0 0.0
    %2205 = vmatprep.subr.mxu0 0.0
    %2206 = vmatpush1.msra.mxu0 0.0
    %2207 = vmatprep.subr.mxu0 0.0
    %2208 = vmatpush1.msra.mxu0 0.0
    %2209 = vmatprep.subr.mxu0 0.0
    %2210 = vmatpush1.msra.mxu0 0.0
    %2211 = vmatprep.subr.mxu0 0.0
    %2212 = vmatpush1.msra.mxu0 0.0
    %2213 = vmatprep.subr.mxu0 0.0
    %2214 = vmatpush1.msra.mxu0 0.0
    %2215 = vmatprep.subr.mxu0 0.0
    %2216 = vmatpush1.msra.mxu0 0.0
    %2217 = vmatprep.subr.mxu0 0.0
    %2218 = vmatpush1.msra.mxu0 0.0
    %2219 = vmatprep.subr.mxu0 0.0
    %2220 = vmatpush1.msra.mxu0 0.0
    %2221 = vmatprep.subr.mxu0 0.0
    %2222 = vmatpush1.msra.mxu0 0.0
    %2223 = vmatprep.subr.mxu0 0.0
    %2224 = vmatpush1.msra.mxu0 0.0
    %2225 = vmatprep.subr.mxu0 0.0
    %2226 = vmatpush1.msra.mxu0 0.0
    %2227 = vmatprep.subr.mxu0 0.0
    %2228 = vmatpush1.msra.mxu0 0.0
    %2229 = vmatprep.subr.mxu0 0.0
    %2230 = vmatpush1.msra.mxu0 0.0
    %2231 = vmatprep.subr.mxu0 0.0
    %2232 = vmatpush1.msra.mxu0 0.0
    %2233 = vmatprep.subr.mxu0 0.0
    %2234 = vmatpush1.msra.mxu0 0.0
    %2235 = vmatprep.subr.mxu0 0.0
    %2236 = vmatpush1.msra.mxu0 0.0
    %2237 = vmatprep.subr.mxu0 0.0
    %2238 = vmatpush1.msra.mxu0 0.0
    %2239 = vmatprep.subr.mxu0 0.0
    %2240 = vmatpush1.msra.mxu0 0.0
    %2241 = vmatprep.subr.mxu0 0.0
    %2242 = vmatpush1.msra.mxu0 0.0
    %2243 = vmatprep.subr.mxu0 0.0
    %2244 = vmatpush1.msra.mxu0 0.0
    %2245 = vmatprep.subr.mxu0 0.0
    %2246 = vmatpush1.msra.mxu0 0.0
    %2247 = vmatprep.subr.mxu0 0.0
    %2248 = vmatpush1.msra.mxu0 0.0
    %2249 = vmatprep.subr.mxu0 0.0
    %2250 = vmatpush1.msra.mxu0 0.0
    %2251 = vmatprep.subr.mxu0 0.0
    %2252 = vmatpush1.msra.mxu0 0.0
    %2253 = vmatprep.subr.mxu0 0.0
    %2254 = vmatpush1.msra.mxu0 0.0
    %2255 = vmatprep.subr.mxu0 0.0
    %2256 = vmatpush1.msra.mxu0 0.0
    %2257 = vmatprep.subr.mxu0 0.0
    %2258 = vmatpush1.msra.mxu0 0.0
    %2259 = vmatprep.subr.mxu0 0.0
    %2260 = vmatpush1.msra.mxu0 0.0
    %2261 = vmatprep.subr.mxu0 0.0
    %2262 = vmatpush1.msra.mxu0 0.0
    %2263 = vmatprep.mubr.f32.mxu0 0.0
    %2264 = vmatmul.mubr.f32.gmra.mrb[0].mxu0 %v2170
    %v2265 = vpop.f32.mrb[0].mxu0
    %v2266 = vadd.f32 0.0, %v2265
    %v2267 = vpop.f32.mrb[0].mxu0
    %v2268 = vadd.f32 0.0, %v2267
    %2269 = vmatprep.mubr.f32.mxu0 0.0
    %2270 = vmatmul.mubr.f32.gmra.mrb[0].mxu0 %v2173
    %v2271 = vpop.f32.mrb[0].mxu0
    %v2272 = vadd.f32 0.0, %v2271
    %v2273 = vpop.f32.mrb[0].mxu0
    %v2274 = vadd.f32 0.0, %v2273
    %2275 = vmatprep.mubr.f32.mxu0 0.0
    %2276 = vmatmul.mubr.f32.gmra.mrb[0].mxu0 %v2176
    %v2277 = vpop.f32.mrb[0].mxu0
    %v2278 = vadd.f32 0.0, %v2277
    %v2279 = vpop.f32.mrb[0].mxu0
    %v2280 = vadd.f32 0.0, %v2279
    %2281 = vmatprep.mubr.f32.mxu0 0.0
    %2282 = vmatmul.mubr.f32.gmra.mrb[0].mxu0 %v2179
    %v2283 = vpop.f32.mrb[0].mxu0
    %v2284 = vadd.f32 0.0, %v2283
    %v2285 = vpop.f32.mrb[0].mxu0
    %v2286 = vadd.f32 0.0, %v2285
    %2287 = vmatprep.mubr.f32.mxu0 0.0
    %2288 = vmatmul.mubr.f32.gmra.mrb[0].mxu0 %v2182
    %v2289 = vpop.f32.mrb[0].mxu0
    %v2290 = vadd.f32 0.0, %v2289
    %v2291 = vpop.f32.mrb[0].mxu0
    %v2292 = vadd.f32 0.0, %v2291
    %2293 = vmatprep.mubr.f32.mxu0 0.0
    %2294 = vmatmul.mubr.f32.gmra.mrb[0].mxu0 %v2185
    %v2295 = vpop.f32.mrb[0].mxu0
    %v2296 = vadd.f32 0.0, %v2295
    %v2297 = vpop.f32.mrb[0].mxu0
    %v2298 = vadd.f32 0.0, %v2297
    %2299 = vdwg.mxu0
    %2300 = vmatprep.subr.mxu0 %v2197
    %2301 = vmatpush1.msra.mxu0 %v2194
    %2302 = vmatprep.subr.mxu0 0.0
    %2303 = vmatpush1.msra.mxu0 0.0
    %2304 = vmatprep.subr.mxu0 0.0
    %2305 = vmatpush1.msra.mxu0 0.0
    %2306 = vmatprep.subr.mxu0 0.0
    %2307 = vmatpush1.msra.mxu0 0.0
    %2308 = vmatprep.subr.mxu0 0.0
    %2309 = vmatpush1.msra.mxu0 0.0
    %2310 = vmatprep.subr.mxu0 0.0
    %2311 = vmatpush1.msra.mxu0 0.0
    %2312 = vmatprep.subr.mxu0 0.0
    %2313 = vmatpush1.msra.mxu0 0.0
    %2314 = vmatprep.subr.mxu0 0.0
    %2315 = vmatpush1.msra.mxu0 0.0
    %2316 = vmatprep.subr.mxu0 0.0
    %2317 = vmatpush1.msra.mxu0 0.0
    %2318 = vmatprep.subr.mxu0 0.0
    %2319 = vmatpush1.msra.mxu0 0.0
    %2320 = vmatprep.subr.mxu0 0.0
    %2321 = vmatpush1.msra.mxu0 0.0
    %2322 = vmatprep.subr.mxu0 0.0
    %2323 = vmatpush1.msra.mxu0 0.0
    %2324 = vmatprep.subr.mxu0 0.0
    %2325 = vmatpush1.msra.mxu0 0.0
    %2326 = vmatprep.subr.mxu0 0.0
    %2327 = vmatpush1.msra.mxu0 0.0
    %2328 = vmatprep.subr.mxu0 0.0
    %2329 = vmatpush1.msra.mxu0 0.0
    %2330 = vmatprep.subr.mxu0 0.0
    %2331 = vmatpush1.msra.mxu0 0.0
    %2332 = vmatprep.subr.mxu0 0.0
    %2333 = vmatpush1.msra.mxu0 0.0
    %2334 = vmatprep.subr.mxu0 0.0
    %2335 = vmatpush1.msra.mxu0 0.0
    %2336 = vmatprep.subr.mxu0 0.0
    %2337 = vmatpush1.msra.mxu0 0.0
    %2338 = vmatprep.subr.mxu0 0.0
    %2339 = vmatpush1.msra.mxu0 0.0
    %2340 = vmatprep.subr.mxu0 0.0
    %2341 = vmatpush1.msra.mxu0 0.0
    %2342 = vmatprep.subr.mxu0 0.0
    %2343 = vmatpush1.msra.mxu0 0.0
    %2344 = vmatprep.subr.mxu0 0.0
    %2345 = vmatpush1.msra.mxu0 0.0
    %2346 = vmatprep.subr.mxu0 0.0
    %2347 = vmatpush1.msra.mxu0 0.0
    %2348 = vmatprep.subr.mxu0 0.0
    %2349 = vmatpush1.msra.mxu0 0.0
    %2350 = vmatprep.subr.mxu0 0.0
    %2351 = vmatpush1.msra.mxu0 0.0
    %2352 = vmatprep.subr.mxu0 0.0
    %2353 = vmatpush1.msra.mxu0 0.0
    %2354 = vmatprep.subr.mxu0 0.0
    %2355 = vmatpush1.msra.mxu0 0.0
    %2356 = vmatprep.subr.mxu0 0.0
    %2357 = vmatpush1.msra.mxu0 0.0
    %2358 = vmatprep.subr.mxu0 0.0
    %2359 = vmatpush1.msra.mxu0 0.0
    %2360 = vmatprep.subr.mxu0 0.0
    %2361 = vmatpush1.msra.mxu0 0.0
    %2362 = vmatprep.subr.mxu0 0.0
    %2363 = vmatpush1.msra.mxu0 0.0
    %2364 = vmatprep.mubr.f32.mxu0 0.0
    %2365 = vmatmul.mubr.f32.gmra.mrb[0].mxu0 %v2170
    %v2366 = vpop.f32.mrb[0].mxu0
    %v2367 = vadd.f32 0.0, %v2366
    %v2368 = vpop.f32.mrb[0].mxu0
    %v2369 = vadd.f32 0.0, %v2368
    %2370 = vmatprep.mubr.f32.mxu0 0.0
    %2371 = vmatmul.mubr.f32.gmra.mrb[0].mxu0 %v2173
    %v2372 = vpop.f32.mrb[0].mxu0
    %v2373 = vadd.f32 0.0, %v2372
    %v2374 = vpop.f32.mrb[0].mxu0
    %v2375 = vadd.f32 0.0, %v2374
    %2376 = vmatprep.mubr.f32.mxu0 0.0
    %2377 = vmatmul.mubr.f32.gmra.mrb[0].mxu0 %v2176
    %v2378 = vpop.f32.mrb[0].mxu0
    %v2379 = vadd.f32 0.0, %v2378
    %v2380 = vpop.f32.mrb[0].mxu0
    %v2381 = vadd.f32 0.0, %v2380
    %2382 = vmatprep.mubr.f32.mxu0 0.0
    %2383 = vmatmul.mubr.f32.gmra.mrb[0].mxu0 %v2179
    %v2384 = vpop.f32.mrb[0].mxu0
    %v2385 = vadd.f32 0.0, %v2384
    %v2386 = vpop.f32.mrb[0].mxu0
    %v2387 = vadd.f32 0.0, %v2386
    %2388 = vmatprep.mubr.f32.mxu0 0.0
    %2389 = vmatmul.mubr.f32.gmra.mrb[0].mxu0 %v2182
    %v2390 = vpop.f32.mrb[0].mxu0
    %v2391 = vadd.f32 0.0, %v2390
    %v2392 = vpop.f32.mrb[0].mxu0
    %v2393 = vadd.f32 0.0, %v2392
    %2394 = vmatprep.mubr.f32.mxu0 0.0
    %2395 = vmatmul.mubr.f32.gmra.mrb[0].mxu0 %v2185
    %v2396 = vpop.f32.mrb[0].mxu0
    %v2397 = vadd.f32 0.0, %v2396
    %v2398 = vpop.f32.mrb[0].mxu0
    %v2399 = vadd.f32 0.0, %v2398
    %2400 = vdwg.mxu0
    %v2401 = vld [vmem:[#allocation2 + $0x200] sm:$0xff]
    %v2402 = vld [vmem:[#allocation2 + $0x208] sm:$0xff]
    %v2403 = vld [vmem:[#allocation2 + $0x210] sm:$0xff]
    %v2404 = vld [vmem:[#allocation2 + $0x218] sm:$0xff]
    %v2405 = vld [vmem:[#allocation2 + $0x220] sm:$0xff]
    %v2406 = vld [vmem:[#allocation2 + $0x228] sm:$0xff]
    %v2407 = vld [vmem:[#allocation2 + $0x230] sm:$0xff]
    %v2408 = vld [vmem:[#allocation2 + $0x238] sm:$0xff]
    %v2409 = vld [vmem:[#allocation2 + $0x240] sm:$0xff]
    %v2410 = vld [vmem:[#allocation2 + $0x248] sm:$0xff]
    %v2411 = vld [vmem:[#allocation2 + $0x250] sm:$0xff]
    %v2412 = vld [vmem:[#allocation2 + $0x258] sm:$0xff]
    %v2413 = vld [vmem:[#allocation2 + $0x260] sm:$0xff]
    %v2414 = vld [vmem:[#allocation2 + $0x268] sm:$0xff]
    %v2415 = vld [vmem:[#allocation2 + $0x270] sm:$0xff]
    %v2416 = vld [vmem:[#allocation2 + $0x278] sm:$0xff]
    %v2417 = vlaneseq
    %v2418 = vshrl.u32 %v2417, 7
    %v2419 = vsub.s32 0, %v2418
    %v2420 = vrot.slane %v2158, %v2419
    %v2421 = vlaneseq
    %v2422 = vshrl.u32 %v2421, 7
    %v2423 = vsub.s32 0, %v2422
    %v2424 = vrot.slane %v2159, %v2423
    %v2425 = vlaneseq
    %v2426 = vshrl.u32 %v2425, 7
    %v2427 = vsub.s32 0, %v2426
    %v2428 = vrot.slane %v2160, %v2427
    %v2429 = vlaneseq
    %v2430 = vshrl.u32 %v2429, 7
    %v2431 = vsub.s32 0, %v2430
    %v2432 = vrot.slane %v2161, %v2431
    %v2433 = vmul.f32 %v2420, %v2401
    %v2434 = vmul.f32 %v2424, %v2402
    %v2435 = vmul.f32 %v2428, %v2403
    %v2436 = vmul.f32 %v2432, %v2404
    %v2437 = vmul.f32 %v2420, %v2405
    %v2438 = vmul.f32 %v2424, %v2406
    %v2439 = vmul.f32 %v2428, %v2407
    %v2440 = vmul.f32 %v2432, %v2408
    %v2441 = vmul.f32 %v2420, %v2409
    %v2442 = vmul.f32 %v2424, %v2410
    %v2443 = vmul.f32 %v2428, %v2411
    %v2444 = vmul.f32 %v2432, %v2412
    %v2445 = vmul.f32 %v2420, %v2413
    %v2446 = vmul.f32 %v2424, %v2414
    %v2447 = vmul.f32 %v2428, %v2415
    %v2448 = vmul.f32 %v2432, %v2416
    %v2449 = vadd.f32 %v2266, %v2433
    %v2450 = vadd.f32 %v2268, %v2434
    %v2451 = vadd.f32 %v2367, %v2435
    %v2452 = vadd.f32 %v2369, %v2436
    %v2453 = vadd.f32 %v2272, %v2437
    %v2454 = vadd.f32 %v2274, %v2438
    %v2455 = vadd.f32 %v2373, %v2439
    %v2456 = vadd.f32 %v2375, %v2440
    %v2457 = vadd.f32 %v2278, %v2441
    %v2458 = vadd.f32 %v2280, %v2442
    %v2459 = vadd.f32 %v2379, %v2443
    %v2460 = vadd.f32 %v2381, %v2444
    %v2461 = vadd.f32 %v2284, %v2445
    %v2462 = vadd.f32 %v2286, %v2446
    %v2463 = vadd.f32 %v2385, %v2447
    %v2464 = vadd.f32 %v2387, %v2448
    %v2465 = vld [vmem:[#allocation2 + $0x280] sm:$0xff]
    %v2466 = vld [vmem:[#allocation2 + $0x288] sm:$0xff]
    %v2467 = vld [vmem:[#allocation2 + $0x290] sm:$0xff]
    %v2468 = vld [vmem:[#allocation2 + $0x298] sm:$0xff]
    %v2469 = vld [vmem:[#allocation2 + $0x2a0] sm:$0xff]
    %v2470 = vld [vmem:[#allocation2 + $0x2a8] sm:$0xff]
    %v2471 = vld [vmem:[#allocation2 + $0x2b0] sm:$0xff]
    %v2472 = vld [vmem:[#allocation2 + $0x2b8] sm:$0xff]
    %v2473 = vld [vmem:[#allocation2 + $0x2c0] sm:$0xff]
    %v2474 = vld [vmem:[#allocation2 + $0x2c8] sm:$0xff]
    %v2475 = vld [vmem:[#allocation2 + $0x2d0] sm:$0xff]
    %v2476 = vld [vmem:[#allocation2 + $0x2d8] sm:$0xff]
    %v2477 = vld [vmem:[#allocation2 + $0x2e0] sm:$0xff]
    %v2478 = vld [vmem:[#allocation2 + $0x2e8] sm:$0xff]
    %v2479 = vld [vmem:[#allocation2 + $0x2f0] sm:$0xff]
    %v2480 = vld [vmem:[#allocation2 + $0x2f8] sm:$0xff]
    %v2481 = vlaneseq
    %v2482 = vshrl.u32 %v2481, 7
    %v2483 = vsub.s32 1, %v2482
    %v2484 = vrot.slane %v2158, %v2483
    %v2485 = vlaneseq
    %v2486 = vshrl.u32 %v2485, 7
    %v2487 = vsub.s32 1, %v2486
    %v2488 = vrot.slane %v2159, %v2487
    %v2489 = vlaneseq
    %v2490 = vshrl.u32 %v2489, 7
    %v2491 = vsub.s32 1, %v2490
    %v2492 = vrot.slane %v2160, %v2491
    %v2493 = vlaneseq
    %v2494 = vshrl.u32 %v2493, 7
    %v2495 = vsub.s32 1, %v2494
    %v2496 = vrot.slane %v2161, %v2495
    %v2497 = vmul.f32 %v2484, %v2465
    %v2498 = vmul.f32 %v2488, %v2466
    %v2499 = vmul.f32 %v2492, %v2467
    %v2500 = vmul.f32 %v2496, %v2468
    %v2501 = vmul.f32 %v2484, %v2469
    %v2502 = vmul.f32 %v2488, %v2470
    %v2503 = vmul.f32 %v2492, %v2471
    %v2504 = vmul.f32 %v2496, %v2472
    %v2505 = vmul.f32 %v2484, %v2473
    %v2506 = vmul.f32 %v2488, %v2474
    %v2507 = vmul.f32 %v2492, %v2475
    %v2508 = vmul.f32 %v2496, %v2476
    %v2509 = vmul.f32 %v2484, %v2477
    %v2510 = vmul.f32 %v2488, %v2478
    %v2511 = vmul.f32 %v2492, %v2479
    %v2512 = vmul.f32 %v2496, %v2480
    %v2513 = vadd.f32 %v2449, %v2497
    %v2514 = vadd.f32 %v2450, %v2498
    %v2515 = vadd.f32 %v2451, %v2499
    %v2516 = vadd.f32 %v2452, %v2500
    %v2517 = vadd.f32 %v2453, %v2501
    %v2518 = vadd.f32 %v2454, %v2502
    %v2519 = vadd.f32 %v2455, %v2503
    %v2520 = vadd.f32 %v2456, %v2504
    %v2521 = vadd.f32 %v2457, %v2505
    %v2522 = vadd.f32 %v2458, %v2506
    %v2523 = vadd.f32 %v2459, %v2507
    %v2524 = vadd.f32 %v2460, %v2508
    %v2525 = vadd.f32 %v2461, %v2509
    %v2526 = vadd.f32 %v2462, %v2510
    %v2527 = vadd.f32 %v2463, %v2511
    %v2528 = vadd.f32 %v2464, %v2512
    %v2529 = vld [vmem:[#allocation2 + $0x300] sm:$0xff]
    %v2530 = vld [vmem:[#allocation2 + $0x308] sm:$0xff]
    %v2531 = vld [vmem:[#allocation2 + $0x310] sm:$0xff]
    %v2532 = vld [vmem:[#allocation2 + $0x318] sm:$0xff]
    %v2533 = vld [vmem:[#allocation2 + $0x320] sm:$0xff]
    %v2534 = vld [vmem:[#allocation2 + $0x328] sm:$0xff]
    %v2535 = vld [vmem:[#allocation2 + $0x330] sm:$0xff]
    %v2536 = vld [vmem:[#allocation2 + $0x338] sm:$0xff]
    %v2537 = vld [vmem:[#allocation2 + $0x340] sm:$0xff]
    %v2538 = vld [vmem:[#allocation2 + $0x348] sm:$0xff]
    %v2539 = vld [vmem:[#allocation2 + $0x350] sm:$0xff]
    %v2540 = vld [vmem:[#allocation2 + $0x358] sm:$0xff]
    %v2541 = vld [vmem:[#allocation2 + $0x360] sm:$0xff]
    %v2542 = vld [vmem:[#allocation2 + $0x368] sm:$0xff]
    %v2543 = vld [vmem:[#allocation2 + $0x370] sm:$0xff]
    %v2544 = vld [vmem:[#allocation2 + $0x378] sm:$0xff]
    %v2545 = vlaneseq
    %v2546 = vshrl.u32 %v2545, 7
    %v2547 = vsub.s32 2, %v2546
    %v2548 = vrot.slane %v2158, %v2547
    %v2549 = vlaneseq
    %v2550 = vshrl.u32 %v2549, 7
    %v2551 = vsub.s32 2, %v2550
    %v2552 = vrot.slane %v2159, %v2551
    %v2553 = vlaneseq
    %v2554 = vshrl.u32 %v2553, 7
    %v2555 = vsub.s32 2, %v2554
    %v2556 = vrot.slane %v2160, %v2555
    %v2557 = vlaneseq
    %v2558 = vshrl.u32 %v2557, 7
    %v2559 = vsub.s32 2, %v2558
    %v2560 = vrot.slane %v2161, %v2559
    %v2561 = vmul.f32 %v2548, %v2529
    %v2562 = vmul.f32 %v2552, %v2530
    %v2563 = vmul.f32 %v2556, %v2531
    %v2564 = vmul.f32 %v2560, %v2532
    %v2565 = vmul.f32 %v2548, %v2533
    %v2566 = vmul.f32 %v2552, %v2534
    %v2567 = vmul.f32 %v2556, %v2535
    %v2568 = vmul.f32 %v2560, %v2536
    %v2569 = vmul.f32 %v2548, %v2537
    %v2570 = vmul.f32 %v2552, %v2538
    %v2571 = vmul.f32 %v2556, %v2539
    %v2572 = vmul.f32 %v2560, %v2540
    %v2573 = vmul.f32 %v2548, %v2541
    %v2574 = vmul.f32 %v2552, %v2542
    %v2575 = vmul.f32 %v2556, %v2543
    %v2576 = vmul.f32 %v2560, %v2544
    %v2577 = vadd.f32 %v2513, %v2561
    %v2578 = vadd.f32 %v2514, %v2562
    %v2579 = vadd.f32 %v2515, %v2563
    %v2580 = vadd.f32 %v2516, %v2564
    %v2581 = vadd.f32 %v2517, %v2565
    %v2582 = vadd.f32 %v2518, %v2566
    %v2583 = vadd.f32 %v2519, %v2567
    %v2584 = vadd.f32 %v2520, %v2568
    %v2585 = vadd.f32 %v2521, %v2569
    %v2586 = vadd.f32 %v2522, %v2570
    %v2587 = vadd.f32 %v2523, %v2571
    %v2588 = vadd.f32 %v2524, %v2572
    %v2589 = vadd.f32 %v2525, %v2573
    %v2590 = vadd.f32 %v2526, %v2574
    %v2591 = vadd.f32 %v2527, %v2575
    %v2592 = vadd.f32 %v2528, %v2576
    %v2593 = vld [vmem:[#allocation2 + $0x380] sm:$0xff]
    %v2594 = vld [vmem:[#allocation2 + $0x388] sm:$0xff]
    %v2595 = vld [vmem:[#allocation2 + $0x390] sm:$0xff]
    %v2596 = vld [vmem:[#allocation2 + $0x398] sm:$0xff]
    %v2597 = vld [vmem:[#allocation2 + $0x3a0] sm:$0xff]
    %v2598 = vld [vmem:[#allocation2 + $0x3a8] sm:$0xff]
    %v2599 = vld [vmem:[#allocation2 + $0x3b0] sm:$0xff]
    %v2600 = vld [vmem:[#allocation2 + $0x3b8] sm:$0xff]
    %v2601 = vld [vmem:[#allocation2 + $0x3c0] sm:$0xff]
    %v2602 = vld [vmem:[#allocation2 + $0x3c8] sm:$0xff]
    %v2603 = vld [vmem:[#allocation2 + $0x3d0] sm:$0xff]
    %v2604 = vld [vmem:[#allocation2 + $0x3d8] sm:$0xff]
    %v2605 = vld [vmem:[#allocation2 + $0x3e0] sm:$0xff]
    %v2606 = vld [vmem:[#allocation2 + $0x3e8] sm:$0xff]
    %v2607 = vld [vmem:[#allocation2 + $0x3f0] sm:$0xff]
    %v2608 = vld [vmem:[#allocation2 + $0x3f8] sm:$0xff]
    %v2609 = vlaneseq
    %v2610 = vshrl.u32 %v2609, 7
    %v2611 = vsub.s32 3, %v2610
    %v2612 = vrot.slane %v2158, %v2611
    %v2613 = vlaneseq
    %v2614 = vshrl.u32 %v2613, 7
    %v2615 = vsub.s32 3, %v2614
    %v2616 = vrot.slane %v2159, %v2615
    %v2617 = vlaneseq
    %v2618 = vshrl.u32 %v2617, 7
    %v2619 = vsub.s32 3, %v2618
    %v2620 = vrot.slane %v2160, %v2619
    %v2621 = vlaneseq
    %v2622 = vshrl.u32 %v2621, 7
    %v2623 = vsub.s32 3, %v2622
    %v2624 = vrot.slane %v2161, %v2623
    %v2625 = vmul.f32 %v2612, %v2593
    %v2626 = vmul.f32 %v2616, %v2594
    %v2627 = vmul.f32 %v2620, %v2595
    %v2628 = vmul.f32 %v2624, %v2596
    %v2629 = vmul.f32 %v2612, %v2597
    %v2630 = vmul.f32 %v2616, %v2598
    %v2631 = vmul.f32 %v2620, %v2599
    %v2632 = vmul.f32 %v2624, %v2600
    %v2633 = vmul.f32 %v2612, %v2601
    %v2634 = vmul.f32 %v2616, %v2602
    %v2635 = vmul.f32 %v2620, %v2603
    %v2636 = vmul.f32 %v2624, %v2604
    %v2637 = vmul.f32 %v2612, %v2605
    %v2638 = vmul.f32 %v2616, %v2606
    %v2639 = vmul.f32 %v2620, %v2607
    %v2640 = vmul.f32 %v2624, %v2608
    %v2641 = vadd.f32 %v2577, %v2625
    %v2642 = vadd.f32 %v2578, %v2626
    %v2643 = vadd.f32 %v2579, %v2627
    %v2644 = vadd.f32 %v2580, %v2628
    %v2645 = vadd.f32 %v2581, %v2629
    %v2646 = vadd.f32 %v2582, %v2630
    %v2647 = vadd.f32 %v2583, %v2631
    %v2648 = vadd.f32 %v2584, %v2632
    %v2649 = vadd.f32 %v2585, %v2633
    %v2650 = vadd.f32 %v2586, %v2634
    %v2651 = vadd.f32 %v2587, %v2635
    %v2652 = vadd.f32 %v2588, %v2636
    %v2653 = vadd.f32 %v2589, %v2637
    %v2654 = vadd.f32 %v2590, %v2638
    %v2655 = vadd.f32 %v2591, %v2639
    %v2656 = vadd.f32 %v2592, %v2640
    %v2657 = vld [vmem:[%s5] sm:$0xff]
    %v2658 = vld [vmem:[%s5 + $0x8] sm:$0xff]
    %v2659 = vld [vmem:[%s5 + $0x10] sm:$0xff]
    %v2660 = vld [vmem:[%s5 + $0x18] sm:$0xff]
    %v2661 = vadd.f32 %v2641, %v2642
    %v2662 = vadd.f32 %v2661, %v2643
    %v2663 = vadd.f32 %v2662, %v2644
    %2664 = vadd.xlane.f32.xlu0 %v2663
    %v2665 = vpop.xlane.xlu0 %2664
    %v2666 = vadd.f32 %v2645, %v2646
    %v2667 = vadd.f32 %v2666, %v2647
    %v2668 = vadd.f32 %v2667, %v2648
    %2669 = vadd.xlane.f32.xlu0 %v2668
    %v2670 = vpop.xlane.xlu0 %2669
    %v2671 = vadd.f32 %v2649, %v2650
    %v2672 = vadd.f32 %v2671, %v2651
    %v2673 = vadd.f32 %v2672, %v2652
    %2674 = vadd.xlane.f32.xlu0 %v2673
    %v2675 = vpop.xlane.xlu0 %2674
    %v2676 = vadd.f32 %v2653, %v2654
    %v2677 = vadd.f32 %v2676, %v2655
    %v2678 = vadd.f32 %v2677, %v2656
    %2679 = vadd.xlane.f32.xlu0 %v2678
    %v2680 = vpop.xlane.xlu0 %2679
    %v2681 = vmul.f32 %v2641, %v2641
    %v2682 = vmul.f32 %v2642, %v2642
    %v2683 = vmul.f32 %v2643, %v2643
    %v2684 = vmul.f32 %v2644, %v2644
    %v2685 = vmul.f32 %v2645, %v2645
    %v2686 = vmul.f32 %v2646, %v2646
    %v2687 = vmul.f32 %v2647, %v2647
    %v2688 = vmul.f32 %v2648, %v2648
    %v2689 = vmul.f32 %v2649, %v2649
    %v2690 = vmul.f32 %v2650, %v2650
    %v2691 = vmul.f32 %v2651, %v2651
    %v2692 = vmul.f32 %v2652, %v2652
    %v2693 = vmul.f32 %v2653, %v2653
    %v2694 = vmul.f32 %v2654, %v2654
    %v2695 = vmul.f32 %v2655, %v2655
    %v2696 = vmul.f32 %v2656, %v2656
    %v2697 = vadd.f32 %v2681, %v2682
    %v2698 = vadd.f32 %v2697, %v2683
    %v2699 = vadd.f32 %v2698, %v2684
    %2700 = vadd.xlane.f32.xlu0 %v2699
    %v2701 = vpop.xlane.xlu0 %2700
    %v2702 = vadd.f32 %v2685, %v2686
    %v2703 = vadd.f32 %v2702, %v2687
    %v2704 = vadd.f32 %v2703, %v2688
    %2705 = vadd.xlane.f32.xlu0 %v2704
    %v2706 = vpop.xlane.xlu0 %2705
    %v2707 = vadd.f32 %v2689, %v2690
    %v2708 = vadd.f32 %v2707, %v2691
    %v2709 = vadd.f32 %v2708, %v2692
    %2710 = vadd.xlane.f32.xlu0 %v2709
    %v2711 = vpop.xlane.xlu0 %2710
    %v2712 = vadd.f32 %v2693, %v2694
    %v2713 = vadd.f32 %v2712, %v2695
    %v2714 = vadd.f32 %v2713, %v2696
    %2715 = vadd.xlane.f32.xlu0 %v2714
    %v2716 = vpop.xlane.xlu0 %2715
    %v2717 = vmul.f32 %v2665, 0.001953125
    %v2718 = vmul.f32 %v2670, 0.001953125
    %v2719 = vmul.f32 %v2675, 0.001953125
    %v2720 = vmul.f32 %v2680, 0.001953125
    %v2721 = vmul.f32 %v2701, 0.001953125
    %v2722 = vmul.f32 %v2706, 0.001953125
    %v2723 = vmul.f32 %v2711, 0.001953125
    %v2724 = vmul.f32 %v2716, 0.001953125
    %v2725 = vmul.f32 %v2717, %v2717
    %v2726 = vmul.f32 %v2718, %v2718
    %v2727 = vmul.f32 %v2719, %v2719
    %v2728 = vmul.f32 %v2720, %v2720
    %v2729 = vsub.f32 %v2721, %v2725
    %v2730 = vsub.f32 %v2722, %v2726
    %v2731 = vsub.f32 %v2723, %v2727
    %v2732 = vsub.f32 %v2724, %v2728
    %v2733 = vadd.f32 %v2729, 1e-05
    %v2734 = vadd.f32 %v2730, 1e-05
    %v2735 = vadd.f32 %v2731, 1e-05
    %v2736 = vadd.f32 %v2732, 1e-05
    %v2737 = vrsqrt.pop %v2733
    %v2738 = vrsqrt.pop %v2734
    %v2739 = vrsqrt.pop %v2735
    %v2740 = vrsqrt.pop %v2736
    %v2741 = vmul.f32 %v2657, %v2737
    %v2742 = vmul.f32 %v2658, %v2738
    %v2743 = vmul.f32 %v2659, %v2739
    %v2744 = vmul.f32 %v2660, %v2740
    %v2745 = vmul.f32 %v2717, %v2741
    %v2746 = vmul.f32 %v2718, %v2742
    %v2747 = vmul.f32 %v2719, %v2743
    %v2748 = vmul.f32 %v2720, %v2744
    %2753 = vrot.lane.b32.xlu0 %v2745, 1
    %v2754 = vpop.permute.xlu0 %2753
    %2755 = vrot.lane.b32.xlu0 %v2746, 1
    %v2756 = vpop.permute.xlu0 %2755
    %2757 = vrot.lane.b32.xlu0 %v2747, 1
    %v2758 = vpop.permute.xlu0 %2757
    %2759 = vrot.lane.b32.xlu0 %v2748, 1
    %v2760 = vpop.permute.xlu0 %2759
    %v2765 = vsub.f32 %v2657, %v2754
    %v2766 = vsub.f32 %v2658, %v2756
    %v2767 = vsub.f32 %v2659, %v2758
    %v2768 = vsub.f32 %v2660, %v2760
    %2770 = vset.pattern.permute.xlu0 3
    %2771 = vperm.xlu0 %2770, %v2741
    %v2772 = vpop.permute.xlu0 %2771
    %2775 = vset.pattern.permute.xlu0 3
    %2776 = vperm.xlu0 %2775, %v2742
    %v2777 = vpop.permute.xlu0 %2776
    %2780 = vset.pattern.permute.xlu0 3
    %2781 = vperm.xlu0 %2780, %v2743
    %v2782 = vpop.permute.xlu0 %2781
    %2785 = vset.pattern.permute.xlu0 3
    %2786 = vperm.xlu0 %2785, %v2744
    %v2787 = vpop.permute.xlu0 %2786
    %v2789 = vmul.f32 %v2641, %v2772
    %v2790 = vmul.f32 %v2642, %v2772
    %v2791 = vmul.f32 %v2643, %v2772
    %v2792 = vmul.f32 %v2644, %v2772
    %v2793 = vmul.f32 %v2645, %v2777
    %v2794 = vmul.f32 %v2646, %v2777
    %v2795 = vmul.f32 %v2647, %v2777
    %v2796 = vmul.f32 %v2648, %v2777
    %v2797 = vmul.f32 %v2649, %v2782
    %v2798 = vmul.f32 %v2650, %v2782
    %v2799 = vmul.f32 %v2651, %v2782
    %v2800 = vmul.f32 %v2652, %v2782
    %v2801 = vmul.f32 %v2653, %v2787
    %v2802 = vmul.f32 %v2654, %v2787
    %v2803 = vmul.f32 %v2655, %v2787
    %v2804 = vmul.f32 %v2656, %v2787
    %2806 = vset.pattern.permute.xlu0 4
    %2807 = vperm.xlu0 %2806, %v2765
    %v2808 = vpop.permute.xlu0 %2807
    %2811 = vset.pattern.permute.xlu0 4
    %2812 = vperm.xlu0 %2811, %v2766
    %v2813 = vpop.permute.xlu0 %2812
    %2816 = vset.pattern.permute.xlu0 4
    %2817 = vperm.xlu0 %2816, %v2767
    %v2818 = vpop.permute.xlu0 %2817
    %2821 = vset.pattern.permute.xlu0 4
    %2822 = vperm.xlu0 %2821, %v2768
    %v2823 = vpop.permute.xlu0 %2822
    %v2825 = vadd.f32 %v2789, %v2808
    %v2826 = vadd.f32 %v2790, %v2808
    %v2827 = vadd.f32 %v2791, %v2808
    %v2828 = vadd.f32 %v2792, %v2808
    %v2829 = vadd.f32 %v2793, %v2813
    %v2830 = vadd.f32 %v2794, %v2813
    %v2831 = vadd.f32 %v2795, %v2813
    %v2832 = vadd.f32 %v2796, %v2813
    %v2833 = vadd.f32 %v2797, %v2818
    %v2834 = vadd.f32 %v2798, %v2818
    %v2835 = vadd.f32 %v2799, %v2818
    %v2836 = vadd.f32 %v2800, %v2818
    %v2837 = vadd.f32 %v2801, %v2823
    %v2838 = vadd.f32 %v2802, %v2823
    %v2839 = vadd.f32 %v2803, %v2823
    %v2840 = vadd.f32 %v2804, %v2823
    %v2841 = vmax.f32 %v2825, 0.0
    %v2842 = vmax.f32 %v2826, 0.0
    %v2843 = vmax.f32 %v2827, 0.0
    %v2844 = vmax.f32 %v2828, 0.0
    %v2845 = vmax.f32 %v2829, 0.0
    %v2846 = vmax.f32 %v2830, 0.0
    %v2847 = vmax.f32 %v2831, 0.0
    %v2848 = vmax.f32 %v2832, 0.0
    %v2849 = vmax.f32 %v2833, 0.0
    %v2850 = vmax.f32 %v2834, 0.0
    %v2851 = vmax.f32 %v2835, 0.0
    %v2852 = vmax.f32 %v2836, 0.0
    %v2853 = vmax.f32 %v2837, 0.0
    %v2854 = vmax.f32 %v2838, 0.0
    %v2855 = vmax.f32 %v2839, 0.0
    %v2856 = vmax.f32 %v2840, 0.0
    %v2857 = vld [vmem:[%s4] sm:$0xff]
    %v2858 = vld [vmem:[%s4 + $0x8] sm:$0xff]
    %v2859 = vld [vmem:[%s4 + $0x10] sm:$0xff]
    %v2860 = vld [vmem:[%s4 + $0x18] sm:$0xff]
    %v2861 = vld [vmem:[%s4 + $0x20] sm:$0xff]
    %v2862 = vld [vmem:[%s4 + $0x28] sm:$0xff]
    %v2863 = vld [vmem:[%s4 + $0x30] sm:$0xff]
    %v2864 = vld [vmem:[%s4 + $0x38] sm:$0xff]
    %vm2865 = vcmask 261120
    %v2867 = vsel %vm2865, %v2857, 0
    %v2870 = vsel %vm2865, %v2858, 0
    %v2873 = vsel %vm2865, %v2859, 0
    %v2876 = vsel %vm2865, %v2860, 0
    %v2879 = vsel %vm2865, %v2861, 0
    %v2882 = vsel %vm2865, %v2862, 0
    %v2885 = vsel %vm2865, %v2863, 0
    %v2888 = vsel %vm2865, %v2864, 0
    %2890 = vmatprep.subr.mxu0 %v2842
    %2891 = vmatpush1.msra.mxu0 %v2841
    %2892 = vmatprep.subr.mxu0 %v2846
    %2893 = vmatpush1.msra.mxu0 %v2845
    %2894 = vmatprep.subr.mxu0 %v2850
    %2895 = vmatpush1.msra.mxu0 %v2849
    %2896 = vmatprep.subr.mxu0 %v2854
    %2897 = vmatpush1.msra.mxu0 %v2853
    %2898 = vmatprep.subr.mxu0 0.0
    %2899 = vmatpush1.msra.mxu0 0.0
    %2900 = vmatprep.subr.mxu0 0.0
    %2901 = vmatpush1.msra.mxu0 0.0
    %2902 = vmatprep.subr.mxu0 0.0
    %2903 = vmatpush1.msra.mxu0 0.0
    %2904 = vmatprep.subr.mxu0 0.0
    %2905 = vmatpush1.msra.mxu0 0.0
    %2906 = vmatprep.subr.mxu0 0.0
    %2907 = vmatpush1.msra.mxu0 0.0
    %2908 = vmatprep.subr.mxu0 0.0
    %2909 = vmatpush1.msra.mxu0 0.0
    %2910 = vmatprep.subr.mxu0 0.0
    %2911 = vmatpush1.msra.mxu0 0.0
    %2912 = vmatprep.subr.mxu0 0.0
    %2913 = vmatpush1.msra.mxu0 0.0
    %2914 = vmatprep.subr.mxu0 0.0
    %2915 = vmatpush1.msra.mxu0 0.0
    %2916 = vmatprep.subr.mxu0 0.0
    %2917 = vmatpush1.msra.mxu0 0.0
    %2918 = vmatprep.subr.mxu0 0.0
    %2919 = vmatpush1.msra.mxu0 0.0
    %2920 = vmatprep.subr.mxu0 0.0
    %2921 = vmatpush1.msra.mxu0 0.0
    %2922 = vmatprep.subr.mxu0 0.0
    %2923 = vmatpush1.msra.mxu0 0.0
    %2924 = vmatprep.subr.mxu0 0.0
    %2925 = vmatpush1.msra.mxu0 0.0
    %2926 = vmatprep.subr.mxu0 0.0
    %2927 = vmatpush1.msra.mxu0 0.0
    %2928 = vmatprep.subr.mxu0 0.0
    %2929 = vmatpush1.msra.mxu0 0.0
    %2930 = vmatprep.subr.mxu0 0.0
    %2931 = vmatpush1.msra.mxu0 0.0
    %2932 = vmatprep.subr.mxu0 0.0
    %2933 = vmatpush1.msra.mxu0 0.0
    %2934 = vmatprep.subr.mxu0 0.0
    %2935 = vmatpush1.msra.mxu0 0.0
    %2936 = vmatprep.subr.mxu0 0.0
    %2937 = vmatpush1.msra.mxu0 0.0
    %2938 = vmatprep.subr.mxu0 0.0
    %2939 = vmatpush1.msra.mxu0 0.0
    %2940 = vmatprep.subr.mxu0 0.0
    %2941 = vmatpush1.msra.mxu0 0.0
    %2942 = vmatprep.subr.mxu0 0.0
    %2943 = vmatpush1.msra.mxu0 0.0
    %2944 = vmatprep.subr.mxu0 0.0
    %2945 = vmatpush1.msra.mxu0 0.0
    %2946 = vmatprep.subr.mxu0 0.0
    %2947 = vmatpush1.msra.mxu0 0.0
    %2948 = vmatprep.subr.mxu0 0.0
    %2949 = vmatpush1.msra.mxu0 0.0
    %2950 = vmatprep.subr.mxu0 0.0
    %2951 = vmatpush1.msra.mxu0 0.0
    %2952 = vmatprep.subr.mxu0 0.0
    %2953 = vmatpush1.msra.mxu0 0.0
    %2954 = vmatprep.mubr.f32.mxu0 0.0
    %2955 = vmatmul.mubr.f32.gmra.mrb[0].mxu0 %v2867
    %v2956 = vpop.f32.mrb[0].mxu0
    %v2957 = vadd.f32 0.0, %v2956
    %v2958 = vpop.f32.mrb[0].mxu0
    %v2959 = vadd.f32 0.0, %v2958
    %2960 = vmatprep.mubr.f32.mxu0 0.0
    %2961 = vmatmul.mubr.f32.gmra.mrb[0].mxu0 %v2870
    %v2962 = vpop.f32.mrb[0].mxu0
    %v2963 = vadd.f32 0.0, %v2962
    %v2964 = vpop.f32.mrb[0].mxu0
    %v2965 = vadd.f32 0.0, %v2964
    %2966 = vmatprep.mubr.f32.mxu0 0.0
    %2967 = vmatmul.mubr.f32.gmra.mrb[0].mxu0 %v2873
    %v2968 = vpop.f32.mrb[0].mxu0
    %v2969 = vadd.f32 0.0, %v2968
    %v2970 = vpop.f32.mrb[0].mxu0
    %v2971 = vadd.f32 0.0, %v2970
    %2972 = vmatprep.mubr.f32.mxu0 0.0
    %2973 = vmatmul.mubr.f32.gmra.mrb[0].mxu0 %v2876
    %v2974 = vpop.f32.mrb[0].mxu0
    %v2975 = vadd.f32 0.0, %v2974
    %v2976 = vpop.f32.mrb[0].mxu0
    %v2977 = vadd.f32 0.0, %v2976
    %2978 = vmatprep.mubr.f32.mxu0 0.0
    %2979 = vmatmul.mubr.f32.gmra.mrb[0].mxu0 %v2879
    %v2980 = vpop.f32.mrb[0].mxu0
    %v2981 = vadd.f32 0.0, %v2980
    %v2982 = vpop.f32.mrb[0].mxu0
    %v2983 = vadd.f32 0.0, %v2982
    %2984 = vmatprep.mubr.f32.mxu0 0.0
    %2985 = vmatmul.mubr.f32.gmra.mrb[0].mxu0 %v2882
    %v2986 = vpop.f32.mrb[0].mxu0
    %v2987 = vadd.f32 0.0, %v2986
    %v2988 = vpop.f32.mrb[0].mxu0
    %v2989 = vadd.f32 0.0, %v2988
    %2990 = vmatprep.mubr.f32.mxu0 0.0
    %2991 = vmatmul.mubr.f32.gmra.mrb[0].mxu0 %v2885
    %v2992 = vpop.f32.mrb[0].mxu0
    %v2993 = vadd.f32 0.0, %v2992
    %v2994 = vpop.f32.mrb[0].mxu0
    %v2995 = vadd.f32 0.0, %v2994
    %2996 = vmatprep.mubr.f32.mxu0 0.0
    %2997 = vmatmul.mubr.f32.gmra.mrb[0].mxu0 %v2888
    %v2998 = vpop.f32.mrb[0].mxu0
    %v2999 = vadd.f32 0.0, %v2998
    %v3000 = vpop.f32.mrb[0].mxu0
    %v3001 = vadd.f32 0.0, %v3000
    %3002 = vdwg.mxu0
    %3003 = vmatprep.subr.mxu0 %v2844
    %3004 = vmatpush1.msra.mxu0 %v2843
    %3005 = vmatprep.subr.mxu0 %v2848
    %3006 = vmatpush1.msra.mxu0 %v2847
    %3007 = vmatprep.subr.mxu0 %v2852
    %3008 = vmatpush1.msra.mxu0 %v2851
    %3009 = vmatprep.subr.mxu0 %v2856
    %3010 = vmatpush1.msra.mxu0 %v2855
    %3011 = vmatprep.subr.mxu0 0.0
    %3012 = vmatpush1.msra.mxu0 0.0
    %3013 = vmatprep.subr.mxu0 0.0
    %3014 = vmatpush1.msra.mxu0 0.0
    %3015 = vmatprep.subr.mxu0 0.0
    %3016 = vmatpush1.msra.mxu0 0.0
    %3017 = vmatprep.subr.mxu0 0.0
    %3018 = vmatpush1.msra.mxu0 0.0
    %3019 = vmatprep.subr.mxu0 0.0
    %3020 = vmatpush1.msra.mxu0 0.0
    %3021 = vmatprep.subr.mxu0 0.0
    %3022 = vmatpush1.msra.mxu0 0.0
    %3023 = vmatprep.subr.mxu0 0.0
    %3024 = vmatpush1.msra.mxu0 0.0
    %3025 = vmatprep.subr.mxu0 0.0
    %3026 = vmatpush1.msra.mxu0 0.0
    %3027 = vmatprep.subr.mxu0 0.0
    %3028 = vmatpush1.msra.mxu0 0.0
    %3029 = vmatprep.subr.mxu0 0.0
    %3030 = vmatpush1.msra.mxu0 0.0
    %3031 = vmatprep.subr.mxu0 0.0
    %3032 = vmatpush1.msra.mxu0 0.0
    %3033 = vmatprep.subr.mxu0 0.0
    %3034 = vmatpush1.msra.mxu0 0.0
    %3035 = vmatprep.subr.mxu0 0.0
    %3036 = vmatpush1.msra.mxu0 0.0
    %3037 = vmatprep.subr.mxu0 0.0
    %3038 = vmatpush1.msra.mxu0 0.0
    %3039 = vmatprep.subr.mxu0 0.0
    %3040 = vmatpush1.msra.mxu0 0.0
    %3041 = vmatprep.subr.mxu0 0.0
    %3042 = vmatpush1.msra.mxu0 0.0
    %3043 = vmatprep.subr.mxu0 0.0
    %3044 = vmatpush1.msra.mxu0 0.0
    %3045 = vmatprep.subr.mxu0 0.0
    %3046 = vmatpush1.msra.mxu0 0.0
    %3047 = vmatprep.subr.mxu0 0.0
    %3048 = vmatpush1.msra.mxu0 0.0
    %3049 = vmatprep.subr.mxu0 0.0
    %3050 = vmatpush1.msra.mxu0 0.0
    %3051 = vmatprep.subr.mxu0 0.0
    %3052 = vmatpush1.msra.mxu0 0.0
    %3053 = vmatprep.subr.mxu0 0.0
    %3054 = vmatpush1.msra.mxu0 0.0
    %3055 = vmatprep.subr.mxu0 0.0
    %3056 = vmatpush1.msra.mxu0 0.0
    %3057 = vmatprep.subr.mxu0 0.0
    %3058 = vmatpush1.msra.mxu0 0.0
    %3059 = vmatprep.subr.mxu0 0.0
    %3060 = vmatpush1.msra.mxu0 0.0
    %3061 = vmatprep.subr.mxu0 0.0
    %3062 = vmatpush1.msra.mxu0 0.0
    %3063 = vmatprep.subr.mxu0 0.0
    %3064 = vmatpush1.msra.mxu0 0.0
    %3065 = vmatprep.subr.mxu0 0.0
    %3066 = vmatpush1.msra.mxu0 0.0
    %3067 = vmatprep.mubr.f32.mxu0 0.0
    %3068 = vmatmul.mubr.f32.gmra.mrb[0].mxu0 %v2867
    %v3069 = vpop.f32.mrb[0].mxu0
    %v3070 = vadd.f32 0.0, %v3069
    %v3071 = vpop.f32.mrb[0].mxu0
    %v3072 = vadd.f32 0.0, %v3071
    %3073 = vmatprep.mubr.f32.mxu0 0.0
    %3074 = vmatmul.mubr.f32.gmra.mrb[0].mxu0 %v2870
    %v3075 = vpop.f32.mrb[0].mxu0
    %v3076 = vadd.f32 0.0, %v3075
    %v3077 = vpop.f32.mrb[0].mxu0
    %v3078 = vadd.f32 0.0, %v3077
    %3079 = vmatprep.mubr.f32.mxu0 0.0
    %3080 = vmatmul.mubr.f32.gmra.mrb[0].mxu0 %v2873
    %v3081 = vpop.f32.mrb[0].mxu0
    %v3082 = vadd.f32 0.0, %v3081
    %v3083 = vpop.f32.mrb[0].mxu0
    %v3084 = vadd.f32 0.0, %v3083
    %3085 = vmatprep.mubr.f32.mxu0 0.0
    %3086 = vmatmul.mubr.f32.gmra.mrb[0].mxu0 %v2876
    %v3087 = vpop.f32.mrb[0].mxu0
    %v3088 = vadd.f32 0.0, %v3087
    %v3089 = vpop.f32.mrb[0].mxu0
    %v3090 = vadd.f32 0.0, %v3089
    %3091 = vmatprep.mubr.f32.mxu0 0.0
    %3092 = vmatmul.mubr.f32.gmra.mrb[0].mxu0 %v2879
    %v3093 = vpop.f32.mrb[0].mxu0
    %v3094 = vadd.f32 0.0, %v3093
    %v3095 = vpop.f32.mrb[0].mxu0
    %v3096 = vadd.f32 0.0, %v3095
    %3097 = vmatprep.mubr.f32.mxu0 0.0
    %3098 = vmatmul.mubr.f32.gmra.mrb[0].mxu0 %v2882
    %v3099 = vpop.f32.mrb[0].mxu0
    %v3100 = vadd.f32 0.0, %v3099
    %v3101 = vpop.f32.mrb[0].mxu0
    %v3102 = vadd.f32 0.0, %v3101
    %3103 = vmatprep.mubr.f32.mxu0 0.0
    %3104 = vmatmul.mubr.f32.gmra.mrb[0].mxu0 %v2885
    %v3105 = vpop.f32.mrb[0].mxu0
    %v3106 = vadd.f32 0.0, %v3105
    %v3107 = vpop.f32.mrb[0].mxu0
    %v3108 = vadd.f32 0.0, %v3107
    %3109 = vmatprep.mubr.f32.mxu0 0.0
    %3110 = vmatmul.mubr.f32.gmra.mrb[0].mxu0 %v2888
    %v3111 = vpop.f32.mrb[0].mxu0
    %v3112 = vadd.f32 0.0, %v3111
    %v3113 = vpop.f32.mrb[0].mxu0
    %v3114 = vadd.f32 0.0, %v3113
    %3115 = vdwg.mxu0
    %v3116 = vmul.f32 %v2420, %v2957
    %v3117 = vmul.f32 %v2424, %v2959
    %v3118 = vmul.f32 %v2428, %v3070
    %v3119 = vmul.f32 %v2432, %v3072
    %v3120 = vmul.f32 %v2420, %v2963
    %v3121 = vmul.f32 %v2424, %v2965
    %v3122 = vmul.f32 %v2428, %v3076
    %v3123 = vmul.f32 %v2432, %v3078
    %v3124 = vadd.f32 %v2290, %v3116
    %v3125 = vadd.f32 %v2292, %v3117
    %v3126 = vadd.f32 %v2391, %v3118
    %v3127 = vadd.f32 %v2393, %v3119
    %v3128 = vadd.f32 %v2296, %v3120
    %v3129 = vadd.f32 %v2298, %v3121
    %v3130 = vadd.f32 %v2397, %v3122
    %v3131 = vadd.f32 %v2399, %v3123
    %v3132 = vmul.f32 %v2484, %v2969
    %v3133 = vmul.f32 %v2488, %v2971
    %v3134 = vmul.f32 %v2492, %v3082
    %v3135 = vmul.f32 %v2496, %v3084
    %v3136 = vmul.f32 %v2484, %v2975
    %v3137 = vmul.f32 %v2488, %v2977
    %v3138 = vmul.f32 %v2492, %v3088
    %v3139 = vmul.f32 %v2496, %v3090
    %v3140 = vadd.f32 %v3124, %v3132
    %v3141 = vadd.f32 %v3125, %v3133
    %v3142 = vadd.f32 %v3126, %v3134
    %v3143 = vadd.f32 %v3127, %v3135
    %v3144 = vadd.f32 %v3128, %v3136
    %v3145 = vadd.f32 %v3129, %v3137
    %v3146 = vadd.f32 %v3130, %v3138
    %v3147 = vadd.f32 %v3131, %v3139
    %v3148 = vmul.f32 %v2548, %v2981
    %v3149 = vmul.f32 %v2552, %v2983
    %v3150 = vmul.f32 %v2556, %v3094
    %v3151 = vmul.f32 %v2560, %v3096
    %v3152 = vmul.f32 %v2548, %v2987
    %v3153 = vmul.f32 %v2552, %v2989
    %v3154 = vmul.f32 %v2556, %v3100
    %v3155 = vmul.f32 %v2560, %v3102
    %v3156 = vadd.f32 %v3140, %v3148
    %v3157 = vadd.f32 %v3141, %v3149
    %v3158 = vadd.f32 %v3142, %v3150
    %v3159 = vadd.f32 %v3143, %v3151
    %v3160 = vadd.f32 %v3144, %v3152
    %v3161 = vadd.f32 %v3145, %v3153
    %v3162 = vadd.f32 %v3146, %v3154
    %v3163 = vadd.f32 %v3147, %v3155
    %v3164 = vmul.f32 %v2612, %v2993
    %v3165 = vmul.f32 %v2616, %v2995
    %v3166 = vmul.f32 %v2620, %v3106
    %v3167 = vmul.f32 %v2624, %v3108
    %v3168 = vmul.f32 %v2612, %v2999
    %v3169 = vmul.f32 %v2616, %v3001
    %v3170 = vmul.f32 %v2620, %v3112
    %v3171 = vmul.f32 %v2624, %v3114
    %v3172 = vadd.f32 %v3156, %v3164
    %v3173 = vadd.f32 %v3157, %v3165
    %v3174 = vadd.f32 %v3158, %v3166
    %v3175 = vadd.f32 %v3159, %v3167
    %v3176 = vadd.f32 %v3160, %v3168
    %v3177 = vadd.f32 %v3161, %v3169
    %v3178 = vadd.f32 %v3162, %v3170
    %v3179 = vadd.f32 %v3163, %v3171
    %3180 = vst [vmem:[#allocation3] sm:$0xff] %v3172
    %3181 = vst [vmem:[#allocation3 + $0x8] sm:$0xff] %v3173
    %3182 = vst [vmem:[#allocation3 + $0x10] sm:$0xff] %v3176
    %3183 = vst [vmem:[#allocation3 + $0x18] sm:$0xff] %v3177
    %s3184 = scalar_lea.vmem [#allocation3], 32
    %3185 = vst [vmem:[%s3184] sm:$0xff] %v3174
    %3186 = vst [vmem:[%s3184 + $0x8] sm:$0xff] %v3175
    %3187 = vst [vmem:[%s3184 + $0x10] sm:$0xff] %v3178
    %3188 = vst [vmem:[%s3184 + $0x18] sm:$0xff] %v3179
    // Predicated region
    $region26: #{i2net_forward.1} parent=1 // pred_check
      _
    $region27: #{i2net_forward.1} parent=1 // pred_check_branch
      %3190 = sbr.rel (0) target = $region29
    $region28: #{i2net_forward.1} parent=1 // pred_region
      %s3192 = ssub.s32 1024, 1024
      %3193 = vsyncadd [#allocation4], %s3192
      %s3194 = sshll.u32 [#allocation3], 4
      %s3195 = int_to_ptr.vmem [resolvable:$true] %s3194
      %3200 = dma.vmem_to_hbm [thread:$0]  %s3195, 1024, %s6, [#allocation4], 256, 256, 16
    $region29: #{i2net_forward.1} parent=1 // pred_fallthru
      _
    // Predicated region
    $region30: #{i2net_forward.1} parent=1 // pred_check
      _
    $region31: #{i2net_forward.1} parent=1 // pred_check_branch
      %3202 = sbr.rel (0) target = $region33
    $region32: #{i2net_forward.1} parent=1 // pred_region
      %3203 = dma.done [#allocation4], 1024
    $region33: #{i2net_forward.1} parent=1 // pred_fallthru
      _
    %3204 = vsyncpa [#allocation4], 1

</llo_original>
